<compile_context>
chip_gen: v6e
topology: v6e:2x2x1
jax: 0.10.0
libtpu: 0.0.40
codegen_flags: <defaults>
</compile_context>

<pallas_src>
import functools

import jax
import jax.numpy as jnp
from jax.experimental import pallas as pl
from jax.experimental.pallas import tpu as pltpu

NSEG = 3100           # hard-coded in GCL4E.var_model
COORDS_WEIGHT = 1.0
_PREC = jax.lax.Precision.HIGHEST


def _silu(x):
    return x * jax.nn.sigmoid(x)


def _dot_exact(a, b):
    # One-hot gather/scatter: keep (near-)exact f32 data movement.
    return jnp.dot(a, b, precision=_PREC, preferred_element_type=jnp.float32)


def _mxu(x, w_bf16):
    # MLP matmul: single-pass bf16 MXU op, f32 accumulation.
    return jnp.dot(x.astype(jnp.bfloat16), w_bf16,
                   preferred_element_type=jnp.float32)


def gcl4e_kernel(h_ref, coord_ref, row_ref, col_ref,
                 we1_ref, be1_ref, we2_ref, be2_ref,
                 wn1_ref, bn1_ref, wn2_ref, bn2_ref,
                 wc1_ref, bc1_ref, wc2_ref,
                 wv1_ref, bv1_ref, wv2_ref, bv2_ref,
                 hout_ref, cout_ref, vout_ref):
    _, N, F = h_ref.shape
    E = row_ref.shape[1]
    H = we1_ref.shape[1]

    row = row_ref[0, :]                        # (E,) int32, values < N
    col = col_ref[0, :]

    f32 = jnp.float32
    # one-hot gather matrices: gather[e, n] = (index[e] == n)
    node_iota_en = jax.lax.broadcasted_iota(jnp.int32, (E, N), 1)
    gather_row = (node_iota_en == row[:, None]).astype(f32)     # (E, N)
    gather_col = (node_iota_en == col[:, None]).astype(f32)     # (E, N)
    # one-hot scatter matrix: scatter[n, e] = (row[e] == n)
    node_iota_ne = jax.lax.broadcasted_iota(jnp.int32, (N, E), 0)
    scatter_row = (node_iota_ne == row[None, :]).astype(f32)    # (N, E)

    # per-node edge counts for unsorted_segment_mean (clamp(min=1))
    counts = jnp.maximum(jnp.sum(scatter_row, axis=1, keepdims=True), 1.0)

    h = h_ref[0]                               # (N, F)
    coord = coord_ref[0]                       # (N, 3)

    # ---- fused gathers: one (E,N)x(N,F+3) matmul per direction ----
    hc = jnp.concatenate([h, coord], axis=-1)                   # (N, F+3)
    src = _dot_exact(gather_row, hc)                            # (E, F+3)
    tgt = _dot_exact(gather_col, hc)                            # (E, F+3)
    hs, cs = src[:, :F], src[:, F:]
    ht, ct = tgt[:, :F], tgt[:, F:]

    # ---- coord2radial ----
    coord_diff = cs - ct                                        # (E, 3)
    radial = jnp.sum(coord_diff * coord_diff, axis=-1, keepdims=True)

    # ---- var_mlp (per-edge part of var_model) ----
    edge_in = jnp.concatenate([cs, ct], axis=-1)                # (E, 6)
    v = _silu(_mxu(edge_in, wv1_ref[...]) + bv1_ref[...])
    v = _mxu(v, wv2_ref[...]) + bv2_ref[...]                    # (E, 3)

    # ---- edge_model ----
    ein = jnp.concatenate([hs, ht, radial], axis=-1)            # (E, 2F+1)
    e1 = _silu(_mxu(ein, we1_ref[...]) + be1_ref[...])
    edge_feat = _silu(_mxu(e1, we2_ref[...]) + be2_ref[...])    # (E, H)

    # ---- coord_model (per-edge part) ----
    c1 = _silu(_mxu(edge_feat, wc1_ref[...]) + bc1_ref[...])
    phi = _mxu(c1, wc2_ref[...])                                # (E, 1), no bias
    trans = jnp.clip(coord_diff * phi, -100.0, 100.0)           # (E, 3)

    # ---- fused segment reductions: one (N,E)x(E,3+H+3) matmul ----
    scat_in = jnp.concatenate([trans, edge_feat, v], axis=-1)   # (E, 3+H+3)
    scat = _dot_exact(scatter_row, scat_in)                     # (N, 3+H+3)
    mean = scat[:, :3] / counts                                 # segment mean
    agg = scat[:, 3:3 + H]                                      # segment sum
    var_sum = scat[:, 3 + H:]                                   # segment sum

    cout_ref[0] = coord + mean * COORDS_WEIGHT
    vout_ref[0] = jnp.clip(var_sum, 0.0, 6.0) - 3.0             # relu6 - 3

    # ---- node_model ----
    cat = jnp.concatenate([h, agg], axis=-1)                    # (N, F+H)
    n1 = _silu(_mxu(cat, wn1_ref[...]) + bn1_ref[...])
    out = _mxu(n1, wn2_ref[...]) + bn2_ref[...]                 # (N, F)
    hout_ref[0] = h + out                                       # recurrent


@functools.partial(jax.jit, static_argnames=("nseg",))
def gcl4e_forward(params, h, coord, edge_index, nseg=NSEG):
    """h: (N, S, F), coord: (N, S, 3), edge_index: (2, E) int32 (PyTorch layout)."""
    N, S, F = h.shape
    E = edge_index.shape[1]
    row = edge_index[0].reshape(1, E).astype(jnp.int32)
    col = edge_index[1].reshape(1, E).astype(jnp.int32)

    # move S to the front (see layout comment at top of file)
    h_k = jnp.transpose(h, (1, 0, 2)).astype(jnp.float32)
    c_k = jnp.transpose(coord, (1, 0, 2)).astype(jnp.float32)

    bf16 = jnp.bfloat16
    inputs = (h_k, c_k, row, col,
              params["we1"].astype(bf16), params["be1"],
              params["we2"].astype(bf16), params["be2"],
              params["wn1"].astype(bf16), params["bn1"],
              params["wn2"].astype(bf16), params["bn2"],
              params["wc1"].astype(bf16), params["bc1"],
              params["wc2"].astype(bf16),
              params["wv1"].astype(bf16), params["bv1"],
              params["wv2"].astype(bf16), params["bv2"])

    vmem_full = pl.BlockSpec(memory_space=pltpu.MemorySpace.VMEM)
    grid_spec = pltpu.PrefetchScalarGridSpec(
        num_scalar_prefetch=0,
        grid=(S,),
        in_specs=[pl.BlockSpec((1, N, F), lambda s: (s, 0, 0)),
                  pl.BlockSpec((1, N, 3), lambda s: (s, 0, 0))]
                 + [vmem_full] * (len(inputs) - 2),
        out_specs=(pl.BlockSpec((1, N, F), lambda s: (s, 0, 0)),
                   pl.BlockSpec((1, N, 3), lambda s: (s, 0, 0)),
                   pl.BlockSpec((1, N, 3), lambda s: (s, 0, 0))),
    )

    h_out, c_out, v_node = pl.pallas_call(
        gcl4e_kernel,
        out_shape=(jax.ShapeDtypeStruct((S, N, F), jnp.float32),
                   jax.ShapeDtypeStruct((S, N, 3), jnp.float32),
                   jax.ShapeDtypeStruct((S, N, 3), jnp.float32)),
        grid_spec=grid_spec,
        input_output_aliases={0: 0},   # hout reuses h buffer (recurrent residual)
        compiler_params=pltpu.CompilerParams(
            dimension_semantics=("parallel",)),
    )(*inputs)

    # back to PyTorch layout; pad var to nseg segments with relu6(0)-3 = -3
    h_out = jnp.transpose(h_out, (1, 0, 2))
    c_out = jnp.transpose(c_out, (1, 0, 2))
    v_node = jnp.transpose(v_node, (1, 0, 2))                   # (N, S, 3)
    v_full = jnp.full((nseg, S, 3), -3.0, jnp.float32).at[:N].set(v_node)
    return h_out, c_out, v_full


def ref_forward(params, h, coord, edge_index, nseg=NSEG):
    """Pure-JAX reference mirroring the PyTorch forward exactly (f32, HIGHEST)."""
    row, col = edge_index[0], edge_index[1]
    N = h.shape[0]

    def seg_sum(data, ids, num):
        return jnp.zeros((num,) + data.shape[1:], data.dtype).at[ids].add(data)

    coord_diff = coord[row] - coord[col]
    radial = jnp.sum(coord_diff ** 2, axis=-1, keepdims=True)

    edge_in = jnp.concatenate([coord[row], coord[col]], axis=2)
    v = _silu(jnp.dot(edge_in, params["wv1"], precision=_PREC) + params["bv1"][0])
    v = jnp.dot(v, params["wv2"], precision=_PREC) + params["bv2"][0]
    var = jnp.clip(seg_sum(v, row, nseg), 0.0, 6.0) - 3.0

    ein = jnp.concatenate([h[row], h[col], radial], axis=-1)
    e1 = _silu(jnp.dot(ein, params["we1"], precision=_PREC) + params["be1"][0])
    edge_feat = _silu(jnp.dot(e1, params["we2"], precision=_PREC) + params["be2"][0])

    c1 = _silu(jnp.dot(edge_feat, params["wc1"], precision=_PREC) + params["bc1"][0])
    phi = jnp.dot(c1, params["wc2"], precision=_PREC)
    trans = jnp.clip(coord_diff * phi, -100.0, 100.0)
    sums = seg_sum(trans, row, N)
    counts = seg_sum(jnp.ones_like(trans), row, N)
    coord_out = coord + (sums / jnp.maximum(counts, 1.0)) * COORDS_WEIGHT

    agg = seg_sum(edge_feat, row, N)
    cat = jnp.concatenate([h, agg], axis=-1)
    n1 = _silu(jnp.dot(cat, params["wn1"], precision=_PREC) + params["bn1"][0])
    out = jnp.dot(n1, params["wn2"], precision=_PREC) + params["bn2"][0]
    h_out = h + out
    return h_out, coord_out, var


def init_params(key, input_nf, output_nf, hidden_nf):
    """Deterministic synthetic init (shapes match GCL4E.__init__, edges_in_d=0)."""
    input_edge = input_nf * 2
    ks = iter(jax.random.split(key, 20))

    def w(shape, scale=0.1):
        return (scale * jax.random.normal(next(ks), shape, jnp.float32))

    return {
        # edge_mlp: Linear(2F+1, H) -> SiLU -> Linear(H, H) -> SiLU
        "we1": w((input_edge + 1, hidden_nf)), "be1": w((1, hidden_nf)),
        "we2": w((hidden_nf, hidden_nf)),      "be2": w((1, hidden_nf)),
        # node_mlp: Linear(H+F, H) -> SiLU -> Linear(H, F_out)
        "wn1": w((hidden_nf + input_nf, hidden_nf)), "bn1": w((1, hidden_nf)),
        "wn2": w((hidden_nf, output_nf)),            "bn2": w((1, output_nf)),
        # coord_mlp: Linear(H, H) -> SiLU -> Linear(H, 1, bias=False) [xavier gain 1e-3]
        "wc1": w((hidden_nf, hidden_nf)), "bc1": w((1, hidden_nf)),
        "wc2": w((hidden_nf, 1), scale=0.001),
        # var_mlp: Linear(6, 3) -> SiLU -> Linear(3, 3)
        "wv1": w((6, 3)), "bv1": w((1, 3)),
        "wv2": w((3, 3)), "bv2": w((1, 3)),
    }


if __name__ == "__main__":
    key = jax.random.PRNGKey(0)
    k_h, k_c, k_r, k_col, k_p = jax.random.split(key, 5)

    # small shapes: n_node=8, n_edge=16, S (per-node sample dim)=4,
    # input_nf=output_nf=8 (recurrent residual), hidden_nf=16, edges_in_d=0.
    N, E, S, F, H = 8, 16, 4, 8, 16

    h = jax.random.normal(k_h, (N, S, F), jnp.float32)
    coord = jax.random.normal(k_c, (N, S, 3), jnp.float32)
    row = jax.random.randint(k_r, (E,), 0, N, jnp.int32)
    col = jax.random.randint(k_col, (E,), 0, N, jnp.int32)
    edge_index = jnp.stack([row, col])

    params = init_params(k_p, F, F, H)

    h_out, coord_out, var_out = jax.block_until_ready(
        gcl4e_forward(params, h, coord, edge_index))

    assert h_out.shape == (N, S, F)
    assert coord_out.shape == (N, S, 3)
    assert var_out.shape == (NSEG, S, 3)

    h_ref, coord_ref, var_ref = ref_forward(params, h, coord, edge_index)
    for got, want in ((h_out, h_ref), (coord_out, coord_ref), (var_out, var_ref)):
        assert jnp.allclose(got, want, atol=2e-2, rtol=2e-2), float(
            jnp.max(jnp.abs(got - want)))

    print("KERNEL_OK")
</pallas_src>

<mosaic_0001>
module attributes {stable_mosaic.version = 11 : i64} {
  func.func @gcl4e_kernel(%arg0: i32, %arg1: memref<1x8x8xf32, #tpu.memory_space<vmem>>, %arg2: memref<1x8x3xf32, #tpu.memory_space<vmem>>, %arg3: memref<1x16xi32, #tpu.memory_space<vmem>>, %arg4: memref<1x16xi32, #tpu.memory_space<vmem>>, %arg5: memref<17x16xbf16, #tpu.memory_space<vmem>>, %arg6: memref<1x16xf32, #tpu.memory_space<vmem>>, %arg7: memref<16x16xbf16, #tpu.memory_space<vmem>>, %arg8: memref<1x16xf32, #tpu.memory_space<vmem>>, %arg9: memref<24x16xbf16, #tpu.memory_space<vmem>>, %arg10: memref<1x16xf32, #tpu.memory_space<vmem>>, %arg11: memref<16x8xbf16, #tpu.memory_space<vmem>>, %arg12: memref<1x8xf32, #tpu.memory_space<vmem>>, %arg13: memref<16x16xbf16, #tpu.memory_space<vmem>>, %arg14: memref<1x16xf32, #tpu.memory_space<vmem>>, %arg15: memref<16x1xbf16, #tpu.memory_space<vmem>>, %arg16: memref<6x3xbf16, #tpu.memory_space<vmem>>, %arg17: memref<1x3xf32, #tpu.memory_space<vmem>>, %arg18: memref<3x3xbf16, #tpu.memory_space<vmem>>, %arg19: memref<1x3xf32, #tpu.memory_space<vmem>>, %arg20: memref<1x8x8xf32, #tpu.memory_space<vmem>>, %arg21: memref<1x8x3xf32, #tpu.memory_space<vmem>>, %arg22: memref<1x8x3xf32, #tpu.memory_space<vmem>>) attributes {dimension_semantics = [#tpu.dimension_semantics<parallel>], iteration_bounds = array<i64: 4>, scalar_prefetch = 0 : i64, scratch_operands = 0 : i64, tpu.core_type = #tpu.core_type<tc>, window_params = [{transform_indices = @transform_0, window_bounds = array<i64: 1, 8, 8>}, {transform_indices = @transform_1, window_bounds = array<i64: 1, 8, 3>}, {pipeline_mode = #tpu.pipeline_mode<synchronous>, transform_indices = @transform_2, window_bounds = array<i64: 1, 16>}, {pipeline_mode = #tpu.pipeline_mode<synchronous>, transform_indices = @transform_3, window_bounds = array<i64: 1, 16>}, {pipeline_mode = #tpu.pipeline_mode<synchronous>, transform_indices = @transform_4, window_bounds = array<i64: 17, 16>}, {pipeline_mode = #tpu.pipeline_mode<synchronous>, transform_indices = @transform_5, window_bounds = array<i64: 1, 16>}, {pipeline_mode = #tpu.pipeline_mode<synchronous>, transform_indices = @transform_6, window_bounds = array<i64: 16, 16>}, {pipeline_mode = #tpu.pipeline_mode<synchronous>, transform_indices = @transform_7, window_bounds = array<i64: 1, 16>}, {pipeline_mode = #tpu.pipeline_mode<synchronous>, transform_indices = @transform_8, window_bounds = array<i64: 24, 16>}, {pipeline_mode = #tpu.pipeline_mode<synchronous>, transform_indices = @transform_9, window_bounds = array<i64: 1, 16>}, {pipeline_mode = #tpu.pipeline_mode<synchronous>, transform_indices = @transform_10, window_bounds = array<i64: 16, 8>}, {pipeline_mode = #tpu.pipeline_mode<synchronous>, transform_indices = @transform_11, window_bounds = array<i64: 1, 8>}, {pipeline_mode = #tpu.pipeline_mode<synchronous>, transform_indices = @transform_12, window_bounds = array<i64: 16, 16>}, {pipeline_mode = #tpu.pipeline_mode<synchronous>, transform_indices = @transform_13, window_bounds = array<i64: 1, 16>}, {pipeline_mode = #tpu.pipeline_mode<synchronous>, transform_indices = @transform_14, window_bounds = array<i64: 16, 1>}, {pipeline_mode = #tpu.pipeline_mode<synchronous>, transform_indices = @transform_15, window_bounds = array<i64: 6, 3>}, {pipeline_mode = #tpu.pipeline_mode<synchronous>, transform_indices = @transform_16, window_bounds = array<i64: 1, 3>}, {pipeline_mode = #tpu.pipeline_mode<synchronous>, transform_indices = @transform_17, window_bounds = array<i64: 3, 3>}, {pipeline_mode = #tpu.pipeline_mode<synchronous>, transform_indices = @transform_18, window_bounds = array<i64: 1, 3>}, {transform_indices = @transform_19, window_bounds = array<i64: 1, 8, 8>}, {transform_indices = @transform_20, window_bounds = array<i64: 1, 8, 3>}, {transform_indices = @transform_21, window_bounds = array<i64: 1, 8, 3>}]} {
    %c0 = arith.constant 0 : index
    %c0_0 = arith.constant 0 : index
    %0 = vector.load %arg3[%c0, %c0_0] : memref<1x16xi32, #tpu.memory_space<vmem>>, vector<1x16xi32>
    %1 = vector.shape_cast %0 : vector<1x16xi32> to vector<16xi32>
    %c0_1 = arith.constant 0 : index
    %c0_2 = arith.constant 0 : index
    %2 = vector.load %arg4[%c0_1, %c0_2] : memref<1x16xi32, #tpu.memory_space<vmem>>, vector<1x16xi32>
    %3 = vector.shape_cast %2 : vector<1x16xi32> to vector<16xi32>
    %4 = tpu.iota {dimensions = array<i32: 1>} : vector<16x8xi32>
    %5 = vector.shape_cast %1 : vector<16xi32> to vector<16x1xi32>
    %6 = vector.broadcast %5 : vector<16x1xi32> to vector<16x8xi32>
    %7 = arith.cmpi eq, %4, %6 : vector<16x8xi32>
    %8 = arith.extui %7 : vector<16x8xi1> to vector<16x8xi32>
    %9 = arith.sitofp %8 : vector<16x8xi32> to vector<16x8xf32>
    %10 = vector.shape_cast %3 : vector<16xi32> to vector<16x1xi32>
    %11 = vector.broadcast %10 : vector<16x1xi32> to vector<16x8xi32>
    %12 = arith.cmpi eq, %4, %11 : vector<16x8xi32>
    %13 = arith.extui %12 : vector<16x8xi1> to vector<16x8xi32>
    %14 = arith.sitofp %13 : vector<16x8xi32> to vector<16x8xf32>
    %15 = tpu.iota {dimensions = array<i32: 0>} : vector<8x16xi32>
    %16 = vector.shape_cast %1 : vector<16xi32> to vector<1x16xi32>
    %17 = vector.broadcast %16 : vector<1x16xi32> to vector<8x16xi32>
    %18 = arith.cmpi eq, %15, %17 : vector<8x16xi32>
    %19 = arith.extui %18 : vector<8x16xi1> to vector<8x16xi32>
    %20 = arith.sitofp %19 : vector<8x16xi32> to vector<8x16xf32>
    %cst = arith.constant dense<0.000000e+00> : vector<8xf32>
    %21 = vector.multi_reduction <add>, %20, %cst [1] : vector<8x16xf32> to vector<8xf32>
    %22 = vector.shape_cast %21 : vector<8xf32> to vector<8x1xf32>
    %cst_3 = arith.constant 1.000000e+00 : f32
    %23 = vector.broadcast %cst_3 : f32 to vector<8x1xf32>
    %24 = arith.maximumf %22, %23 : vector<8x1xf32>
    %c0_4 = arith.constant 0 : index
    %c0_5 = arith.constant 0 : index
    %c0_6 = arith.constant 0 : index
    %25 = vector.load %arg1[%c0_4, %c0_5, %c0_6] : memref<1x8x8xf32, #tpu.memory_space<vmem>>, vector<1x8x8xf32>
    %26 = vector.shape_cast %25 : vector<1x8x8xf32> to vector<8x8xf32>
    %c0_7 = arith.constant 0 : index
    %c0_8 = arith.constant 0 : index
    %c0_9 = arith.constant 0 : index
    %27 = vector.load %arg2[%c0_7, %c0_8, %c0_9] : memref<1x8x3xf32, #tpu.memory_space<vmem>>, vector<1x8x3xf32>
    %28 = vector.shape_cast %27 : vector<1x8x3xf32> to vector<8x3xf32>
    %29 = tpu.concatenate %26, %28 in 1 : vector<8x8xf32>, vector<8x3xf32> -> vector<8x11xf32>
    %cst_10 = arith.constant dense<0.000000e+00> : vector<16x11xf32>
    %30 = tpu.matmul %9, %29, %cst_10 {dimension_numbers = #tpu.dot_dimension_numbers<[1], [0], [0], [1], [0, 0, 1, 1], [], []>, precision = #tpu.contract_precision<fp32>} : vector<16x8xf32>, vector<8x11xf32>, vector<16x11xf32> -> vector<16x11xf32>
    %cst_11 = arith.constant dense<0.000000e+00> : vector<16x11xf32>
    %31 = tpu.matmul %14, %29, %cst_11 {dimension_numbers = #tpu.dot_dimension_numbers<[1], [0], [0], [1], [0, 0, 1, 1], [], []>, precision = #tpu.contract_precision<fp32>} : vector<16x8xf32>, vector<8x11xf32>, vector<16x11xf32> -> vector<16x11xf32>
    %32 = vector.extract_strided_slice %30 {offsets = [0, 0], sizes = [16, 8], strides = [1, 1]} : vector<16x11xf32> to vector<16x8xf32>
    %33 = vector.extract_strided_slice %30 {offsets = [0, 8], sizes = [16, 3], strides = [1, 1]} : vector<16x11xf32> to vector<16x3xf32>
    %34 = vector.extract_strided_slice %31 {offsets = [0, 0], sizes = [16, 8], strides = [1, 1]} : vector<16x11xf32> to vector<16x8xf32>
    %35 = vector.extract_strided_slice %31 {offsets = [0, 8], sizes = [16, 3], strides = [1, 1]} : vector<16x11xf32> to vector<16x3xf32>
    %36 = arith.subf %33, %35 : vector<16x3xf32>
    %37 = arith.mulf %36, %36 : vector<16x3xf32>
    %cst_12 = arith.constant dense<0.000000e+00> : vector<16xf32>
    %38 = vector.multi_reduction <add>, %37, %cst_12 [1] : vector<16x3xf32> to vector<16xf32>
    %39 = vector.shape_cast %38 : vector<16xf32> to vector<16x1xf32>
    %40 = tpu.concatenate %33, %35 in 1 : vector<16x3xf32>, vector<16x3xf32> -> vector<16x6xf32>
    %c0_13 = arith.constant 0 : index
    %c0_14 = arith.constant 0 : index
    %41 = vector.load %arg16[%c0_13, %c0_14] : memref<6x3xbf16, #tpu.memory_space<vmem>>, vector<6x3xbf16>
    %42 = arith.truncf %40 : vector<16x6xf32> to vector<16x6xbf16>
    %cst_15 = arith.constant dense<0.000000e+00> : vector<16x3xf32>
    %43 = tpu.matmul %42, %41, %cst_15 {dimension_numbers = #tpu.dot_dimension_numbers<[1], [0], [0], [1], [0, 0, 1, 1], [], []>} : vector<16x6xbf16>, vector<6x3xbf16>, vector<16x3xf32> -> vector<16x3xf32>
    %c0_16 = arith.constant 0 : index
    %c0_17 = arith.constant 0 : index
    %44 = vector.load %arg17[%c0_16, %c0_17] : memref<1x3xf32, #tpu.memory_space<vmem>>, vector<1x3xf32>
    %45 = vector.broadcast %44 : vector<1x3xf32> to vector<16x3xf32>
    %46 = arith.addf %43, %45 : vector<16x3xf32>
    %47 = arith.negf %46 : vector<16x3xf32>
    %48 = math.exp %47 : vector<16x3xf32>
    %cst_18 = arith.constant 1.000000e+00 : f32
    %49 = vector.broadcast %cst_18 : f32 to vector<16x3xf32>
    %50 = arith.addf %49, %48 : vector<16x3xf32>
    %51 = arith.divf %49, %50 : vector<16x3xf32>
    %52 = arith.mulf %46, %51 : vector<16x3xf32>
    %c0_19 = arith.constant 0 : index
    %c0_20 = arith.constant 0 : index
    %53 = vector.load %arg18[%c0_19, %c0_20] : memref<3x3xbf16, #tpu.memory_space<vmem>>, vector<3x3xbf16>
    %54 = arith.truncf %52 : vector<16x3xf32> to vector<16x3xbf16>
    %cst_21 = arith.constant dense<0.000000e+00> : vector<16x3xf32>
    %55 = tpu.matmul %54, %53, %cst_21 {dimension_numbers = #tpu.dot_dimension_numbers<[1], [0], [0], [1], [0, 0, 1, 1], [], []>} : vector<16x3xbf16>, vector<3x3xbf16>, vector<16x3xf32> -> vector<16x3xf32>
    %c0_22 = arith.constant 0 : index
    %c0_23 = arith.constant 0 : index
    %56 = vector.load %arg19[%c0_22, %c0_23] : memref<1x3xf32, #tpu.memory_space<vmem>>, vector<1x3xf32>
    %57 = vector.broadcast %56 : vector<1x3xf32> to vector<16x3xf32>
    %58 = arith.addf %55, %57 : vector<16x3xf32>
    %59 = tpu.concatenate %32, %34, %39 in 1 : vector<16x8xf32>, vector<16x8xf32>, vector<16x1xf32> -> vector<16x17xf32>
    %c0_24 = arith.constant 0 : index
    %c0_25 = arith.constant 0 : index
    %60 = vector.load %arg5[%c0_24, %c0_25] : memref<17x16xbf16, #tpu.memory_space<vmem>>, vector<17x16xbf16>
    %61 = arith.truncf %59 : vector<16x17xf32> to vector<16x17xbf16>
    %cst_26 = arith.constant dense<0.000000e+00> : vector<16x16xf32>
    %62 = tpu.matmul %61, %60, %cst_26 {dimension_numbers = #tpu.dot_dimension_numbers<[1], [0], [0], [1], [0, 0, 1, 1], [], []>} : vector<16x17xbf16>, vector<17x16xbf16>, vector<16x16xf32> -> vector<16x16xf32>
    %c0_27 = arith.constant 0 : index
    %c0_28 = arith.constant 0 : index
    %63 = vector.load %arg6[%c0_27, %c0_28] : memref<1x16xf32, #tpu.memory_space<vmem>>, vector<1x16xf32>
    %64 = vector.broadcast %63 : vector<1x16xf32> to vector<16x16xf32>
    %65 = arith.addf %62, %64 : vector<16x16xf32>
    %66 = arith.negf %65 : vector<16x16xf32>
    %67 = math.exp %66 : vector<16x16xf32>
    %cst_29 = arith.constant 1.000000e+00 : f32
    %68 = vector.broadcast %cst_29 : f32 to vector<16x16xf32>
    %69 = arith.addf %68, %67 : vector<16x16xf32>
    %70 = arith.divf %68, %69 : vector<16x16xf32>
    %71 = arith.mulf %65, %70 : vector<16x16xf32>
    %c0_30 = arith.constant 0 : index
    %c0_31 = arith.constant 0 : index
    %72 = vector.load %arg7[%c0_30, %c0_31] : memref<16x16xbf16, #tpu.memory_space<vmem>>, vector<16x16xbf16>
    %73 = arith.truncf %71 : vector<16x16xf32> to vector<16x16xbf16>
    %cst_32 = arith.constant dense<0.000000e+00> : vector<16x16xf32>
    %74 = tpu.matmul %73, %72, %cst_32 {dimension_numbers = #tpu.dot_dimension_numbers<[1], [0], [0], [1], [0, 0, 1, 1], [], []>} : vector<16x16xbf16>, vector<16x16xbf16>, vector<16x16xf32> -> vector<16x16xf32>
    %c0_33 = arith.constant 0 : index
    %c0_34 = arith.constant 0 : index
    %75 = vector.load %arg8[%c0_33, %c0_34] : memref<1x16xf32, #tpu.memory_space<vmem>>, vector<1x16xf32>
    %76 = vector.broadcast %75 : vector<1x16xf32> to vector<16x16xf32>
    %77 = arith.addf %74, %76 : vector<16x16xf32>
    %78 = arith.negf %77 : vector<16x16xf32>
    %79 = math.exp %78 : vector<16x16xf32>
    %cst_35 = arith.constant 1.000000e+00 : f32
    %80 = vector.broadcast %cst_35 : f32 to vector<16x16xf32>
    %81 = arith.addf %80, %79 : vector<16x16xf32>
    %82 = arith.divf %80, %81 : vector<16x16xf32>
    %83 = arith.mulf %77, %82 : vector<16x16xf32>
    %c0_36 = arith.constant 0 : index
    %c0_37 = arith.constant 0 : index
    %84 = vector.load %arg13[%c0_36, %c0_37] : memref<16x16xbf16, #tpu.memory_space<vmem>>, vector<16x16xbf16>
    %85 = arith.truncf %83 : vector<16x16xf32> to vector<16x16xbf16>
    %cst_38 = arith.constant dense<0.000000e+00> : vector<16x16xf32>
    %86 = tpu.matmul %85, %84, %cst_38 {dimension_numbers = #tpu.dot_dimension_numbers<[1], [0], [0], [1], [0, 0, 1, 1], [], []>} : vector<16x16xbf16>, vector<16x16xbf16>, vector<16x16xf32> -> vector<16x16xf32>
    %c0_39 = arith.constant 0 : index
    %c0_40 = arith.constant 0 : index
    %87 = vector.load %arg14[%c0_39, %c0_40] : memref<1x16xf32, #tpu.memory_space<vmem>>, vector<1x16xf32>
    %88 = vector.broadcast %87 : vector<1x16xf32> to vector<16x16xf32>
    %89 = arith.addf %86, %88 : vector<16x16xf32>
    %90 = arith.negf %89 : vector<16x16xf32>
    %91 = math.exp %90 : vector<16x16xf32>
    %cst_41 = arith.constant 1.000000e+00 : f32
    %92 = vector.broadcast %cst_41 : f32 to vector<16x16xf32>
    %93 = arith.addf %92, %91 : vector<16x16xf32>
    %94 = arith.divf %92, %93 : vector<16x16xf32>
    %95 = arith.mulf %89, %94 : vector<16x16xf32>
    %c0_42 = arith.constant 0 : index
    %c0_43 = arith.constant 0 : index
    %96 = vector.load %arg15[%c0_42, %c0_43] : memref<16x1xbf16, #tpu.memory_space<vmem>>, vector<16x1xbf16>
    %97 = arith.truncf %95 : vector<16x16xf32> to vector<16x16xbf16>
    %cst_44 = arith.constant dense<0.000000e+00> : vector<16x1xf32>
    %98 = tpu.matmul %97, %96, %cst_44 {dimension_numbers = #tpu.dot_dimension_numbers<[1], [0], [0], [1], [0, 0, 1, 1], [], []>} : vector<16x16xbf16>, vector<16x1xbf16>, vector<16x1xf32> -> vector<16x1xf32>
    %99 = vector.broadcast %98 : vector<16x1xf32> to vector<16x3xf32>
    %100 = arith.mulf %36, %99 : vector<16x3xf32>
    %cst_45 = arith.constant -1.000000e+02 : f32
    %cst_46 = arith.constant 1.000000e+02 : f32
    %101 = vector.broadcast %cst_45 : f32 to vector<16x3xf32>
    %102 = arith.maximumf %101, %100 : vector<16x3xf32>
    %103 = vector.broadcast %cst_46 : f32 to vector<16x3xf32>
    %104 = arith.minimumf %103, %102 : vector<16x3xf32>
    %105 = tpu.concatenate %104, %83, %58 in 1 : vector<16x3xf32>, vector<16x16xf32>, vector<16x3xf32> -> vector<16x22xf32>
    %cst_47 = arith.constant dense<0.000000e+00> : vector<8x22xf32>
    %106 = tpu.matmul %20, %105, %cst_47 {dimension_numbers = #tpu.dot_dimension_numbers<[1], [0], [0], [1], [0, 0, 1, 1], [], []>, precision = #tpu.contract_precision<fp32>} : vector<8x16xf32>, vector<16x22xf32>, vector<8x22xf32> -> vector<8x22xf32>
    %107 = vector.extract_strided_slice %106 {offsets = [0, 0], sizes = [8, 3], strides = [1, 1]} : vector<8x22xf32> to vector<8x3xf32>
    %108 = vector.broadcast %24 : vector<8x1xf32> to vector<8x3xf32>
    %109 = arith.divf %107, %108 : vector<8x3xf32>
    %110 = vector.extract_strided_slice %106 {offsets = [0, 3], sizes = [8, 16], strides = [1, 1]} : vector<8x22xf32> to vector<8x16xf32>
    %111 = vector.extract_strided_slice %106 {offsets = [0, 19], sizes = [8, 3], strides = [1, 1]} : vector<8x22xf32> to vector<8x3xf32>
    %cst_48 = arith.constant 1.000000e+00 : f32
    %112 = vector.broadcast %cst_48 : f32 to vector<8x3xf32>
    %113 = arith.mulf %109, %112 : vector<8x3xf32>
    %114 = arith.addf %28, %113 : vector<8x3xf32>
    %c0_49 = arith.constant 0 : index
    %c0_50 = arith.constant 0 : index
    %c0_51 = arith.constant 0 : index
    %115 = vector.load %arg21[%c0_49, %c0_50, %c0_51] : memref<1x8x3xf32, #tpu.memory_space<vmem>>, vector<1x8x3xf32>
    %116 = vector.shape_cast %115 : vector<1x8x3xf32> to vector<8x3xf32>
    %117 = vector.shape_cast %114 : vector<8x3xf32> to vector<1x8x3xf32>
    tpu.vector_store %arg21[%c0_49, %c0_50, %c0_51], %117 {strides = array<i32>} : memref<1x8x3xf32, #tpu.memory_space<vmem>>, vector<1x8x3xf32>,
    %cst_52 = arith.constant 0.000000e+00 : f32
    %cst_53 = arith.constant 6.000000e+00 : f32
    %118 = vector.broadcast %cst_52 : f32 to vector<8x3xf32>
    %119 = arith.maximumf %118, %111 : vector<8x3xf32>
    %120 = vector.broadcast %cst_53 : f32 to vector<8x3xf32>
    %121 = arith.minimumf %120, %119 : vector<8x3xf32>
    %cst_54 = arith.constant 3.000000e+00 : f32
    %122 = vector.broadcast %cst_54 : f32 to vector<8x3xf32>
    %123 = arith.subf %121, %122 : vector<8x3xf32>
    %c0_55 = arith.constant 0 : index
    %c0_56 = arith.constant 0 : index
    %c0_57 = arith.constant 0 : index
    %124 = vector.load %arg22[%c0_55, %c0_56, %c0_57] : memref<1x8x3xf32, #tpu.memory_space<vmem>>, vector<1x8x3xf32>
    %125 = vector.shape_cast %124 : vector<1x8x3xf32> to vector<8x3xf32>
    %126 = vector.shape_cast %123 : vector<8x3xf32> to vector<1x8x3xf32>
    tpu.vector_store %arg22[%c0_55, %c0_56, %c0_57], %126 {strides = array<i32>} : memref<1x8x3xf32, #tpu.memory_space<vmem>>, vector<1x8x3xf32>,
    %127 = tpu.concatenate %26, %110 in 1 : vector<8x8xf32>, vector<8x16xf32> -> vector<8x24xf32>
    %c0_58 = arith.constant 0 : index
    %c0_59 = arith.constant 0 : index
    %128 = vector.load %arg9[%c0_58, %c0_59] : memref<24x16xbf16, #tpu.memory_space<vmem>>, vector<24x16xbf16>
    %129 = arith.truncf %127 : vector<8x24xf32> to vector<8x24xbf16>
    %cst_60 = arith.constant dense<0.000000e+00> : vector<8x16xf32>
    %130 = tpu.matmul %129, %128, %cst_60 {dimension_numbers = #tpu.dot_dimension_numbers<[1], [0], [0], [1], [0, 0, 1, 1], [], []>} : vector<8x24xbf16>, vector<24x16xbf16>, vector<8x16xf32> -> vector<8x16xf32>
    %c0_61 = arith.constant 0 : index
    %c0_62 = arith.constant 0 : index
    %131 = vector.load %arg10[%c0_61, %c0_62] : memref<1x16xf32, #tpu.memory_space<vmem>>, vector<1x16xf32>
    %132 = vector.broadcast %131 : vector<1x16xf32> to vector<8x16xf32>
    %133 = arith.addf %130, %132 : vector<8x16xf32>
    %134 = arith.negf %133 : vector<8x16xf32>
    %135 = math.exp %134 : vector<8x16xf32>
    %cst_63 = arith.constant 1.000000e+00 : f32
    %136 = vector.broadcast %cst_63 : f32 to vector<8x16xf32>
    %137 = arith.addf %136, %135 : vector<8x16xf32>
    %138 = arith.divf %136, %137 : vector<8x16xf32>
    %139 = arith.mulf %133, %138 : vector<8x16xf32>
    %c0_64 = arith.constant 0 : index
    %c0_65 = arith.constant 0 : index
    %140 = vector.load %arg11[%c0_64, %c0_65] : memref<16x8xbf16, #tpu.memory_space<vmem>>, vector<16x8xbf16>
    %141 = arith.truncf %139 : vector<8x16xf32> to vector<8x16xbf16>
    %cst_66 = arith.constant dense<0.000000e+00> : vector<8x8xf32>
    %142 = tpu.matmul %141, %140, %cst_66 {dimension_numbers = #tpu.dot_dimension_numbers<[1], [0], [0], [1], [0, 0, 1, 1], [], []>} : vector<8x16xbf16>, vector<16x8xbf16>, vector<8x8xf32> -> vector<8x8xf32>
    %c0_67 = arith.constant 0 : index
    %c0_68 = arith.constant 0 : index
    %143 = vector.load %arg12[%c0_67, %c0_68] : memref<1x8xf32, #tpu.memory_space<vmem>>, vector<1x8xf32>
    %144 = vector.broadcast %143 : vector<1x8xf32> to vector<8x8xf32>
    %145 = arith.addf %142, %144 : vector<8x8xf32>
    %146 = arith.addf %26, %145 : vector<8x8xf32>
    %c0_69 = arith.constant 0 : index
    %c0_70 = arith.constant 0 : index
    %c0_71 = arith.constant 0 : index
    %147 = vector.load %arg20[%c0_69, %c0_70, %c0_71] : memref<1x8x8xf32, #tpu.memory_space<vmem>>, vector<1x8x8xf32>
    %148 = vector.shape_cast %147 : vector<1x8x8xf32> to vector<8x8xf32>
    %149 = vector.shape_cast %146 : vector<8x8xf32> to vector<1x8x8xf32>
    tpu.vector_store %arg20[%c0_69, %c0_70, %c0_71], %149 {strides = array<i32>} : memref<1x8x8xf32, #tpu.memory_space<vmem>>, vector<1x8x8xf32>,
    return
  }
  func.func @transform_0(%arg0: i32) -> (i32, i32, i32) {
    %c0_i32 = arith.constant 0 : i32
    %c0_i32_0 = arith.constant 0 : i32
    %c0_i32_1 = arith.constant 0 : i32
    return %arg0, %c0_i32, %c0_i32_0 : i32, i32, i32
  }
  func.func @transform_1(%arg0: i32) -> (i32, i32, i32) {
    %c0_i32 = arith.constant 0 : i32
    %c0_i32_0 = arith.constant 0 : i32
    %c0_i32_1 = arith.constant 0 : i32
    return %arg0, %c0_i32, %c0_i32_0 : i32, i32, i32
  }
  func.func @transform_2(%arg0: i32) -> (i32, i32) {
    %c0_i32 = arith.constant 0 : i32
    %c0_i32_0 = arith.constant 0 : i32
    %c0_i32_1 = arith.constant 0 : i32
    return %c0_i32, %c0_i32_0 : i32, i32
  }
  func.func @transform_3(%arg0: i32) -> (i32, i32) {
    %c0_i32 = arith.constant 0 : i32
    %c0_i32_0 = arith.constant 0 : i32
    %c0_i32_1 = arith.constant 0 : i32
    return %c0_i32, %c0_i32_0 : i32, i32
  }
  func.func @transform_4(%arg0: i32) -> (i32, i32) {
    %c0_i32 = arith.constant 0 : i32
    %c0_i32_0 = arith.constant 0 : i32
    %c0_i32_1 = arith.constant 0 : i32
    return %c0_i32, %c0_i32_0 : i32, i32
  }
  func.func @transform_5(%arg0: i32) -> (i32, i32) {
    %c0_i32 = arith.constant 0 : i32
    %c0_i32_0 = arith.constant 0 : i32
    %c0_i32_1 = arith.constant 0 : i32
    return %c0_i32, %c0_i32_0 : i32, i32
  }
  func.func @transform_6(%arg0: i32) -> (i32, i32) {
    %c0_i32 = arith.constant 0 : i32
    %c0_i32_0 = arith.constant 0 : i32
    %c0_i32_1 = arith.constant 0 : i32
    return %c0_i32, %c0_i32_0 : i32, i32
  }
  func.func @transform_7(%arg0: i32) -> (i32, i32) {
    %c0_i32 = arith.constant 0 : i32
    %c0_i32_0 = arith.constant 0 : i32
    %c0_i32_1 = arith.constant 0 : i32
    return %c0_i32, %c0_i32_0 : i32, i32
  }
  func.func @transform_8(%arg0: i32) -> (i32, i32) {
    %c0_i32 = arith.constant 0 : i32
    %c0_i32_0 = arith.constant 0 : i32
    %c0_i32_1 = arith.constant 0 : i32
    return %c0_i32, %c0_i32_0 : i32, i32
  }
  func.func @transform_9(%arg0: i32) -> (i32, i32) {
    %c0_i32 = arith.constant 0 : i32
    %c0_i32_0 = arith.constant 0 : i32
    %c0_i32_1 = arith.constant 0 : i32
    return %c0_i32, %c0_i32_0 : i32, i32
  }
  func.func @transform_10(%arg0: i32) -> (i32, i32) {
    %c0_i32 = arith.constant 0 : i32
    %c0_i32_0 = arith.constant 0 : i32
    %c0_i32_1 = arith.constant 0 : i32
    return %c0_i32, %c0_i32_0 : i32, i32
  }
  func.func @transform_11(%arg0: i32) -> (i32, i32) {
    %c0_i32 = arith.constant 0 : i32
    %c0_i32_0 = arith.constant 0 : i32
    %c0_i32_1 = arith.constant 0 : i32
    return %c0_i32, %c0_i32_0 : i32, i32
  }
  func.func @transform_12(%arg0: i32) -> (i32, i32) {
    %c0_i32 = arith.constant 0 : i32
    %c0_i32_0 = arith.constant 0 : i32
    %c0_i32_1 = arith.constant 0 : i32
    return %c0_i32, %c0_i32_0 : i32, i32
  }
  func.func @transform_13(%arg0: i32) -> (i32, i32) {
    %c0_i32 = arith.constant 0 : i32
    %c0_i32_0 = arith.constant 0 : i32
    %c0_i32_1 = arith.constant 0 : i32
    return %c0_i32, %c0_i32_0 : i32, i32
  }
  func.func @transform_14(%arg0: i32) -> (i32, i32) {
    %c0_i32 = arith.constant 0 : i32
    %c0_i32_0 = arith.constant 0 : i32
    %c0_i32_1 = arith.constant 0 : i32
    return %c0_i32, %c0_i32_0 : i32, i32
  }
  func.func @transform_15(%arg0: i32) -> (i32, i32) {
    %c0_i32 = arith.constant 0 : i32
    %c0_i32_0 = arith.constant 0 : i32
    %c0_i32_1 = arith.constant 0 : i32
    return %c0_i32, %c0_i32_0 : i32, i32
  }
  func.func @transform_16(%arg0: i32) -> (i32, i32) {
    %c0_i32 = arith.constant 0 : i32
    %c0_i32_0 = arith.constant 0 : i32
    %c0_i32_1 = arith.constant 0 : i32
    return %c0_i32, %c0_i32_0 : i32, i32
  }
  func.func @transform_17(%arg0: i32) -> (i32, i32) {
    %c0_i32 = arith.constant 0 : i32
    %c0_i32_0 = arith.constant 0 : i32
    %c0_i32_1 = arith.constant 0 : i32
    return %c0_i32, %c0_i32_0 : i32, i32
  }
  func.func @transform_18(%arg0: i32) -> (i32, i32) {
    %c0_i32 = arith.constant 0 : i32
    %c0_i32_0 = arith.constant 0 : i32
    %c0_i32_1 = arith.constant 0 : i32
    return %c0_i32, %c0_i32_0 : i32, i32
  }
  func.func @transform_19(%arg0: i32) -> (i32, i32, i32) {
    %c0_i32 = arith.constant 0 : i32
    %c0_i32_0 = arith.constant 0 : i32
    %c0_i32_1 = arith.constant 0 : i32
    return %arg0, %c0_i32, %c0_i32_0 : i32, i32, i32
  }
  func.func @transform_20(%arg0: i32) -> (i32, i32, i32) {
    %c0_i32 = arith.constant 0 : i32
    %c0_i32_0 = arith.constant 0 : i32
    %c0_i32_1 = arith.constant 0 : i32
    return %arg0, %c0_i32, %c0_i32_0 : i32, i32, i32
  }
  func.func @transform_21(%arg0: i32) -> (i32, i32, i32) {
    %c0_i32 = arith.constant 0 : i32
    %c0_i32_0 = arith.constant 0 : i32
    %c0_i32_1 = arith.constant 0 : i32
    return %arg0, %c0_i32, %c0_i32_0 : i32, i32, i32
  }
}

</mosaic_0001>

<llo_original>
// kernel: gcl4e_forward.1
$region0: #{gcl4e_forward.1}
  #allocation0 [shape = 'u32[]', space=smem, size = 0x4, offset = 0x4, fixed_abs, tag = 'smem constant byte address 0x4 - core index']
  #allocation1 [shape = 'u32[144,128]{1,0:T(1,128)}', space=vmem, size = 0x12000, scoped, tag = 'internal scratch']
  %s0 = inlined_call_operand.vmem [shape: f32[4,8,8], index: 0, kind: input, shape index: {}, may-alias: {0,19}]
  %s1 = inlined_call_operand.vmem [shape: f32[4,8,3], index: 1, kind: input, shape index: {}]
  %s2 = inlined_call_operand.vmem [shape: s32[1,16], index: 2, kind: input, shape index: {}]
  %s3 = inlined_call_operand.vmem [shape: s32[1,16], index: 3, kind: input, shape index: {}]
  %s4 = inlined_call_operand.vmem [shape: bf16[17,16], index: 4, kind: input, shape index: {}]
  %s5 = inlined_call_operand.vmem [shape: f32[1,16], index: 5, kind: input, shape index: {}]
  %s6 = inlined_call_operand.vmem [shape: bf16[16,16], index: 6, kind: input, shape index: {}]
  %s7 = inlined_call_operand.vmem [shape: f32[1,16], index: 7, kind: input, shape index: {}]
  %s8 = inlined_call_operand.vmem [shape: bf16[24,16], index: 8, kind: input, shape index: {}]
  %s9 = inlined_call_operand.vmem [shape: f32[1,16], index: 9, kind: input, shape index: {}]
  %s10 = inlined_call_operand.vmem [shape: bf16[16,8], index: 10, kind: input, shape index: {}]
  %s11 = inlined_call_operand.vmem [shape: f32[1,8], index: 11, kind: input, shape index: {}]
  %s12 = inlined_call_operand.vmem [shape: bf16[16,16], index: 12, kind: input, shape index: {}]
  %s13 = inlined_call_operand.vmem [shape: f32[1,16], index: 13, kind: input, shape index: {}]
  %s14 = inlined_call_operand.vmem [shape: bf16[16,1], index: 14, kind: input, shape index: {}]
  %s15 = inlined_call_operand.vmem [shape: bf16[6,3], index: 15, kind: input, shape index: {}]
  %s16 = inlined_call_operand.vmem [shape: f32[1,3], index: 16, kind: input, shape index: {}]
  %s17 = inlined_call_operand.vmem [shape: bf16[3,3], index: 17, kind: input, shape index: {}]
  %s18 = inlined_call_operand.vmem [shape: f32[1,3], index: 18, kind: input, shape index: {}]
  %s19 = inlined_call_operand.vmem [shape: f32[4,8,8], index: 19, kind: output, shape index: {0}, may-alias: {0,19}]
  %s20 = inlined_call_operand.vmem [shape: f32[4,8,3], index: 20, kind: output, shape index: {1}]
  %s21 = inlined_call_operand.vmem [shape: f32[4,8,3], index: 21, kind: output, shape index: {2}]
  %22 = xla_tuple %s19, %s20, %s21
  %s23 = sld [smem:[#allocation0]]
  $region125: #{gcl4e_forward.1} parent=0
    _
  %s25 = ssub.s32 1, %s23
  %s26 = scalar_select 0, %s25, %s23
  loop: start=0, step=1, limit=6
  $region2: #{gcl4e_forward.1} parent=0 // loop_pre_header
    _
  $region3: #{gcl4e_forward.1} parent=0 // loop_header
    %s28 = sphi 0, %s32
    %p29 = scmp.ge.s32.totalorder %s28, 6
    %s38 = sphi 0, %s40
    %s41 = sphi 0, %s38
    %s42 = sphi 0, %s41
    %s58 = sphi 0, %s42
    %s64 = sphi 0, %s66
    %s67 = sphi 0, %s64
    %s68 = sphi 0, %s67
    %s84 = sphi 0, %s68
    %s88 = sphi 0, %s88
    %s90 = sphi 0, %s88
    %s91 = sphi 0, %s90
    %s105 = sphi 0, %s91
    %s109 = sphi 0, %s109
    %s111 = sphi 0, %s109
    %s112 = sphi 0, %s111
    %s126 = sphi 0, %s112
    %s130 = sphi 0, %s130
    %s132 = sphi 0, %s130
    %s133 = sphi 0, %s132
    %s147 = sphi 0, %s133
    %s151 = sphi 0, %s151
    %s153 = sphi 0, %s151
    %s154 = sphi 0, %s153
    %s168 = sphi 0, %s154
    %s172 = sphi 0, %s172
    %s174 = sphi 0, %s172
    %s175 = sphi 0, %s174
    %s189 = sphi 0, %s175
    %s193 = sphi 0, %s193
    %s195 = sphi 0, %s193
    %s196 = sphi 0, %s195
    %s210 = sphi 0, %s196
    %s214 = sphi 0, %s214
    %s216 = sphi 0, %s214
    %s217 = sphi 0, %s216
    %s231 = sphi 0, %s217
    %s235 = sphi 0, %s235
    %s237 = sphi 0, %s235
    %s238 = sphi 0, %s237
    %s252 = sphi 0, %s238
    %s256 = sphi 0, %s256
    %s258 = sphi 0, %s256
    %s259 = sphi 0, %s258
    %s273 = sphi 0, %s259
    %s277 = sphi 0, %s277
    %s279 = sphi 0, %s277
    %s280 = sphi 0, %s279
    %s294 = sphi 0, %s280
    %s298 = sphi 0, %s298
    %s300 = sphi 0, %s298
    %s301 = sphi 0, %s300
    %s315 = sphi 0, %s301
    %s319 = sphi 0, %s319
    %s321 = sphi 0, %s319
    %s322 = sphi 0, %s321
    %s336 = sphi 0, %s322
    %s340 = sphi 0, %s340
    %s342 = sphi 0, %s340
    %s343 = sphi 0, %s342
    %s357 = sphi 0, %s343
    %s361 = sphi 0, %s361
    %s363 = sphi 0, %s361
    %s364 = sphi 0, %s363
    %s378 = sphi 0, %s364
    %s382 = sphi 0, %s382
    %s384 = sphi 0, %s382
    %s385 = sphi 0, %s384
    %s399 = sphi 0, %s385
    %s403 = sphi 0, %s403
    %s405 = sphi 0, %s403
    %s406 = sphi 0, %s405
    %s420 = sphi 0, %s406
    %s424 = sphi 0, %s424
    %s426 = sphi 0, %s424
    %s427 = sphi 0, %s426
    %s441 = sphi 0, %s427
    %s447 = sphi 0, %s449
    %s450 = sphi 0, %s447
    %s451 = sphi 0, %s450
    %s467 = sphi 0, %s451
    %s473 = sphi 0, %s475
    %s476 = sphi 0, %s473
    %s477 = sphi 0, %s476
    %s493 = sphi 0, %s477
    %s499 = sphi 0, %s501
    %s502 = sphi 0, %s499
    %s503 = sphi 0, %s502
    %s519 = sphi 0, %s503
  $region4: #{gcl4e_forward.1} parent=0 // loop_header_branch
    %31 = sbr.rel (%p29) target = $region8
  $region5: #{gcl4e_forward.1} parent=0 // loop_body
    %s33 = ssub.s32 %s28, 1
    %s34 = ssub.s32 %s28, 2
    %s35 = sadd.s32 %s28, 1
    %s36 = ssub.s32 %s28, %s35
    %p37 = scmp.eq.s32.totalorder %s36, 0
    %s39 = sadd.s32 %s38, 1
    %s40 = scalar_select %p37, %s38, %s39
    %p43 = pneg %p37
    %p44 = scmp.eq.s32.totalorder %s28, 3
    %p45 = por %p43, %p44
    %p46 = scmp.ne.s32.totalorder %s38, %s41
    %p47 = scmp.eq.s32.totalorder %s28, 0
    %p48 = por %p46, %p47
    %p49 = scmp.ne.s32.totalorder %s38, %s41
    %p50 = scmp.eq.s32.totalorder %s33, 3
    %p51 = por %p49, %p50
    %p52 = scmp.ne.s32.totalorder %s41, %s42
    %p53 = scmp.eq.s32.totalorder %s33, 0
    %p54 = por %p52, %p53
    %p55 = scmp.ne.s32.totalorder %s41, %s42
    %p56 = scmp.eq.s32.totalorder %s34, 3
    %p57 = por %p55, %p56
    %p59 = scmp.ne.s32.totalorder %s42, %s58
    %p60 = scmp.eq.s32.totalorder %s34, 0
    %p61 = por %p59, %p60
    %s62 = ssub.s32 %s28, %s35
    %p63 = scmp.eq.s32.totalorder %s62, 0
    %s65 = sadd.s32 %s64, 1
    %s66 = scalar_select %p63, %s64, %s65
    %p69 = pneg %p63
    %p70 = scmp.eq.s32.totalorder %s28, 3
    %p71 = por %p69, %p70
    %p72 = scmp.ne.s32.totalorder %s64, %s67
    %p73 = scmp.eq.s32.totalorder %s28, 0
    %p74 = por %p72, %p73
    %p75 = scmp.ne.s32.totalorder %s64, %s67
    %p76 = scmp.eq.s32.totalorder %s33, 3
    %p77 = por %p75, %p76
    %p78 = scmp.ne.s32.totalorder %s67, %s68
    %p79 = scmp.eq.s32.totalorder %s33, 0
    %p80 = por %p78, %p79
    %p81 = scmp.ne.s32.totalorder %s67, %s68
    %p82 = scmp.eq.s32.totalorder %s34, 3
    %p83 = por %p81, %p82
    %p85 = scmp.ne.s32.totalorder %s68, %s84
    %p86 = scmp.eq.s32.totalorder %s34, 0
    %p87 = por %p85, %p86
    %s89 = sadd.s32 %s88, 1
    %p92 = scmp.eq.s32.totalorder %s28, 3
    %p93 = scmp.ne.s32.totalorder %s88, %s90
    %p94 = scmp.eq.s32.totalorder %s28, 0
    %p95 = por %p93, %p94
    %p96 = scmp.ne.s32.totalorder %s88, %s90
    %p97 = scmp.eq.s32.totalorder %s33, 3
    %p98 = por %p96, %p97
    %p99 = scmp.ne.s32.totalorder %s90, %s91
    %p100 = scmp.eq.s32.totalorder %s33, 0
    %p101 = por %p99, %p100
    %p102 = scmp.ne.s32.totalorder %s90, %s91
    %p103 = scmp.eq.s32.totalorder %s34, 3
    %p104 = por %p102, %p103
    %p106 = scmp.ne.s32.totalorder %s91, %s105
    %p107 = scmp.eq.s32.totalorder %s34, 0
    %p108 = por %p106, %p107
    %s110 = sadd.s32 %s109, 1
    %p113 = scmp.eq.s32.totalorder %s28, 3
    %p114 = scmp.ne.s32.totalorder %s109, %s111
    %p115 = scmp.eq.s32.totalorder %s28, 0
    %p116 = por %p114, %p115
    %p117 = scmp.ne.s32.totalorder %s109, %s111
    %p118 = scmp.eq.s32.totalorder %s33, 3
    %p119 = por %p117, %p118
    %p120 = scmp.ne.s32.totalorder %s111, %s112
    %p121 = scmp.eq.s32.totalorder %s33, 0
    %p122 = por %p120, %p121
    %p123 = scmp.ne.s32.totalorder %s111, %s112
    %p124 = scmp.eq.s32.totalorder %s34, 3
    %p125 = por %p123, %p124
    %p127 = scmp.ne.s32.totalorder %s112, %s126
    %p128 = scmp.eq.s32.totalorder %s34, 0
    %p129 = por %p127, %p128
    %s131 = sadd.s32 %s130, 1
    %p134 = scmp.eq.s32.totalorder %s28, 3
    %p135 = scmp.ne.s32.totalorder %s130, %s132
    %p136 = scmp.eq.s32.totalorder %s28, 0
    %p137 = por %p135, %p136
    %p138 = scmp.ne.s32.totalorder %s130, %s132
    %p139 = scmp.eq.s32.totalorder %s33, 3
    %p140 = por %p138, %p139
    %p141 = scmp.ne.s32.totalorder %s132, %s133
    %p142 = scmp.eq.s32.totalorder %s33, 0
    %p143 = por %p141, %p142
    %p144 = scmp.ne.s32.totalorder %s132, %s133
    %p145 = scmp.eq.s32.totalorder %s34, 3
    %p146 = por %p144, %p145
    %p148 = scmp.ne.s32.totalorder %s133, %s147
    %p149 = scmp.eq.s32.totalorder %s34, 0
    %p150 = por %p148, %p149
    %s152 = sadd.s32 %s151, 1
    %p155 = scmp.eq.s32.totalorder %s28, 3
    %p156 = scmp.ne.s32.totalorder %s151, %s153
    %p157 = scmp.eq.s32.totalorder %s28, 0
    %p158 = por %p156, %p157
    %p159 = scmp.ne.s32.totalorder %s151, %s153
    %p160 = scmp.eq.s32.totalorder %s33, 3
    %p161 = por %p159, %p160
    %p162 = scmp.ne.s32.totalorder %s153, %s154
    %p163 = scmp.eq.s32.totalorder %s33, 0
    %p164 = por %p162, %p163
    %p165 = scmp.ne.s32.totalorder %s153, %s154
    %p166 = scmp.eq.s32.totalorder %s34, 3
    %p167 = por %p165, %p166
    %p169 = scmp.ne.s32.totalorder %s154, %s168
    %p170 = scmp.eq.s32.totalorder %s34, 0
    %p171 = por %p169, %p170
    %s173 = sadd.s32 %s172, 1
    %p176 = scmp.eq.s32.totalorder %s28, 3
    %p177 = scmp.ne.s32.totalorder %s172, %s174
    %p178 = scmp.eq.s32.totalorder %s28, 0
    %p179 = por %p177, %p178
    %p180 = scmp.ne.s32.totalorder %s172, %s174
    %p181 = scmp.eq.s32.totalorder %s33, 3
    %p182 = por %p180, %p181
    %p183 = scmp.ne.s32.totalorder %s174, %s175
    %p184 = scmp.eq.s32.totalorder %s33, 0
    %p185 = por %p183, %p184
    %p186 = scmp.ne.s32.totalorder %s174, %s175
    %p187 = scmp.eq.s32.totalorder %s34, 3
    %p188 = por %p186, %p187
    %p190 = scmp.ne.s32.totalorder %s175, %s189
    %p191 = scmp.eq.s32.totalorder %s34, 0
    %p192 = por %p190, %p191
    %s194 = sadd.s32 %s193, 1
    %p197 = scmp.eq.s32.totalorder %s28, 3
    %p198 = scmp.ne.s32.totalorder %s193, %s195
    %p199 = scmp.eq.s32.totalorder %s28, 0
    %p200 = por %p198, %p199
    %p201 = scmp.ne.s32.totalorder %s193, %s195
    %p202 = scmp.eq.s32.totalorder %s33, 3
    %p203 = por %p201, %p202
    %p204 = scmp.ne.s32.totalorder %s195, %s196
    %p205 = scmp.eq.s32.totalorder %s33, 0
    %p206 = por %p204, %p205
    %p207 = scmp.ne.s32.totalorder %s195, %s196
    %p208 = scmp.eq.s32.totalorder %s34, 3
    %p209 = por %p207, %p208
    %p211 = scmp.ne.s32.totalorder %s196, %s210
    %p212 = scmp.eq.s32.totalorder %s34, 0
    %p213 = por %p211, %p212
    %s215 = sadd.s32 %s214, 1
    %p218 = scmp.eq.s32.totalorder %s28, 3
    %p219 = scmp.ne.s32.totalorder %s214, %s216
    %p220 = scmp.eq.s32.totalorder %s28, 0
    %p221 = por %p219, %p220
    %p222 = scmp.ne.s32.totalorder %s214, %s216
    %p223 = scmp.eq.s32.totalorder %s33, 3
    %p224 = por %p222, %p223
    %p225 = scmp.ne.s32.totalorder %s216, %s217
    %p226 = scmp.eq.s32.totalorder %s33, 0
    %p227 = por %p225, %p226
    %p228 = scmp.ne.s32.totalorder %s216, %s217
    %p229 = scmp.eq.s32.totalorder %s34, 3
    %p230 = por %p228, %p229
    %p232 = scmp.ne.s32.totalorder %s217, %s231
    %p233 = scmp.eq.s32.totalorder %s34, 0
    %p234 = por %p232, %p233
    %s236 = sadd.s32 %s235, 1
    %p239 = scmp.eq.s32.totalorder %s28, 3
    %p240 = scmp.ne.s32.totalorder %s235, %s237
    %p241 = scmp.eq.s32.totalorder %s28, 0
    %p242 = por %p240, %p241
    %p243 = scmp.ne.s32.totalorder %s235, %s237
    %p244 = scmp.eq.s32.totalorder %s33, 3
    %p245 = por %p243, %p244
    %p246 = scmp.ne.s32.totalorder %s237, %s238
    %p247 = scmp.eq.s32.totalorder %s33, 0
    %p248 = por %p246, %p247
    %p249 = scmp.ne.s32.totalorder %s237, %s238
    %p250 = scmp.eq.s32.totalorder %s34, 3
    %p251 = por %p249, %p250
    %p253 = scmp.ne.s32.totalorder %s238, %s252
    %p254 = scmp.eq.s32.totalorder %s34, 0
    %p255 = por %p253, %p254
    %s257 = sadd.s32 %s256, 1
    %p260 = scmp.eq.s32.totalorder %s28, 3
    %p261 = scmp.ne.s32.totalorder %s256, %s258
    %p262 = scmp.eq.s32.totalorder %s28, 0
    %p263 = por %p261, %p262
    %p264 = scmp.ne.s32.totalorder %s256, %s258
    %p265 = scmp.eq.s32.totalorder %s33, 3
    %p266 = por %p264, %p265
    %p267 = scmp.ne.s32.totalorder %s258, %s259
    %p268 = scmp.eq.s32.totalorder %s33, 0
    %p269 = por %p267, %p268
    %p270 = scmp.ne.s32.totalorder %s258, %s259
    %p271 = scmp.eq.s32.totalorder %s34, 3
    %p272 = por %p270, %p271
    %p274 = scmp.ne.s32.totalorder %s259, %s273
    %p275 = scmp.eq.s32.totalorder %s34, 0
    %p276 = por %p274, %p275
    %s278 = sadd.s32 %s277, 1
    %p281 = scmp.eq.s32.totalorder %s28, 3
    %p282 = scmp.ne.s32.totalorder %s277, %s279
    %p283 = scmp.eq.s32.totalorder %s28, 0
    %p284 = por %p282, %p283
    %p285 = scmp.ne.s32.totalorder %s277, %s279
    %p286 = scmp.eq.s32.totalorder %s33, 3
    %p287 = por %p285, %p286
    %p288 = scmp.ne.s32.totalorder %s279, %s280
    %p289 = scmp.eq.s32.totalorder %s33, 0
    %p290 = por %p288, %p289
    %p291 = scmp.ne.s32.totalorder %s279, %s280
    %p292 = scmp.eq.s32.totalorder %s34, 3
    %p293 = por %p291, %p292
    %p295 = scmp.ne.s32.totalorder %s280, %s294
    %p296 = scmp.eq.s32.totalorder %s34, 0
    %p297 = por %p295, %p296
    %s299 = sadd.s32 %s298, 1
    %p302 = scmp.eq.s32.totalorder %s28, 3
    %p303 = scmp.ne.s32.totalorder %s298, %s300
    %p304 = scmp.eq.s32.totalorder %s28, 0
    %p305 = por %p303, %p304
    %p306 = scmp.ne.s32.totalorder %s298, %s300
    %p307 = scmp.eq.s32.totalorder %s33, 3
    %p308 = por %p306, %p307
    %p309 = scmp.ne.s32.totalorder %s300, %s301
    %p310 = scmp.eq.s32.totalorder %s33, 0
    %p311 = por %p309, %p310
    %p312 = scmp.ne.s32.totalorder %s300, %s301
    %p313 = scmp.eq.s32.totalorder %s34, 3
    %p314 = por %p312, %p313
    %p316 = scmp.ne.s32.totalorder %s301, %s315
    %p317 = scmp.eq.s32.totalorder %s34, 0
    %p318 = por %p316, %p317
    %s320 = sadd.s32 %s319, 1
    %p323 = scmp.eq.s32.totalorder %s28, 3
    %p324 = scmp.ne.s32.totalorder %s319, %s321
    %p325 = scmp.eq.s32.totalorder %s28, 0
    %p326 = por %p324, %p325
    %p327 = scmp.ne.s32.totalorder %s319, %s321
    %p328 = scmp.eq.s32.totalorder %s33, 3
    %p329 = por %p327, %p328
    %p330 = scmp.ne.s32.totalorder %s321, %s322
    %p331 = scmp.eq.s32.totalorder %s33, 0
    %p332 = por %p330, %p331
    %p333 = scmp.ne.s32.totalorder %s321, %s322
    %p334 = scmp.eq.s32.totalorder %s34, 3
    %p335 = por %p333, %p334
    %p337 = scmp.ne.s32.totalorder %s322, %s336
    %p338 = scmp.eq.s32.totalorder %s34, 0
    %p339 = por %p337, %p338
    %s341 = sadd.s32 %s340, 1
    %p344 = scmp.eq.s32.totalorder %s28, 3
    %p345 = scmp.ne.s32.totalorder %s340, %s342
    %p346 = scmp.eq.s32.totalorder %s28, 0
    %p347 = por %p345, %p346
    %p348 = scmp.ne.s32.totalorder %s340, %s342
    %p349 = scmp.eq.s32.totalorder %s33, 3
    %p350 = por %p348, %p349
    %p351 = scmp.ne.s32.totalorder %s342, %s343
    %p352 = scmp.eq.s32.totalorder %s33, 0
    %p353 = por %p351, %p352
    %p354 = scmp.ne.s32.totalorder %s342, %s343
    %p355 = scmp.eq.s32.totalorder %s34, 3
    %p356 = por %p354, %p355
    %p358 = scmp.ne.s32.totalorder %s343, %s357
    %p359 = scmp.eq.s32.totalorder %s34, 0
    %p360 = por %p358, %p359
    %s362 = sadd.s32 %s361, 1
    %p365 = scmp.eq.s32.totalorder %s28, 3
    %p366 = scmp.ne.s32.totalorder %s361, %s363
    %p367 = scmp.eq.s32.totalorder %s28, 0
    %p368 = por %p366, %p367
    %p369 = scmp.ne.s32.totalorder %s361, %s363
    %p370 = scmp.eq.s32.totalorder %s33, 3
    %p371 = por %p369, %p370
    %p372 = scmp.ne.s32.totalorder %s363, %s364
    %p373 = scmp.eq.s32.totalorder %s33, 0
    %p374 = por %p372, %p373
    %p375 = scmp.ne.s32.totalorder %s363, %s364
    %p376 = scmp.eq.s32.totalorder %s34, 3
    %p377 = por %p375, %p376
    %p379 = scmp.ne.s32.totalorder %s364, %s378
    %p380 = scmp.eq.s32.totalorder %s34, 0
    %p381 = por %p379, %p380
    %s383 = sadd.s32 %s382, 1
    %p386 = scmp.eq.s32.totalorder %s28, 3
    %p387 = scmp.ne.s32.totalorder %s382, %s384
    %p388 = scmp.eq.s32.totalorder %s28, 0
    %p389 = por %p387, %p388
    %p390 = scmp.ne.s32.totalorder %s382, %s384
    %p391 = scmp.eq.s32.totalorder %s33, 3
    %p392 = por %p390, %p391
    %p393 = scmp.ne.s32.totalorder %s384, %s385
    %p394 = scmp.eq.s32.totalorder %s33, 0
    %p395 = por %p393, %p394
    %p396 = scmp.ne.s32.totalorder %s384, %s385
    %p397 = scmp.eq.s32.totalorder %s34, 3
    %p398 = por %p396, %p397
    %p400 = scmp.ne.s32.totalorder %s385, %s399
    %p401 = scmp.eq.s32.totalorder %s34, 0
    %p402 = por %p400, %p401
    %s404 = sadd.s32 %s403, 1
    %p407 = scmp.eq.s32.totalorder %s28, 3
    %p408 = scmp.ne.s32.totalorder %s403, %s405
    %p409 = scmp.eq.s32.totalorder %s28, 0
    %p410 = por %p408, %p409
    %p411 = scmp.ne.s32.totalorder %s403, %s405
    %p412 = scmp.eq.s32.totalorder %s33, 3
    %p413 = por %p411, %p412
    %p414 = scmp.ne.s32.totalorder %s405, %s406
    %p415 = scmp.eq.s32.totalorder %s33, 0
    %p416 = por %p414, %p415
    %p417 = scmp.ne.s32.totalorder %s405, %s406
    %p418 = scmp.eq.s32.totalorder %s34, 3
    %p419 = por %p417, %p418
    %p421 = scmp.ne.s32.totalorder %s406, %s420
    %p422 = scmp.eq.s32.totalorder %s34, 0
    %p423 = por %p421, %p422
    %s425 = sadd.s32 %s424, 1
    %p428 = scmp.eq.s32.totalorder %s28, 3
    %p429 = scmp.ne.s32.totalorder %s424, %s426
    %p430 = scmp.eq.s32.totalorder %s28, 0
    %p431 = por %p429, %p430
    %p432 = scmp.ne.s32.totalorder %s424, %s426
    %p433 = scmp.eq.s32.totalorder %s33, 3
    %p434 = por %p432, %p433
    %p435 = scmp.ne.s32.totalorder %s426, %s427
    %p436 = scmp.eq.s32.totalorder %s33, 0
    %p437 = por %p435, %p436
    %p438 = scmp.ne.s32.totalorder %s426, %s427
    %p439 = scmp.eq.s32.totalorder %s34, 3
    %p440 = por %p438, %p439
    %p442 = scmp.ne.s32.totalorder %s427, %s441
    %p443 = scmp.eq.s32.totalorder %s34, 0
    %p444 = por %p442, %p443
    %s445 = ssub.s32 %s28, %s35
    %p446 = scmp.eq.s32.totalorder %s445, 0
    %s448 = sadd.s32 %s447, 1
    %s449 = scalar_select %p446, %s447, %s448
    %p452 = pneg %p446
    %p453 = scmp.eq.s32.totalorder %s28, 3
    %p454 = por %p452, %p453
    %p455 = scmp.ne.s32.totalorder %s447, %s450
    %p456 = scmp.eq.s32.totalorder %s28, 0
    %p457 = por %p455, %p456
    %p458 = scmp.ne.s32.totalorder %s447, %s450
    %p459 = scmp.eq.s32.totalorder %s33, 3
    %p460 = por %p458, %p459
    %p461 = scmp.ne.s32.totalorder %s450, %s451
    %p462 = scmp.eq.s32.totalorder %s33, 0
    %p463 = por %p461, %p462
    %p464 = scmp.ne.s32.totalorder %s450, %s451
    %p465 = scmp.eq.s32.totalorder %s34, 3
    %p466 = por %p464, %p465
    %p468 = scmp.ne.s32.totalorder %s451, %s467
    %p469 = scmp.eq.s32.totalorder %s34, 0
    %p470 = por %p468, %p469
    %s471 = ssub.s32 %s28, %s35
    %p472 = scmp.eq.s32.totalorder %s471, 0
    %s474 = sadd.s32 %s473, 1
    %s475 = scalar_select %p472, %s473, %s474
    %p478 = pneg %p472
    %p479 = scmp.eq.s32.totalorder %s28, 3
    %p480 = por %p478, %p479
    %p481 = scmp.ne.s32.totalorder %s473, %s476
    %p482 = scmp.eq.s32.totalorder %s28, 0
    %p483 = por %p481, %p482
    %p484 = scmp.ne.s32.totalorder %s473, %s476
    %p485 = scmp.eq.s32.totalorder %s33, 3
    %p486 = por %p484, %p485
    %p487 = scmp.ne.s32.totalorder %s476, %s477
    %p488 = scmp.eq.s32.totalorder %s33, 0
    %p489 = por %p487, %p488
    %p490 = scmp.ne.s32.totalorder %s476, %s477
    %p491 = scmp.eq.s32.totalorder %s34, 3
    %p492 = por %p490, %p491
    %p494 = scmp.ne.s32.totalorder %s477, %s493
    %p495 = scmp.eq.s32.totalorder %s34, 0
    %p496 = por %p494, %p495
    %s497 = ssub.s32 %s28, %s35
    %p498 = scmp.eq.s32.totalorder %s497, 0
    %s500 = sadd.s32 %s499, 1
    %s501 = scalar_select %p498, %s499, %s500
    %p504 = pneg %p498
    %p505 = scmp.eq.s32.totalorder %s28, 3
    %p506 = por %p504, %p505
    %p507 = scmp.ne.s32.totalorder %s499, %s502
    %p508 = scmp.eq.s32.totalorder %s28, 0
    %p509 = por %p507, %p508
    %p510 = scmp.ne.s32.totalorder %s499, %s502
    %p511 = scmp.eq.s32.totalorder %s33, 3
    %p512 = por %p510, %p511
    %p513 = scmp.ne.s32.totalorder %s502, %s503
    %p514 = scmp.eq.s32.totalorder %s33, 0
    %p515 = por %p513, %p514
    %p516 = scmp.ne.s32.totalorder %s502, %s503
    %p517 = scmp.eq.s32.totalorder %s34, 3
    %p518 = por %p516, %p517
    %p520 = scmp.ne.s32.totalorder %s503, %s519
    %p521 = scmp.eq.s32.totalorder %s34, 0
    %p522 = por %p520, %p521
    %p523 = scmp.le.s32.totalorder 1, %s28
    %p524 = scmp.lt.s32.totalorder %s28, 5
    %p525 = pnand %p523, %p524
    %p526 = pneg %p525
    // Predicated region
    $region9: #{gcl4e_forward.1} parent=5 // pred_check
      _
    $region10: #{gcl4e_forward.1} parent=5 // pred_check_branch
      %528 = sbr.rel (%p525) target = $region12
    $region11: #{gcl4e_forward.1} parent=5 // pred_region
      %s529 = ssub.s32 %s28, 1
      // Predicated region
      $region13: #{gcl4e_forward.1} parent=11 // pred_check
        %p530 = pneg %p101
      $region14: #{gcl4e_forward.1} parent=11 // pred_check_branch
        %532 = sbr.rel (%p530) target = $region16
      $region15: #{gcl4e_forward.1} parent=11 // pred_region
        _
      $region16: #{gcl4e_forward.1} parent=11 // pred_fallthru
        _
      // Predicated region
      $region17: #{gcl4e_forward.1} parent=11 // pred_check
        %p533 = pneg %p122
      $region18: #{gcl4e_forward.1} parent=11 // pred_check_branch
        %535 = sbr.rel (%p533) target = $region20
      $region19: #{gcl4e_forward.1} parent=11 // pred_region
        _
      $region20: #{gcl4e_forward.1} parent=11 // pred_fallthru
        _
      // Predicated region
      $region21: #{gcl4e_forward.1} parent=11 // pred_check
        %p536 = pneg %p143
      $region22: #{gcl4e_forward.1} parent=11 // pred_check_branch
        %538 = sbr.rel (%p536) target = $region24
      $region23: #{gcl4e_forward.1} parent=11 // pred_region
        _
      $region24: #{gcl4e_forward.1} parent=11 // pred_fallthru
        _
      // Predicated region
      $region25: #{gcl4e_forward.1} parent=11 // pred_check
        %p539 = pneg %p164
      $region26: #{gcl4e_forward.1} parent=11 // pred_check_branch
        %541 = sbr.rel (%p539) target = $region28
      $region27: #{gcl4e_forward.1} parent=11 // pred_region
        _
      $region28: #{gcl4e_forward.1} parent=11 // pred_fallthru
        _
      // Predicated region
      $region29: #{gcl4e_forward.1} parent=11 // pred_check
        %p542 = pneg %p185
      $region30: #{gcl4e_forward.1} parent=11 // pred_check_branch
        %544 = sbr.rel (%p542) target = $region32
      $region31: #{gcl4e_forward.1} parent=11 // pred_region
        _
      $region32: #{gcl4e_forward.1} parent=11 // pred_fallthru
        _
      // Predicated region
      $region33: #{gcl4e_forward.1} parent=11 // pred_check
        %p545 = pneg %p206
      $region34: #{gcl4e_forward.1} parent=11 // pred_check_branch
        %547 = sbr.rel (%p545) target = $region36
      $region35: #{gcl4e_forward.1} parent=11 // pred_region
        _
      $region36: #{gcl4e_forward.1} parent=11 // pred_fallthru
        _
      // Predicated region
      $region37: #{gcl4e_forward.1} parent=11 // pred_check
        %p548 = pneg %p227
      $region38: #{gcl4e_forward.1} parent=11 // pred_check_branch
        %550 = sbr.rel (%p548) target = $region40
      $region39: #{gcl4e_forward.1} parent=11 // pred_region
        _
      $region40: #{gcl4e_forward.1} parent=11 // pred_fallthru
        _
      // Predicated region
      $region41: #{gcl4e_forward.1} parent=11 // pred_check
        %p551 = pneg %p248
      $region42: #{gcl4e_forward.1} parent=11 // pred_check_branch
        %553 = sbr.rel (%p551) target = $region44
      $region43: #{gcl4e_forward.1} parent=11 // pred_region
        _
      $region44: #{gcl4e_forward.1} parent=11 // pred_fallthru
        _
      // Predicated region
      $region45: #{gcl4e_forward.1} parent=11 // pred_check
        %p554 = pneg %p269
      $region46: #{gcl4e_forward.1} parent=11 // pred_check_branch
        %556 = sbr.rel (%p554) target = $region48
      $region47: #{gcl4e_forward.1} parent=11 // pred_region
        _
      $region48: #{gcl4e_forward.1} parent=11 // pred_fallthru
        _
      // Predicated region
      $region49: #{gcl4e_forward.1} parent=11 // pred_check
        %p557 = pneg %p290
      $region50: #{gcl4e_forward.1} parent=11 // pred_check_branch
        %559 = sbr.rel (%p557) target = $region52
      $region51: #{gcl4e_forward.1} parent=11 // pred_region
        _
      $region52: #{gcl4e_forward.1} parent=11 // pred_fallthru
        _
      // Predicated region
      $region53: #{gcl4e_forward.1} parent=11 // pred_check
        %p560 = pneg %p311
      $region54: #{gcl4e_forward.1} parent=11 // pred_check_branch
        %562 = sbr.rel (%p560) target = $region56
      $region55: #{gcl4e_forward.1} parent=11 // pred_region
        _
      $region56: #{gcl4e_forward.1} parent=11 // pred_fallthru
        _
      // Predicated region
      $region57: #{gcl4e_forward.1} parent=11 // pred_check
        %p563 = pneg %p332
      $region58: #{gcl4e_forward.1} parent=11 // pred_check_branch
        %565 = sbr.rel (%p563) target = $region60
      $region59: #{gcl4e_forward.1} parent=11 // pred_region
        _
      $region60: #{gcl4e_forward.1} parent=11 // pred_fallthru
        _
      // Predicated region
      $region61: #{gcl4e_forward.1} parent=11 // pred_check
        %p566 = pneg %p353
      $region62: #{gcl4e_forward.1} parent=11 // pred_check_branch
        %568 = sbr.rel (%p566) target = $region64
      $region63: #{gcl4e_forward.1} parent=11 // pred_region
        _
      $region64: #{gcl4e_forward.1} parent=11 // pred_fallthru
        _
      // Predicated region
      $region65: #{gcl4e_forward.1} parent=11 // pred_check
        %p569 = pneg %p374
      $region66: #{gcl4e_forward.1} parent=11 // pred_check_branch
        %571 = sbr.rel (%p569) target = $region68
      $region67: #{gcl4e_forward.1} parent=11 // pred_region
        _
      $region68: #{gcl4e_forward.1} parent=11 // pred_fallthru
        _
      // Predicated region
      $region69: #{gcl4e_forward.1} parent=11 // pred_check
        %p572 = pneg %p395
      $region70: #{gcl4e_forward.1} parent=11 // pred_check_branch
        %574 = sbr.rel (%p572) target = $region72
      $region71: #{gcl4e_forward.1} parent=11 // pred_region
        _
      $region72: #{gcl4e_forward.1} parent=11 // pred_fallthru
        _
      // Predicated region
      $region73: #{gcl4e_forward.1} parent=11 // pred_check
        %p575 = pneg %p416
      $region74: #{gcl4e_forward.1} parent=11 // pred_check_branch
        %577 = sbr.rel (%p575) target = $region76
      $region75: #{gcl4e_forward.1} parent=11 // pred_region
        _
      $region76: #{gcl4e_forward.1} parent=11 // pred_fallthru
        _
      // Predicated region
      $region77: #{gcl4e_forward.1} parent=11 // pred_check
        %p578 = pneg %p437
      $region78: #{gcl4e_forward.1} parent=11 // pred_check_branch
        %580 = sbr.rel (%p578) target = $region80
      $region79: #{gcl4e_forward.1} parent=11 // pred_region
        _
      $region80: #{gcl4e_forward.1} parent=11 // pred_fallthru
        _
    $region12: #{gcl4e_forward.1} parent=5 // pred_fallthru
      _
    %p581 = scmp.lt.s32.totalorder %s28, 4
    // Predicated region
    $region81: #{gcl4e_forward.1} parent=5 // pred_check
      %p582 = pneg %p581
    $region82: #{gcl4e_forward.1} parent=5 // pred_check_branch
      %584 = sbr.rel (%p582) target = $region84
    $region83: #{gcl4e_forward.1} parent=5 // pred_region
      // Predicated region
      $region85: #{gcl4e_forward.1} parent=83 // pred_check
        %p585 = pneg %p48
      $region86: #{gcl4e_forward.1} parent=83 // pred_check_branch
        %587 = sbr.rel (%p585) target = $region88
      $region87: #{gcl4e_forward.1} parent=83 // pred_region
        %p588 = scmp.lt.s32.totalorder %s28, 3
        %s589 = scalar_select %p588, %s28, 3
        %s590 = smul.addr %s589, 8
        %s591 = scalar_lea.vmem %s0, %s590
      $region88: #{gcl4e_forward.1} parent=83 // pred_fallthru
        _
      // Predicated region
      $region89: #{gcl4e_forward.1} parent=83 // pred_check
        %p592 = pneg %p74
      $region90: #{gcl4e_forward.1} parent=83 // pred_check_branch
        %594 = sbr.rel (%p592) target = $region92
      $region91: #{gcl4e_forward.1} parent=83 // pred_region
        %p595 = scmp.lt.s32.totalorder %s28, 3
        %s596 = scalar_select %p595, %s28, 3
        %s597 = smul.addr %s596, 8
        %s598 = scalar_lea.vmem %s1, %s597
      $region92: #{gcl4e_forward.1} parent=83 // pred_fallthru
        _
    $region84: #{gcl4e_forward.1} parent=5 // pred_fallthru
      _
    %p599 = scmp.le.s32.totalorder 1, %s28
    %p600 = scmp.lt.s32.totalorder %s28, 5
    %p601 = pnand %p599, %p600
    %p602 = pneg %p601
    // Predicated region
    $region93: #{gcl4e_forward.1} parent=5 // pred_check
      _
    $region94: #{gcl4e_forward.1} parent=5 // pred_check_branch
      %604 = sbr.rel (%p601) target = $region96
    $region95: #{gcl4e_forward.1} parent=5 // pred_region
      %s605 = ssub.s32 %s28, 1
      %p606 = scmp.lt.s32.totalorder %s33, 3
      %s607 = scalar_select %p606, %s33, 3
      %s608 = smul.addr %s607, 8
      %s609 = scalar_lea.vmem %s0, %s608
      %p610 = pneg %p54
      %p611 = pneg %p51
      %p612 = scmp.lt.s32.totalorder %s33, 3
      %s613 = scalar_select %p612, %s33, 3
      %s614 = smul.addr %s613, 8
      %s615 = scalar_lea.vmem %s1, %s614
      %p616 = pneg %p80
      %p617 = pneg %p77
      %p618 = pneg %p101
      %p619 = pneg %p98
      %p620 = pneg %p122
      %p621 = pneg %p119
      %p622 = pneg %p143
      %p623 = pneg %p140
      %p624 = pneg %p164
      %p625 = pneg %p161
      %p626 = pneg %p185
      %p627 = pneg %p182
      %p628 = pneg %p206
      %p629 = pneg %p203
      %p630 = pneg %p227
      %p631 = pneg %p224
      %p632 = pneg %p248
      %p633 = pneg %p245
      %p634 = pneg %p269
      %p635 = pneg %p266
      %p636 = pneg %p290
      %p637 = pneg %p287
      %p638 = pneg %p311
      %p639 = pneg %p308
      %p640 = pneg %p332
      %p641 = pneg %p329
      %p642 = pneg %p353
      %p643 = pneg %p350
      %p644 = pneg %p374
      %p645 = pneg %p371
      %p646 = pneg %p395
      %p647 = pneg %p392
      %p648 = pneg %p416
      %p649 = pneg %p413
      %p650 = pneg %p437
      %p651 = pneg %p434
      %p652 = pneg %p463
      %p653 = pneg %p460
      %p654 = scmp.lt.s32.totalorder %s33, 3
      %s655 = scalar_select %p654, %s33, 3
      %s656 = smul.addr %s655, 8
      %s657 = scalar_lea.vmem %s19, %s656
      %p658 = pneg %p489
      %p659 = pneg %p486
      %p660 = scmp.lt.s32.totalorder %s33, 3
      %s661 = scalar_select %p660, %s33, 3
      %s662 = smul.addr %s661, 8
      %s663 = scalar_lea.vmem %s20, %s662
      %p664 = pneg %p515
      %p665 = pneg %p512
      %p666 = scmp.lt.s32.totalorder %s33, 3
      %s667 = scalar_select %p666, %s33, 3
      %s668 = smul.addr %s667, 8
      %s669 = scalar_lea.vmem %s21, %s668
      %p670 = scmp.lt.s32.totalorder %s33, 3
      %s671 = scalar_select %p670, %s33, 3
      %s672 = smul.addr %s671, 8
      %s673 = scalar_lea.vmem %s0, %s672
      %p674 = scmp.lt.s32.totalorder %s33, 3
      %s675 = scalar_select %p674, %s33, 3
      %s676 = smul.addr %s675, 8
      %s677 = scalar_lea.vmem %s1, %s676
      %p678 = scmp.lt.s32.totalorder %s33, 3
      %s679 = scalar_select %p678, %s33, 3
      %s680 = smul.addr %s679, 8
      %s681 = scalar_lea.vmem %s19, %s680
      %p682 = scmp.lt.s32.totalorder %s33, 3
      %s683 = scalar_select %p682, %s33, 3
      %s684 = smul.addr %s683, 8
      %s685 = scalar_lea.vmem %s20, %s684
      %p686 = scmp.lt.s32.totalorder %s33, 3
      %s687 = scalar_select %p686, %s33, 3
      %s688 = smul.addr %s687, 8
      %s689 = scalar_lea.vmem %s21, %s688
      %v691 = vld [vmem:[%s2] sm:$0x1]
      %v692 = vld [vmem:[%s3] sm:$0x1]
      %v693 = vlaneseq
      %v694 = vand.u32 %v693, 127
      %v695 = vlaneseq
      %v696 = vshrl.u32 %v695, 7
      %v697 = vsub.s32 0, %v696
      %v698 = vrot.slane %v691, %v697
      %700 = vbcast.lane.b32.xlu0 %v698, 256
      %v701 = vpop.permute.xlu0 %700
      %s703 = sor.u32 256, 8
      %704 = vbcast.lane.b32.xlu0 %v698, %s703
      %v705 = vpop.permute.xlu0 %704
      %vm706 = vcmp.eq.s32.totalorder %v694, %v701
      %vm707 = vcmp.eq.s32.totalorder %v694, %v705
      %v708 = vsel %vm706, 1, 0
      %v709 = vsel %vm707, 1, 0
      %v710 = vcvt.s32.f32 %v708
      %v711 = vcvt.s32.f32 %v709
      %v712 = vlaneseq
      %v713 = vshrl.u32 %v712, 7
      %v714 = vsub.s32 0, %v713
      %v715 = vrot.slane %v692, %v714
      %717 = vbcast.lane.b32.xlu0 %v715, 256
      %v718 = vpop.permute.xlu0 %717
      %s720 = sor.u32 256, 8
      %721 = vbcast.lane.b32.xlu0 %v715, %s720
      %v722 = vpop.permute.xlu0 %721
      %vm723 = vcmp.eq.s32.totalorder %v694, %v718
      %vm724 = vcmp.eq.s32.totalorder %v694, %v722
      %v725 = vsel %vm723, 1, 0
      %v726 = vsel %vm724, 1, 0
      %v727 = vcvt.s32.f32 %v725
      %v728 = vcvt.s32.f32 %v726
      %v729 = vlaneseq
      %v730 = vshrl.u32 %v729, 7
      %vm731 = vcmp.eq.s32.totalorder %v730, %v698
      %v732 = vsel %vm731, 1, 0
      %v733 = vcvt.s32.f32 %v732
      %vm734 = vcmask 130048
      %v735 = vsel %vm734, %v733, 0.0
      %736 = vadd.xlane.f32.xlu0 %v735
      %v737 = vpop.xlane.xlu0 %736
      %v738 = vmax.f32 %v737, 1.0
      %v739 = vld [vmem:[%s673] sm:$0xff]
      %v740 = vld [vmem:[%s677] sm:$0xff]
      %742 = vrot.lane.b32.xlu0 %v740, 8
      %v743 = vpop.permute.xlu0 %742
      %vm745 = vcmask 64512
      %v746 = vsel %vm745, %v739, %v743
      %v748 = vsel %vm745, %v710, 0
      %v751 = vsel %vm745, %v711, 0
      %753 = vmatprep.subr.mxu0 0.0
      %754 = vmatpush1.msra.mxu0 0.0
      %755 = vmatprep.subr.mxu0 0.0
      %756 = vmatpush1.msra.mxu0 0.0
      %757 = vmatprep.subr.mxu0 0.0
      %758 = vmatpush1.msra.mxu0 0.0
      %759 = vmatprep.subr.mxu0 0.0
      %760 = vmatpush1.msra.mxu0 0.0
      %761 = vmatprep.subr.mxu0 0.0
      %762 = vmatpush1.msra.mxu0 0.0
      %763 = vmatprep.subr.mxu0 0.0
      %764 = vmatpush1.msra.mxu0 0.0
      %765 = vmatprep.subr.mxu0 0.0
      %766 = vmatpush1.msra.mxu0 0.0
      %767 = vmatprep.subr.mxu0 0.0
      %768 = vmatpush1.msra.mxu0 0.0
      %769 = vmatprep.subr.mxu0 0.0
      %770 = vmatpush1.msra.mxu0 0.0
      %771 = vmatprep.subr.mxu0 0.0
      %772 = vmatpush1.msra.mxu0 0.0
      %773 = vmatprep.subr.mxu0 0.0
      %774 = vmatpush1.msra.mxu0 0.0
      %775 = vmatprep.subr.mxu0 0.0
      %776 = vmatpush1.msra.mxu0 0.0
      %777 = vmatprep.subr.mxu0 0.0
      %778 = vmatpush1.msra.mxu0 0.0
      %779 = vmatprep.subr.mxu0 0.0
      %780 = vmatpush1.msra.mxu0 0.0
      %781 = vmatprep.subr.mxu0 0.0
      %782 = vmatpush1.msra.mxu0 0.0
      %783 = vmatprep.subr.mxu0 0.0
      %v784 = vand.u32 %v746, 4294901760
      %785 = vmatpush1.msra.mxu0 %v784
      %786 = vmatprep.subr.mxu0 0.0
      %787 = vmatpush2.msra.mxu0 0.0
      %788 = vmatprep.subr.mxu0 0.0
      %789 = vmatpush2.msra.mxu0 0.0
      %790 = vmatprep.subr.mxu0 0.0
      %791 = vmatpush2.msra.mxu0 0.0
      %792 = vmatprep.subr.mxu0 0.0
      %793 = vmatpush2.msra.mxu0 0.0
      %794 = vmatprep.subr.mxu0 0.0
      %795 = vmatpush2.msra.mxu0 0.0
      %796 = vmatprep.subr.mxu0 0.0
      %797 = vmatpush2.msra.mxu0 0.0
      %798 = vmatprep.subr.mxu0 0.0
      %799 = vmatpush2.msra.mxu0 0.0
      %800 = vmatprep.subr.mxu0 0.0
      %801 = vmatpush2.msra.mxu0 0.0
      %802 = vmatprep.subr.mxu0 0.0
      %803 = vmatpush2.msra.mxu0 0.0
      %804 = vmatprep.subr.mxu0 0.0
      %805 = vmatpush2.msra.mxu0 0.0
      %806 = vmatprep.subr.mxu0 0.0
      %807 = vmatpush2.msra.mxu0 0.0
      %808 = vmatprep.subr.mxu0 0.0
      %809 = vmatpush2.msra.mxu0 0.0
      %810 = vmatprep.subr.mxu0 0.0
      %811 = vmatpush2.msra.mxu0 0.0
      %812 = vmatprep.subr.mxu0 0.0
      %813 = vmatpush2.msra.mxu0 0.0
      %814 = vmatprep.subr.mxu0 0.0
      %815 = vmatpush2.msra.mxu0 0.0
      %816 = vmatprep.subr.mxu0 0.0
      %817 = vmatpush2.msra.mxu0 0.0
      %818 = vmatprep.mubr.f32.mxu0 0.0
      %v819 = vand.u32 %v748, 4294901760
      %v820 = vsub.f32 %v748, %v819
      %v821 = vand.u32 %v820, 4294901760
      %v822 = vsub.f32 %v820, %v821
      %v823 = vand.u32 %v822, 4294901760
      %824 = vmatmul.mubr.f32.gmra.mxu0 %v823
      %v825 = vpop.f32.mrf.mxu0
      %v826 = vadd.f32 0.0, %v825
      %v827 = vpop.f32.mrf.mxu0
      %828 = vmatprep.mubr.f32.mxu0 0.0
      %v829 = vand.u32 %v751, 4294901760
      %v830 = vsub.f32 %v751, %v829
      %v831 = vand.u32 %v830, 4294901760
      %v832 = vsub.f32 %v830, %v831
      %v833 = vand.u32 %v832, 4294901760
      %834 = vmatmul.mubr.f32.gmra.mxu0 %v833
      %v835 = vpop.f32.mrf.mxu0
      %v836 = vadd.f32 0.0, %v835
      %v837 = vpop.f32.mrf.mxu0
      %838 = vdwg.mxu0
      %839 = vmatprep.subr.mxu0 0.0
      %840 = vmatpush1.msra.mxu0 0.0
      %841 = vmatprep.subr.mxu0 0.0
      %842 = vmatpush1.msra.mxu0 0.0
      %843 = vmatprep.subr.mxu0 0.0
      %844 = vmatpush1.msra.mxu0 0.0
      %845 = vmatprep.subr.mxu0 0.0
      %846 = vmatpush1.msra.mxu0 0.0
      %847 = vmatprep.subr.mxu0 0.0
      %848 = vmatpush1.msra.mxu0 0.0
      %849 = vmatprep.subr.mxu0 0.0
      %850 = vmatpush1.msra.mxu0 0.0
      %851 = vmatprep.subr.mxu0 0.0
      %852 = vmatpush1.msra.mxu0 0.0
      %853 = vmatprep.subr.mxu0 0.0
      %854 = vmatpush1.msra.mxu0 0.0
      %855 = vmatprep.subr.mxu0 0.0
      %856 = vmatpush1.msra.mxu0 0.0
      %857 = vmatprep.subr.mxu0 0.0
      %858 = vmatpush1.msra.mxu0 0.0
      %859 = vmatprep.subr.mxu0 0.0
      %860 = vmatpush1.msra.mxu0 0.0
      %861 = vmatprep.subr.mxu0 0.0
      %862 = vmatpush1.msra.mxu0 0.0
      %863 = vmatprep.subr.mxu0 0.0
      %864 = vmatpush1.msra.mxu0 0.0
      %865 = vmatprep.subr.mxu0 0.0
      %866 = vmatpush1.msra.mxu0 0.0
      %867 = vmatprep.subr.mxu0 0.0
      %868 = vmatpush1.msra.mxu0 0.0
      %869 = vmatprep.subr.mxu0 0.0
      %v870 = vand.u32 %v746, 4294901760
      %v871 = vsub.f32 %v746, %v870
      %v872 = vand.u32 %v871, 4294901760
      %v873 = vsub.f32 %v871, %v872
      %v874 = vand.u32 %v873, 4294901760
      %875 = vmatpush1.msra.mxu0 %v874
      %876 = vmatprep.subr.mxu0 0.0
      %877 = vmatpush2.msra.mxu0 0.0
      %878 = vmatprep.subr.mxu0 0.0
      %879 = vmatpush2.msra.mxu0 0.0
      %880 = vmatprep.subr.mxu0 0.0
      %881 = vmatpush2.msra.mxu0 0.0
      %882 = vmatprep.subr.mxu0 0.0
      %883 = vmatpush2.msra.mxu0 0.0
      %884 = vmatprep.subr.mxu0 0.0
      %885 = vmatpush2.msra.mxu0 0.0
      %886 = vmatprep.subr.mxu0 0.0
      %887 = vmatpush2.msra.mxu0 0.0
      %888 = vmatprep.subr.mxu0 0.0
      %889 = vmatpush2.msra.mxu0 0.0
      %890 = vmatprep.subr.mxu0 0.0
      %891 = vmatpush2.msra.mxu0 0.0
      %892 = vmatprep.subr.mxu0 0.0
      %893 = vmatpush2.msra.mxu0 0.0
      %894 = vmatprep.subr.mxu0 0.0
      %895 = vmatpush2.msra.mxu0 0.0
      %896 = vmatprep.subr.mxu0 0.0
      %897 = vmatpush2.msra.mxu0 0.0
      %898 = vmatprep.subr.mxu0 0.0
      %899 = vmatpush2.msra.mxu0 0.0
      %900 = vmatprep.subr.mxu0 0.0
      %901 = vmatpush2.msra.mxu0 0.0
      %902 = vmatprep.subr.mxu0 0.0
      %903 = vmatpush2.msra.mxu0 0.0
      %904 = vmatprep.subr.mxu0 0.0
      %905 = vmatpush2.msra.mxu0 0.0
      %906 = vmatprep.subr.mxu0 0.0
      %907 = vmatpush2.msra.mxu0 0.0
      %908 = vmatprep.mubr.f32.mxu0 0.0
      %v909 = vand.u32 %v748, 4294901760
      %910 = vmatmul.mubr.f32.gmra.mxu0 %v909
      %v911 = vpop.f32.mrf.mxu0
      %v912 = vadd.f32 %v826, %v911
      %v913 = vpop.f32.mrf.mxu0
      %914 = vmatprep.mubr.f32.mxu0 0.0
      %v915 = vand.u32 %v751, 4294901760
      %916 = vmatmul.mubr.f32.gmra.mxu0 %v915
      %v917 = vpop.f32.mrf.mxu0
      %v918 = vadd.f32 %v836, %v917
      %v919 = vpop.f32.mrf.mxu0
      %920 = vdwg.mxu0
      %921 = vmatprep.subr.mxu0 0.0
      %922 = vmatpush1.msra.mxu0 0.0
      %923 = vmatprep.subr.mxu0 0.0
      %924 = vmatpush1.msra.mxu0 0.0
      %925 = vmatprep.subr.mxu0 0.0
      %926 = vmatpush1.msra.mxu0 0.0
      %927 = vmatprep.subr.mxu0 0.0
      %928 = vmatpush1.msra.mxu0 0.0
      %929 = vmatprep.subr.mxu0 0.0
      %930 = vmatpush1.msra.mxu0 0.0
      %931 = vmatprep.subr.mxu0 0.0
      %932 = vmatpush1.msra.mxu0 0.0
      %933 = vmatprep.subr.mxu0 0.0
      %934 = vmatpush1.msra.mxu0 0.0
      %935 = vmatprep.subr.mxu0 0.0
      %936 = vmatpush1.msra.mxu0 0.0
      %937 = vmatprep.subr.mxu0 0.0
      %938 = vmatpush1.msra.mxu0 0.0
      %939 = vmatprep.subr.mxu0 0.0
      %940 = vmatpush1.msra.mxu0 0.0
      %941 = vmatprep.subr.mxu0 0.0
      %942 = vmatpush1.msra.mxu0 0.0
      %943 = vmatprep.subr.mxu0 0.0
      %944 = vmatpush1.msra.mxu0 0.0
      %945 = vmatprep.subr.mxu0 0.0
      %946 = vmatpush1.msra.mxu0 0.0
      %947 = vmatprep.subr.mxu0 0.0
      %948 = vmatpush1.msra.mxu0 0.0
      %949 = vmatprep.subr.mxu0 0.0
      %950 = vmatpush1.msra.mxu0 0.0
      %951 = vmatprep.subr.mxu0 0.0
      %v952 = vand.u32 %v746, 4294901760
      %v953 = vsub.f32 %v746, %v952
      %954 = vmatpush1.msra.mxu0 %v953
      %955 = vmatprep.subr.mxu0 0.0
      %956 = vmatpush2.msra.mxu0 0.0
      %957 = vmatprep.subr.mxu0 0.0
      %958 = vmatpush2.msra.mxu0 0.0
      %959 = vmatprep.subr.mxu0 0.0
      %960 = vmatpush2.msra.mxu0 0.0
      %961 = vmatprep.subr.mxu0 0.0
      %962 = vmatpush2.msra.mxu0 0.0
      %963 = vmatprep.subr.mxu0 0.0
      %964 = vmatpush2.msra.mxu0 0.0
      %965 = vmatprep.subr.mxu0 0.0
      %966 = vmatpush2.msra.mxu0 0.0
      %967 = vmatprep.subr.mxu0 0.0
      %968 = vmatpush2.msra.mxu0 0.0
      %969 = vmatprep.subr.mxu0 0.0
      %970 = vmatpush2.msra.mxu0 0.0
      %971 = vmatprep.subr.mxu0 0.0
      %972 = vmatpush2.msra.mxu0 0.0
      %973 = vmatprep.subr.mxu0 0.0
      %974 = vmatpush2.msra.mxu0 0.0
      %975 = vmatprep.subr.mxu0 0.0
      %976 = vmatpush2.msra.mxu0 0.0
      %977 = vmatprep.subr.mxu0 0.0
      %978 = vmatpush2.msra.mxu0 0.0
      %979 = vmatprep.subr.mxu0 0.0
      %980 = vmatpush2.msra.mxu0 0.0
      %981 = vmatprep.subr.mxu0 0.0
      %982 = vmatpush2.msra.mxu0 0.0
      %983 = vmatprep.subr.mxu0 0.0
      %984 = vmatpush2.msra.mxu0 0.0
      %985 = vmatprep.subr.mxu0 0.0
      %986 = vmatpush2.msra.mxu0 0.0
      %987 = vmatprep.mubr.f32.mxu0 0.0
      %v988 = vand.u32 %v748, 4294901760
      %v989 = vsub.f32 %v748, %v988
      %990 = vmatmul.mubr.f32.gmra.mxu0 %v989
      %v991 = vpop.f32.mrf.mxu0
      %v992 = vadd.f32 %v912, %v991
      %v993 = vpop.f32.mrf.mxu0
      %994 = vmatprep.mubr.f32.mxu0 0.0
      %v995 = vand.u32 %v751, 4294901760
      %v996 = vsub.f32 %v751, %v995
      %997 = vmatmul.mubr.f32.gmra.mxu0 %v996
      %v998 = vpop.f32.mrf.mxu0
      %v999 = vadd.f32 %v918, %v998
      %v1000 = vpop.f32.mrf.mxu0
      %1001 = vdwg.mxu0
      %1002 = vmatprep.subr.mxu0 0.0
      %1003 = vmatpush1.msra.mxu0 0.0
      %1004 = vmatprep.subr.mxu0 0.0
      %1005 = vmatpush1.msra.mxu0 0.0
      %1006 = vmatprep.subr.mxu0 0.0
      %1007 = vmatpush1.msra.mxu0 0.0
      %1008 = vmatprep.subr.mxu0 0.0
      %1009 = vmatpush1.msra.mxu0 0.0
      %1010 = vmatprep.subr.mxu0 0.0
      %1011 = vmatpush1.msra.mxu0 0.0
      %1012 = vmatprep.subr.mxu0 0.0
      %1013 = vmatpush1.msra.mxu0 0.0
      %1014 = vmatprep.subr.mxu0 0.0
      %1015 = vmatpush1.msra.mxu0 0.0
      %1016 = vmatprep.subr.mxu0 0.0
      %1017 = vmatpush1.msra.mxu0 0.0
      %1018 = vmatprep.subr.mxu0 0.0
      %1019 = vmatpush1.msra.mxu0 0.0
      %1020 = vmatprep.subr.mxu0 0.0
      %1021 = vmatpush1.msra.mxu0 0.0
      %1022 = vmatprep.subr.mxu0 0.0
      %1023 = vmatpush1.msra.mxu0 0.0
      %1024 = vmatprep.subr.mxu0 0.0
      %1025 = vmatpush1.msra.mxu0 0.0
      %1026 = vmatprep.subr.mxu0 0.0
      %1027 = vmatpush1.msra.mxu0 0.0
      %1028 = vmatprep.subr.mxu0 0.0
      %1029 = vmatpush1.msra.mxu0 0.0
      %1030 = vmatprep.subr.mxu0 0.0
      %1031 = vmatpush1.msra.mxu0 0.0
      %1032 = vmatprep.subr.mxu0 0.0
      %v1033 = vand.u32 %v746, 4294901760
      %1034 = vmatpush1.msra.mxu0 %v1033
      %1035 = vmatprep.subr.mxu0 0.0
      %1036 = vmatpush2.msra.mxu0 0.0
      %1037 = vmatprep.subr.mxu0 0.0
      %1038 = vmatpush2.msra.mxu0 0.0
      %1039 = vmatprep.subr.mxu0 0.0
      %1040 = vmatpush2.msra.mxu0 0.0
      %1041 = vmatprep.subr.mxu0 0.0
      %1042 = vmatpush2.msra.mxu0 0.0
      %1043 = vmatprep.subr.mxu0 0.0
      %1044 = vmatpush2.msra.mxu0 0.0
      %1045 = vmatprep.subr.mxu0 0.0
      %1046 = vmatpush2.msra.mxu0 0.0
      %1047 = vmatprep.subr.mxu0 0.0
      %1048 = vmatpush2.msra.mxu0 0.0
      %1049 = vmatprep.subr.mxu0 0.0
      %1050 = vmatpush2.msra.mxu0 0.0
      %1051 = vmatprep.subr.mxu0 0.0
      %1052 = vmatpush2.msra.mxu0 0.0
      %1053 = vmatprep.subr.mxu0 0.0
      %1054 = vmatpush2.msra.mxu0 0.0
      %1055 = vmatprep.subr.mxu0 0.0
      %1056 = vmatpush2.msra.mxu0 0.0
      %1057 = vmatprep.subr.mxu0 0.0
      %1058 = vmatpush2.msra.mxu0 0.0
      %1059 = vmatprep.subr.mxu0 0.0
      %1060 = vmatpush2.msra.mxu0 0.0
      %1061 = vmatprep.subr.mxu0 0.0
      %1062 = vmatpush2.msra.mxu0 0.0
      %1063 = vmatprep.subr.mxu0 0.0
      %1064 = vmatpush2.msra.mxu0 0.0
      %1065 = vmatprep.subr.mxu0 0.0
      %1066 = vmatpush2.msra.mxu0 0.0
      %1067 = vmatprep.mubr.f32.mxu0 0.0
      %v1068 = vand.u32 %v748, 4294901760
      %v1069 = vsub.f32 %v748, %v1068
      %v1070 = vand.u32 %v1069, 4294901760
      %1071 = vmatmul.mubr.f32.gmra.mxu0 %v1070
      %v1072 = vpop.f32.mrf.mxu0
      %v1073 = vadd.f32 %v992, %v1072
      %v1074 = vpop.f32.mrf.mxu0
      %1075 = vmatprep.mubr.f32.mxu0 0.0
      %v1076 = vand.u32 %v751, 4294901760
      %v1077 = vsub.f32 %v751, %v1076
      %v1078 = vand.u32 %v1077, 4294901760
      %1079 = vmatmul.mubr.f32.gmra.mxu0 %v1078
      %v1080 = vpop.f32.mrf.mxu0
      %v1081 = vadd.f32 %v999, %v1080
      %v1082 = vpop.f32.mrf.mxu0
      %1083 = vdwg.mxu0
      %1084 = vmatprep.subr.mxu0 0.0
      %1085 = vmatpush1.msra.mxu0 0.0
      %1086 = vmatprep.subr.mxu0 0.0
      %1087 = vmatpush1.msra.mxu0 0.0
      %1088 = vmatprep.subr.mxu0 0.0
      %1089 = vmatpush1.msra.mxu0 0.0
      %1090 = vmatprep.subr.mxu0 0.0
      %1091 = vmatpush1.msra.mxu0 0.0
      %1092 = vmatprep.subr.mxu0 0.0
      %1093 = vmatpush1.msra.mxu0 0.0
      %1094 = vmatprep.subr.mxu0 0.0
      %1095 = vmatpush1.msra.mxu0 0.0
      %1096 = vmatprep.subr.mxu0 0.0
      %1097 = vmatpush1.msra.mxu0 0.0
      %1098 = vmatprep.subr.mxu0 0.0
      %1099 = vmatpush1.msra.mxu0 0.0
      %1100 = vmatprep.subr.mxu0 0.0
      %1101 = vmatpush1.msra.mxu0 0.0
      %1102 = vmatprep.subr.mxu0 0.0
      %1103 = vmatpush1.msra.mxu0 0.0
      %1104 = vmatprep.subr.mxu0 0.0
      %1105 = vmatpush1.msra.mxu0 0.0
      %1106 = vmatprep.subr.mxu0 0.0
      %1107 = vmatpush1.msra.mxu0 0.0
      %1108 = vmatprep.subr.mxu0 0.0
      %1109 = vmatpush1.msra.mxu0 0.0
      %1110 = vmatprep.subr.mxu0 0.0
      %1111 = vmatpush1.msra.mxu0 0.0
      %1112 = vmatprep.subr.mxu0 0.0
      %1113 = vmatpush1.msra.mxu0 0.0
      %1114 = vmatprep.subr.mxu0 0.0
      %v1115 = vand.u32 %v746, 4294901760
      %v1116 = vsub.f32 %v746, %v1115
      %v1117 = vand.u32 %v1116, 4294901760
      %1118 = vmatpush1.msra.mxu0 %v1117
      %1119 = vmatprep.subr.mxu0 0.0
      %1120 = vmatpush2.msra.mxu0 0.0
      %1121 = vmatprep.subr.mxu0 0.0
      %1122 = vmatpush2.msra.mxu0 0.0
      %1123 = vmatprep.subr.mxu0 0.0
      %1124 = vmatpush2.msra.mxu0 0.0
      %1125 = vmatprep.subr.mxu0 0.0
      %1126 = vmatpush2.msra.mxu0 0.0
      %1127 = vmatprep.subr.mxu0 0.0
      %1128 = vmatpush2.msra.mxu0 0.0
      %1129 = vmatprep.subr.mxu0 0.0
      %1130 = vmatpush2.msra.mxu0 0.0
      %1131 = vmatprep.subr.mxu0 0.0
      %1132 = vmatpush2.msra.mxu0 0.0
      %1133 = vmatprep.subr.mxu0 0.0
      %1134 = vmatpush2.msra.mxu0 0.0
      %1135 = vmatprep.subr.mxu0 0.0
      %1136 = vmatpush2.msra.mxu0 0.0
      %1137 = vmatprep.subr.mxu0 0.0
      %1138 = vmatpush2.msra.mxu0 0.0
      %1139 = vmatprep.subr.mxu0 0.0
      %1140 = vmatpush2.msra.mxu0 0.0
      %1141 = vmatprep.subr.mxu0 0.0
      %1142 = vmatpush2.msra.mxu0 0.0
      %1143 = vmatprep.subr.mxu0 0.0
      %1144 = vmatpush2.msra.mxu0 0.0
      %1145 = vmatprep.subr.mxu0 0.0
      %1146 = vmatpush2.msra.mxu0 0.0
      %1147 = vmatprep.subr.mxu0 0.0
      %1148 = vmatpush2.msra.mxu0 0.0
      %1149 = vmatprep.subr.mxu0 0.0
      %1150 = vmatpush2.msra.mxu0 0.0
      %1151 = vmatprep.mubr.f32.mxu0 0.0
      %v1152 = vand.u32 %v748, 4294901760
      %1153 = vmatmul.mubr.f32.gmra.mxu0 %v1152
      %v1154 = vpop.f32.mrf.mxu0
      %v1155 = vadd.f32 %v1073, %v1154
      %v1156 = vpop.f32.mrf.mxu0
      %1157 = vmatprep.mubr.f32.mxu0 0.0
      %v1158 = vand.u32 %v751, 4294901760
      %1159 = vmatmul.mubr.f32.gmra.mxu0 %v1158
      %v1160 = vpop.f32.mrf.mxu0
      %v1161 = vadd.f32 %v1081, %v1160
      %v1162 = vpop.f32.mrf.mxu0
      %1163 = vdwg.mxu0
      %1164 = vmatprep.subr.mxu0 0.0
      %1165 = vmatpush1.msra.mxu0 0.0
      %1166 = vmatprep.subr.mxu0 0.0
      %1167 = vmatpush1.msra.mxu0 0.0
      %1168 = vmatprep.subr.mxu0 0.0
      %1169 = vmatpush1.msra.mxu0 0.0
      %1170 = vmatprep.subr.mxu0 0.0
      %1171 = vmatpush1.msra.mxu0 0.0
      %1172 = vmatprep.subr.mxu0 0.0
      %1173 = vmatpush1.msra.mxu0 0.0
      %1174 = vmatprep.subr.mxu0 0.0
      %1175 = vmatpush1.msra.mxu0 0.0
      %1176 = vmatprep.subr.mxu0 0.0
      %1177 = vmatpush1.msra.mxu0 0.0
      %1178 = vmatprep.subr.mxu0 0.0
      %1179 = vmatpush1.msra.mxu0 0.0
      %1180 = vmatprep.subr.mxu0 0.0
      %1181 = vmatpush1.msra.mxu0 0.0
      %1182 = vmatprep.subr.mxu0 0.0
      %1183 = vmatpush1.msra.mxu0 0.0
      %1184 = vmatprep.subr.mxu0 0.0
      %1185 = vmatpush1.msra.mxu0 0.0
      %1186 = vmatprep.subr.mxu0 0.0
      %1187 = vmatpush1.msra.mxu0 0.0
      %1188 = vmatprep.subr.mxu0 0.0
      %1189 = vmatpush1.msra.mxu0 0.0
      %1190 = vmatprep.subr.mxu0 0.0
      %1191 = vmatpush1.msra.mxu0 0.0
      %1192 = vmatprep.subr.mxu0 0.0
      %1193 = vmatpush1.msra.mxu0 0.0
      %1194 = vmatprep.subr.mxu0 0.0
      %v1195 = vand.u32 %v746, 4294901760
      %1196 = vmatpush1.msra.mxu0 %v1195
      %1197 = vmatprep.subr.mxu0 0.0
      %1198 = vmatpush2.msra.mxu0 0.0
      %1199 = vmatprep.subr.mxu0 0.0
      %1200 = vmatpush2.msra.mxu0 0.0
      %1201 = vmatprep.subr.mxu0 0.0
      %1202 = vmatpush2.msra.mxu0 0.0
      %1203 = vmatprep.subr.mxu0 0.0
      %1204 = vmatpush2.msra.mxu0 0.0
      %1205 = vmatprep.subr.mxu0 0.0
      %1206 = vmatpush2.msra.mxu0 0.0
      %1207 = vmatprep.subr.mxu0 0.0
      %1208 = vmatpush2.msra.mxu0 0.0
      %1209 = vmatprep.subr.mxu0 0.0
      %1210 = vmatpush2.msra.mxu0 0.0
      %1211 = vmatprep.subr.mxu0 0.0
      %1212 = vmatpush2.msra.mxu0 0.0
      %1213 = vmatprep.subr.mxu0 0.0
      %1214 = vmatpush2.msra.mxu0 0.0
      %1215 = vmatprep.subr.mxu0 0.0
      %1216 = vmatpush2.msra.mxu0 0.0
      %1217 = vmatprep.subr.mxu0 0.0
      %1218 = vmatpush2.msra.mxu0 0.0
      %1219 = vmatprep.subr.mxu0 0.0
      %1220 = vmatpush2.msra.mxu0 0.0
      %1221 = vmatprep.subr.mxu0 0.0
      %1222 = vmatpush2.msra.mxu0 0.0
      %1223 = vmatprep.subr.mxu0 0.0
      %1224 = vmatpush2.msra.mxu0 0.0
      %1225 = vmatprep.subr.mxu0 0.0
      %1226 = vmatpush2.msra.mxu0 0.0
      %1227 = vmatprep.subr.mxu0 0.0
      %1228 = vmatpush2.msra.mxu0 0.0
      %1229 = vmatprep.mubr.f32.mxu0 0.0
      %v1230 = vand.u32 %v748, 4294901760
      %1231 = vmatmul.mubr.f32.gmra.mxu0 %v1230
      %v1232 = vpop.f32.mrf.mxu0
      %v1233 = vadd.f32 %v1155, %v1232
      %v1234 = vpop.f32.mrf.mxu0
      %1235 = vmatprep.mubr.f32.mxu0 0.0
      %v1236 = vand.u32 %v751, 4294901760
      %1237 = vmatmul.mubr.f32.gmra.mxu0 %v1236
      %v1238 = vpop.f32.mrf.mxu0
      %v1239 = vadd.f32 %v1161, %v1238
      %v1240 = vpop.f32.mrf.mxu0
      %1241 = vdwg.mxu0
      %v1243 = vsel %vm745, %v727, 0
      %v1246 = vsel %vm745, %v728, 0
      %1248 = vmatprep.subr.mxu0 0.0
      %1249 = vmatpush1.msra.mxu0 0.0
      %1250 = vmatprep.subr.mxu0 0.0
      %1251 = vmatpush1.msra.mxu0 0.0
      %1252 = vmatprep.subr.mxu0 0.0
      %1253 = vmatpush1.msra.mxu0 0.0
      %1254 = vmatprep.subr.mxu0 0.0
      %1255 = vmatpush1.msra.mxu0 0.0
      %1256 = vmatprep.subr.mxu0 0.0
      %1257 = vmatpush1.msra.mxu0 0.0
      %1258 = vmatprep.subr.mxu0 0.0
      %1259 = vmatpush1.msra.mxu0 0.0
      %1260 = vmatprep.subr.mxu0 0.0
      %1261 = vmatpush1.msra.mxu0 0.0
      %1262 = vmatprep.subr.mxu0 0.0
      %1263 = vmatpush1.msra.mxu0 0.0
      %1264 = vmatprep.subr.mxu0 0.0
      %1265 = vmatpush1.msra.mxu0 0.0
      %1266 = vmatprep.subr.mxu0 0.0
      %1267 = vmatpush1.msra.mxu0 0.0
      %1268 = vmatprep.subr.mxu0 0.0
      %1269 = vmatpush1.msra.mxu0 0.0
      %1270 = vmatprep.subr.mxu0 0.0
      %1271 = vmatpush1.msra.mxu0 0.0
      %1272 = vmatprep.subr.mxu0 0.0
      %1273 = vmatpush1.msra.mxu0 0.0
      %1274 = vmatprep.subr.mxu0 0.0
      %1275 = vmatpush1.msra.mxu0 0.0
      %1276 = vmatprep.subr.mxu0 0.0
      %1277 = vmatpush1.msra.mxu0 0.0
      %1278 = vmatprep.subr.mxu0 0.0
      %v1279 = vand.u32 %v746, 4294901760
      %1280 = vmatpush1.msra.mxu0 %v1279
      %1281 = vmatprep.subr.mxu0 0.0
      %1282 = vmatpush2.msra.mxu0 0.0
      %1283 = vmatprep.subr.mxu0 0.0
      %1284 = vmatpush2.msra.mxu0 0.0
      %1285 = vmatprep.subr.mxu0 0.0
      %1286 = vmatpush2.msra.mxu0 0.0
      %1287 = vmatprep.subr.mxu0 0.0
      %1288 = vmatpush2.msra.mxu0 0.0
      %1289 = vmatprep.subr.mxu0 0.0
      %1290 = vmatpush2.msra.mxu0 0.0
      %1291 = vmatprep.subr.mxu0 0.0
      %1292 = vmatpush2.msra.mxu0 0.0
      %1293 = vmatprep.subr.mxu0 0.0
      %1294 = vmatpush2.msra.mxu0 0.0
      %1295 = vmatprep.subr.mxu0 0.0
      %1296 = vmatpush2.msra.mxu0 0.0
      %1297 = vmatprep.subr.mxu0 0.0
      %1298 = vmatpush2.msra.mxu0 0.0
      %1299 = vmatprep.subr.mxu0 0.0
      %1300 = vmatpush2.msra.mxu0 0.0
      %1301 = vmatprep.subr.mxu0 0.0
      %1302 = vmatpush2.msra.mxu0 0.0
      %1303 = vmatprep.subr.mxu0 0.0
      %1304 = vmatpush2.msra.mxu0 0.0
      %1305 = vmatprep.subr.mxu0 0.0
      %1306 = vmatpush2.msra.mxu0 0.0
      %1307 = vmatprep.subr.mxu0 0.0
      %1308 = vmatpush2.msra.mxu0 0.0
      %1309 = vmatprep.subr.mxu0 0.0
      %1310 = vmatpush2.msra.mxu0 0.0
      %1311 = vmatprep.subr.mxu0 0.0
      %1312 = vmatpush2.msra.mxu0 0.0
      %1313 = vmatprep.mubr.f32.mxu0 0.0
      %v1314 = vand.u32 %v1243, 4294901760
      %v1315 = vsub.f32 %v1243, %v1314
      %v1316 = vand.u32 %v1315, 4294901760
      %v1317 = vsub.f32 %v1315, %v1316
      %v1318 = vand.u32 %v1317, 4294901760
      %1319 = vmatmul.mubr.f32.gmra.mxu0 %v1318
      %v1320 = vpop.f32.mrf.mxu0
      %v1321 = vadd.f32 0.0, %v1320
      %v1322 = vpop.f32.mrf.mxu0
      %1323 = vmatprep.mubr.f32.mxu0 0.0
      %v1324 = vand.u32 %v1246, 4294901760
      %v1325 = vsub.f32 %v1246, %v1324
      %v1326 = vand.u32 %v1325, 4294901760
      %v1327 = vsub.f32 %v1325, %v1326
      %v1328 = vand.u32 %v1327, 4294901760
      %1329 = vmatmul.mubr.f32.gmra.mxu0 %v1328
      %v1330 = vpop.f32.mrf.mxu0
      %v1331 = vadd.f32 0.0, %v1330
      %v1332 = vpop.f32.mrf.mxu0
      %1333 = vdwg.mxu0
      %1334 = vmatprep.subr.mxu0 0.0
      %1335 = vmatpush1.msra.mxu0 0.0
      %1336 = vmatprep.subr.mxu0 0.0
      %1337 = vmatpush1.msra.mxu0 0.0
      %1338 = vmatprep.subr.mxu0 0.0
      %1339 = vmatpush1.msra.mxu0 0.0
      %1340 = vmatprep.subr.mxu0 0.0
      %1341 = vmatpush1.msra.mxu0 0.0
      %1342 = vmatprep.subr.mxu0 0.0
      %1343 = vmatpush1.msra.mxu0 0.0
      %1344 = vmatprep.subr.mxu0 0.0
      %1345 = vmatpush1.msra.mxu0 0.0
      %1346 = vmatprep.subr.mxu0 0.0
      %1347 = vmatpush1.msra.mxu0 0.0
      %1348 = vmatprep.subr.mxu0 0.0
      %1349 = vmatpush1.msra.mxu0 0.0
      %1350 = vmatprep.subr.mxu0 0.0
      %1351 = vmatpush1.msra.mxu0 0.0
      %1352 = vmatprep.subr.mxu0 0.0
      %1353 = vmatpush1.msra.mxu0 0.0
      %1354 = vmatprep.subr.mxu0 0.0
      %1355 = vmatpush1.msra.mxu0 0.0
      %1356 = vmatprep.subr.mxu0 0.0
      %1357 = vmatpush1.msra.mxu0 0.0
      %1358 = vmatprep.subr.mxu0 0.0
      %1359 = vmatpush1.msra.mxu0 0.0
      %1360 = vmatprep.subr.mxu0 0.0
      %1361 = vmatpush1.msra.mxu0 0.0
      %1362 = vmatprep.subr.mxu0 0.0
      %1363 = vmatpush1.msra.mxu0 0.0
      %1364 = vmatprep.subr.mxu0 0.0
      %v1365 = vand.u32 %v746, 4294901760
      %v1366 = vsub.f32 %v746, %v1365
      %v1367 = vand.u32 %v1366, 4294901760
      %v1368 = vsub.f32 %v1366, %v1367
      %v1369 = vand.u32 %v1368, 4294901760
      %1370 = vmatpush1.msra.mxu0 %v1369
      %1371 = vmatprep.subr.mxu0 0.0
      %1372 = vmatpush2.msra.mxu0 0.0
      %1373 = vmatprep.subr.mxu0 0.0
      %1374 = vmatpush2.msra.mxu0 0.0
      %1375 = vmatprep.subr.mxu0 0.0
      %1376 = vmatpush2.msra.mxu0 0.0
      %1377 = vmatprep.subr.mxu0 0.0
      %1378 = vmatpush2.msra.mxu0 0.0
      %1379 = vmatprep.subr.mxu0 0.0
      %1380 = vmatpush2.msra.mxu0 0.0
      %1381 = vmatprep.subr.mxu0 0.0
      %1382 = vmatpush2.msra.mxu0 0.0
      %1383 = vmatprep.subr.mxu0 0.0
      %1384 = vmatpush2.msra.mxu0 0.0
      %1385 = vmatprep.subr.mxu0 0.0
      %1386 = vmatpush2.msra.mxu0 0.0
      %1387 = vmatprep.subr.mxu0 0.0
      %1388 = vmatpush2.msra.mxu0 0.0
      %1389 = vmatprep.subr.mxu0 0.0
      %1390 = vmatpush2.msra.mxu0 0.0
      %1391 = vmatprep.subr.mxu0 0.0
      %1392 = vmatpush2.msra.mxu0 0.0
      %1393 = vmatprep.subr.mxu0 0.0
      %1394 = vmatpush2.msra.mxu0 0.0
      %1395 = vmatprep.subr.mxu0 0.0
      %1396 = vmatpush2.msra.mxu0 0.0
      %1397 = vmatprep.subr.mxu0 0.0
      %1398 = vmatpush2.msra.mxu0 0.0
      %1399 = vmatprep.subr.mxu0 0.0
      %1400 = vmatpush2.msra.mxu0 0.0
      %1401 = vmatprep.subr.mxu0 0.0
      %1402 = vmatpush2.msra.mxu0 0.0
      %1403 = vmatprep.mubr.f32.mxu0 0.0
      %v1404 = vand.u32 %v1243, 4294901760
      %1405 = vmatmul.mubr.f32.gmra.mxu0 %v1404
      %v1406 = vpop.f32.mrf.mxu0
      %v1407 = vadd.f32 %v1321, %v1406
      %v1408 = vpop.f32.mrf.mxu0
      %1409 = vmatprep.mubr.f32.mxu0 0.0
      %v1410 = vand.u32 %v1246, 4294901760
      %1411 = vmatmul.mubr.f32.gmra.mxu0 %v1410
      %v1412 = vpop.f32.mrf.mxu0
      %v1413 = vadd.f32 %v1331, %v1412
      %v1414 = vpop.f32.mrf.mxu0
      %1415 = vdwg.mxu0
      %1416 = vmatprep.subr.mxu0 0.0
      %1417 = vmatpush1.msra.mxu0 0.0
      %1418 = vmatprep.subr.mxu0 0.0
      %1419 = vmatpush1.msra.mxu0 0.0
      %1420 = vmatprep.subr.mxu0 0.0
      %1421 = vmatpush1.msra.mxu0 0.0
      %1422 = vmatprep.subr.mxu0 0.0
      %1423 = vmatpush1.msra.mxu0 0.0
      %1424 = vmatprep.subr.mxu0 0.0
      %1425 = vmatpush1.msra.mxu0 0.0
      %1426 = vmatprep.subr.mxu0 0.0
      %1427 = vmatpush1.msra.mxu0 0.0
      %1428 = vmatprep.subr.mxu0 0.0
      %1429 = vmatpush1.msra.mxu0 0.0
      %1430 = vmatprep.subr.mxu0 0.0
      %1431 = vmatpush1.msra.mxu0 0.0
      %1432 = vmatprep.subr.mxu0 0.0
      %1433 = vmatpush1.msra.mxu0 0.0
      %1434 = vmatprep.subr.mxu0 0.0
      %1435 = vmatpush1.msra.mxu0 0.0
      %1436 = vmatprep.subr.mxu0 0.0
      %1437 = vmatpush1.msra.mxu0 0.0
      %1438 = vmatprep.subr.mxu0 0.0
      %1439 = vmatpush1.msra.mxu0 0.0
      %1440 = vmatprep.subr.mxu0 0.0
      %1441 = vmatpush1.msra.mxu0 0.0
      %1442 = vmatprep.subr.mxu0 0.0
      %1443 = vmatpush1.msra.mxu0 0.0
      %1444 = vmatprep.subr.mxu0 0.0
      %1445 = vmatpush1.msra.mxu0 0.0
      %1446 = vmatprep.subr.mxu0 0.0
      %v1447 = vand.u32 %v746, 4294901760
      %v1448 = vsub.f32 %v746, %v1447
      %1449 = vmatpush1.msra.mxu0 %v1448
      %1450 = vmatprep.subr.mxu0 0.0
      %1451 = vmatpush2.msra.mxu0 0.0
      %1452 = vmatprep.subr.mxu0 0.0
      %1453 = vmatpush2.msra.mxu0 0.0
      %1454 = vmatprep.subr.mxu0 0.0
      %1455 = vmatpush2.msra.mxu0 0.0
      %1456 = vmatprep.subr.mxu0 0.0
      %1457 = vmatpush2.msra.mxu0 0.0
      %1458 = vmatprep.subr.mxu0 0.0
      %1459 = vmatpush2.msra.mxu0 0.0
      %1460 = vmatprep.subr.mxu0 0.0
      %1461 = vmatpush2.msra.mxu0 0.0
      %1462 = vmatprep.subr.mxu0 0.0
      %1463 = vmatpush2.msra.mxu0 0.0
      %1464 = vmatprep.subr.mxu0 0.0
      %1465 = vmatpush2.msra.mxu0 0.0
      %1466 = vmatprep.subr.mxu0 0.0
      %1467 = vmatpush2.msra.mxu0 0.0
      %1468 = vmatprep.subr.mxu0 0.0
      %1469 = vmatpush2.msra.mxu0 0.0
      %1470 = vmatprep.subr.mxu0 0.0
      %1471 = vmatpush2.msra.mxu0 0.0
      %1472 = vmatprep.subr.mxu0 0.0
      %1473 = vmatpush2.msra.mxu0 0.0
      %1474 = vmatprep.subr.mxu0 0.0
      %1475 = vmatpush2.msra.mxu0 0.0
      %1476 = vmatprep.subr.mxu0 0.0
      %1477 = vmatpush2.msra.mxu0 0.0
      %1478 = vmatprep.subr.mxu0 0.0
      %1479 = vmatpush2.msra.mxu0 0.0
      %1480 = vmatprep.subr.mxu0 0.0
      %1481 = vmatpush2.msra.mxu0 0.0
      %1482 = vmatprep.mubr.f32.mxu0 0.0
      %v1483 = vand.u32 %v1243, 4294901760
      %v1484 = vsub.f32 %v1243, %v1483
      %1485 = vmatmul.mubr.f32.gmra.mxu0 %v1484
      %v1486 = vpop.f32.mrf.mxu0
      %v1487 = vadd.f32 %v1407, %v1486
      %v1488 = vpop.f32.mrf.mxu0
      %1489 = vmatprep.mubr.f32.mxu0 0.0
      %v1490 = vand.u32 %v1246, 4294901760
      %v1491 = vsub.f32 %v1246, %v1490
      %1492 = vmatmul.mubr.f32.gmra.mxu0 %v1491
      %v1493 = vpop.f32.mrf.mxu0
      %v1494 = vadd.f32 %v1413, %v1493
      %v1495 = vpop.f32.mrf.mxu0
      %1496 = vdwg.mxu0
      %1497 = vmatprep.subr.mxu0 0.0
      %1498 = vmatpush1.msra.mxu0 0.0
      %1499 = vmatprep.subr.mxu0 0.0
      %1500 = vmatpush1.msra.mxu0 0.0
      %1501 = vmatprep.subr.mxu0 0.0
      %1502 = vmatpush1.msra.mxu0 0.0
      %1503 = vmatprep.subr.mxu0 0.0
      %1504 = vmatpush1.msra.mxu0 0.0
      %1505 = vmatprep.subr.mxu0 0.0
      %1506 = vmatpush1.msra.mxu0 0.0
      %1507 = vmatprep.subr.mxu0 0.0
      %1508 = vmatpush1.msra.mxu0 0.0
      %1509 = vmatprep.subr.mxu0 0.0
      %1510 = vmatpush1.msra.mxu0 0.0
      %1511 = vmatprep.subr.mxu0 0.0
      %1512 = vmatpush1.msra.mxu0 0.0
      %1513 = vmatprep.subr.mxu0 0.0
      %1514 = vmatpush1.msra.mxu0 0.0
      %1515 = vmatprep.subr.mxu0 0.0
      %1516 = vmatpush1.msra.mxu0 0.0
      %1517 = vmatprep.subr.mxu0 0.0
      %1518 = vmatpush1.msra.mxu0 0.0
      %1519 = vmatprep.subr.mxu0 0.0
      %1520 = vmatpush1.msra.mxu0 0.0
      %1521 = vmatprep.subr.mxu0 0.0
      %1522 = vmatpush1.msra.mxu0 0.0
      %1523 = vmatprep.subr.mxu0 0.0
      %1524 = vmatpush1.msra.mxu0 0.0
      %1525 = vmatprep.subr.mxu0 0.0
      %1526 = vmatpush1.msra.mxu0 0.0
      %1527 = vmatprep.subr.mxu0 0.0
      %v1528 = vand.u32 %v746, 4294901760
      %1529 = vmatpush1.msra.mxu0 %v1528
      %1530 = vmatprep.subr.mxu0 0.0
      %1531 = vmatpush2.msra.mxu0 0.0
      %1532 = vmatprep.subr.mxu0 0.0
      %1533 = vmatpush2.msra.mxu0 0.0
      %1534 = vmatprep.subr.mxu0 0.0
      %1535 = vmatpush2.msra.mxu0 0.0
      %1536 = vmatprep.subr.mxu0 0.0
      %1537 = vmatpush2.msra.mxu0 0.0
      %1538 = vmatprep.subr.mxu0 0.0
      %1539 = vmatpush2.msra.mxu0 0.0
      %1540 = vmatprep.subr.mxu0 0.0
      %1541 = vmatpush2.msra.mxu0 0.0
      %1542 = vmatprep.subr.mxu0 0.0
      %1543 = vmatpush2.msra.mxu0 0.0
      %1544 = vmatprep.subr.mxu0 0.0
      %1545 = vmatpush2.msra.mxu0 0.0
      %1546 = vmatprep.subr.mxu0 0.0
      %1547 = vmatpush2.msra.mxu0 0.0
      %1548 = vmatprep.subr.mxu0 0.0
      %1549 = vmatpush2.msra.mxu0 0.0
      %1550 = vmatprep.subr.mxu0 0.0
      %1551 = vmatpush2.msra.mxu0 0.0
      %1552 = vmatprep.subr.mxu0 0.0
      %1553 = vmatpush2.msra.mxu0 0.0
      %1554 = vmatprep.subr.mxu0 0.0
      %1555 = vmatpush2.msra.mxu0 0.0
      %1556 = vmatprep.subr.mxu0 0.0
      %1557 = vmatpush2.msra.mxu0 0.0
      %1558 = vmatprep.subr.mxu0 0.0
      %1559 = vmatpush2.msra.mxu0 0.0
      %1560 = vmatprep.subr.mxu0 0.0
      %1561 = vmatpush2.msra.mxu0 0.0
      %1562 = vmatprep.mubr.f32.mxu0 0.0
      %v1563 = vand.u32 %v1243, 4294901760
      %v1564 = vsub.f32 %v1243, %v1563
      %v1565 = vand.u32 %v1564, 4294901760
      %1566 = vmatmul.mubr.f32.gmra.mxu0 %v1565
      %v1567 = vpop.f32.mrf.mxu0
      %v1568 = vadd.f32 %v1487, %v1567
      %v1569 = vpop.f32.mrf.mxu0
      %1570 = vmatprep.mubr.f32.mxu0 0.0
      %v1571 = vand.u32 %v1246, 4294901760
      %v1572 = vsub.f32 %v1246, %v1571
      %v1573 = vand.u32 %v1572, 4294901760
      %1574 = vmatmul.mubr.f32.gmra.mxu0 %v1573
      %v1575 = vpop.f32.mrf.mxu0
      %v1576 = vadd.f32 %v1494, %v1575
      %v1577 = vpop.f32.mrf.mxu0
      %1578 = vdwg.mxu0
      %1579 = vmatprep.subr.mxu0 0.0
      %1580 = vmatpush1.msra.mxu0 0.0
      %1581 = vmatprep.subr.mxu0 0.0
      %1582 = vmatpush1.msra.mxu0 0.0
      %1583 = vmatprep.subr.mxu0 0.0
      %1584 = vmatpush1.msra.mxu0 0.0
      %1585 = vmatprep.subr.mxu0 0.0
      %1586 = vmatpush1.msra.mxu0 0.0
      %1587 = vmatprep.subr.mxu0 0.0
      %1588 = vmatpush1.msra.mxu0 0.0
      %1589 = vmatprep.subr.mxu0 0.0
      %1590 = vmatpush1.msra.mxu0 0.0
      %1591 = vmatprep.subr.mxu0 0.0
      %1592 = vmatpush1.msra.mxu0 0.0
      %1593 = vmatprep.subr.mxu0 0.0
      %1594 = vmatpush1.msra.mxu0 0.0
      %1595 = vmatprep.subr.mxu0 0.0
      %1596 = vmatpush1.msra.mxu0 0.0
      %1597 = vmatprep.subr.mxu0 0.0
      %1598 = vmatpush1.msra.mxu0 0.0
      %1599 = vmatprep.subr.mxu0 0.0
      %1600 = vmatpush1.msra.mxu0 0.0
      %1601 = vmatprep.subr.mxu0 0.0
      %1602 = vmatpush1.msra.mxu0 0.0
      %1603 = vmatprep.subr.mxu0 0.0
      %1604 = vmatpush1.msra.mxu0 0.0
      %1605 = vmatprep.subr.mxu0 0.0
      %1606 = vmatpush1.msra.mxu0 0.0
      %1607 = vmatprep.subr.mxu0 0.0
      %1608 = vmatpush1.msra.mxu0 0.0
      %1609 = vmatprep.subr.mxu0 0.0
      %v1610 = vand.u32 %v746, 4294901760
      %v1611 = vsub.f32 %v746, %v1610
      %v1612 = vand.u32 %v1611, 4294901760
      %1613 = vmatpush1.msra.mxu0 %v1612
      %1614 = vmatprep.subr.mxu0 0.0
      %1615 = vmatpush2.msra.mxu0 0.0
      %1616 = vmatprep.subr.mxu0 0.0
      %1617 = vmatpush2.msra.mxu0 0.0
      %1618 = vmatprep.subr.mxu0 0.0
      %1619 = vmatpush2.msra.mxu0 0.0
      %1620 = vmatprep.subr.mxu0 0.0
      %1621 = vmatpush2.msra.mxu0 0.0
      %1622 = vmatprep.subr.mxu0 0.0
      %1623 = vmatpush2.msra.mxu0 0.0
      %1624 = vmatprep.subr.mxu0 0.0
      %1625 = vmatpush2.msra.mxu0 0.0
      %1626 = vmatprep.subr.mxu0 0.0
      %1627 = vmatpush2.msra.mxu0 0.0
      %1628 = vmatprep.subr.mxu0 0.0
      %1629 = vmatpush2.msra.mxu0 0.0
      %1630 = vmatprep.subr.mxu0 0.0
      %1631 = vmatpush2.msra.mxu0 0.0
      %1632 = vmatprep.subr.mxu0 0.0
      %1633 = vmatpush2.msra.mxu0 0.0
      %1634 = vmatprep.subr.mxu0 0.0
      %1635 = vmatpush2.msra.mxu0 0.0
      %1636 = vmatprep.subr.mxu0 0.0
      %1637 = vmatpush2.msra.mxu0 0.0
      %1638 = vmatprep.subr.mxu0 0.0
      %1639 = vmatpush2.msra.mxu0 0.0
      %1640 = vmatprep.subr.mxu0 0.0
      %1641 = vmatpush2.msra.mxu0 0.0
      %1642 = vmatprep.subr.mxu0 0.0
      %1643 = vmatpush2.msra.mxu0 0.0
      %1644 = vmatprep.subr.mxu0 0.0
      %1645 = vmatpush2.msra.mxu0 0.0
      %1646 = vmatprep.mubr.f32.mxu0 0.0
      %v1647 = vand.u32 %v1243, 4294901760
      %1648 = vmatmul.mubr.f32.gmra.mxu0 %v1647
      %v1649 = vpop.f32.mrf.mxu0
      %v1650 = vadd.f32 %v1568, %v1649
      %v1651 = vpop.f32.mrf.mxu0
      %1652 = vmatprep.mubr.f32.mxu0 0.0
      %v1653 = vand.u32 %v1246, 4294901760
      %1654 = vmatmul.mubr.f32.gmra.mxu0 %v1653
      %v1655 = vpop.f32.mrf.mxu0
      %v1656 = vadd.f32 %v1576, %v1655
      %v1657 = vpop.f32.mrf.mxu0
      %1658 = vdwg.mxu0
      %1659 = vmatprep.subr.mxu0 0.0
      %1660 = vmatpush1.msra.mxu0 0.0
      %1661 = vmatprep.subr.mxu0 0.0
      %1662 = vmatpush1.msra.mxu0 0.0
      %1663 = vmatprep.subr.mxu0 0.0
      %1664 = vmatpush1.msra.mxu0 0.0
      %1665 = vmatprep.subr.mxu0 0.0
      %1666 = vmatpush1.msra.mxu0 0.0
      %1667 = vmatprep.subr.mxu0 0.0
      %1668 = vmatpush1.msra.mxu0 0.0
      %1669 = vmatprep.subr.mxu0 0.0
      %1670 = vmatpush1.msra.mxu0 0.0
      %1671 = vmatprep.subr.mxu0 0.0
      %1672 = vmatpush1.msra.mxu0 0.0
      %1673 = vmatprep.subr.mxu0 0.0
      %1674 = vmatpush1.msra.mxu0 0.0
      %1675 = vmatprep.subr.mxu0 0.0
      %1676 = vmatpush1.msra.mxu0 0.0
      %1677 = vmatprep.subr.mxu0 0.0
      %1678 = vmatpush1.msra.mxu0 0.0
      %1679 = vmatprep.subr.mxu0 0.0
      %1680 = vmatpush1.msra.mxu0 0.0
      %1681 = vmatprep.subr.mxu0 0.0
      %1682 = vmatpush1.msra.mxu0 0.0
      %1683 = vmatprep.subr.mxu0 0.0
      %1684 = vmatpush1.msra.mxu0 0.0
      %1685 = vmatprep.subr.mxu0 0.0
      %1686 = vmatpush1.msra.mxu0 0.0
      %1687 = vmatprep.subr.mxu0 0.0
      %1688 = vmatpush1.msra.mxu0 0.0
      %1689 = vmatprep.subr.mxu0 0.0
      %v1690 = vand.u32 %v746, 4294901760
      %1691 = vmatpush1.msra.mxu0 %v1690
      %1692 = vmatprep.subr.mxu0 0.0
      %1693 = vmatpush2.msra.mxu0 0.0
      %1694 = vmatprep.subr.mxu0 0.0
      %1695 = vmatpush2.msra.mxu0 0.0
      %1696 = vmatprep.subr.mxu0 0.0
      %1697 = vmatpush2.msra.mxu0 0.0
      %1698 = vmatprep.subr.mxu0 0.0
      %1699 = vmatpush2.msra.mxu0 0.0
      %1700 = vmatprep.subr.mxu0 0.0
      %1701 = vmatpush2.msra.mxu0 0.0
      %1702 = vmatprep.subr.mxu0 0.0
      %1703 = vmatpush2.msra.mxu0 0.0
      %1704 = vmatprep.subr.mxu0 0.0
      %1705 = vmatpush2.msra.mxu0 0.0
      %1706 = vmatprep.subr.mxu0 0.0
      %1707 = vmatpush2.msra.mxu0 0.0
      %1708 = vmatprep.subr.mxu0 0.0
      %1709 = vmatpush2.msra.mxu0 0.0
      %1710 = vmatprep.subr.mxu0 0.0
      %1711 = vmatpush2.msra.mxu0 0.0
      %1712 = vmatprep.subr.mxu0 0.0
      %1713 = vmatpush2.msra.mxu0 0.0
      %1714 = vmatprep.subr.mxu0 0.0
      %1715 = vmatpush2.msra.mxu0 0.0
      %1716 = vmatprep.subr.mxu0 0.0
      %1717 = vmatpush2.msra.mxu0 0.0
      %1718 = vmatprep.subr.mxu0 0.0
      %1719 = vmatpush2.msra.mxu0 0.0
      %1720 = vmatprep.subr.mxu0 0.0
      %1721 = vmatpush2.msra.mxu0 0.0
      %1722 = vmatprep.subr.mxu0 0.0
      %1723 = vmatpush2.msra.mxu0 0.0
      %1724 = vmatprep.mubr.f32.mxu0 0.0
      %v1725 = vand.u32 %v1243, 4294901760
      %1726 = vmatmul.mubr.f32.gmra.mxu0 %v1725
      %v1727 = vpop.f32.mrf.mxu0
      %v1728 = vadd.f32 %v1650, %v1727
      %v1729 = vpop.f32.mrf.mxu0
      %1730 = vmatprep.mubr.f32.mxu0 0.0
      %v1731 = vand.u32 %v1246, 4294901760
      %1732 = vmatmul.mubr.f32.gmra.mxu0 %v1731
      %v1733 = vpop.f32.mrf.mxu0
      %v1734 = vadd.f32 %v1656, %v1733
      %v1735 = vpop.f32.mrf.mxu0
      %1736 = vdwg.mxu0
      %v1737 = vsub.f32 %v1233, %v1728
      %v1738 = vsub.f32 %v1239, %v1734
      %v1739 = vmul.f32 %v1737, %v1737
      %v1740 = vmul.f32 %v1738, %v1738
      %1743 = vrot.lane.b32.xlu0 %v1739, 120
      %v1744 = vpop.permute.xlu0 %1743
      %1745 = vrot.lane.b32.xlu0 %v1740, 120
      %v1746 = vpop.permute.xlu0 %1745
      %vm1749 = vcmask 23552
      %v1750 = vsel %vm1749, %v1744, 0.0
      %1751 = vadd.xlane.f32.xlu0 %v1750
      %v1752 = vpop.xlane.xlu0 %1751
      %v1753 = vsel %vm1749, %v1746, 0.0
      %1754 = vadd.xlane.f32.xlu0 %v1753
      %v1755 = vpop.xlane.xlu0 %1754
      %1758 = vrot.lane.b32.xlu0 %v1233, 120
      %v1759 = vpop.permute.xlu0 %1758
      %1760 = vrot.lane.b32.xlu0 %v1239, 120
      %v1761 = vpop.permute.xlu0 %1760
      %1766 = vrot.lane.b32.xlu0 %v1728, 123
      %v1767 = vpop.permute.xlu0 %1766
      %1768 = vrot.lane.b32.xlu0 %v1734, 123
      %v1769 = vpop.permute.xlu0 %1768
      %v1772 = vsel %vm1749, %v1759, %v1767
      %v1773 = vsel %vm1749, %v1761, %v1769
      %v1774 = vld [vmem:[%s15] sm:$0x7]
      %v1775 = vpack.c.bf16 %v1773, %v1772
      %v1776 = vld [vmem:[%s16] sm:$0x1]
      %v1778 = vlaneseq
      %v1779 = vshrl.u32 %v1778, 7
      %v1780 = vsub.s32 0, %v1779
      %v1781 = vrot.slane %v1776, %v1780
      %vm1783 = vcmask 48128
      %v1785 = vsel %vm1783, %v1775, 0
      %vm1787 = vcmask 1042432
      %v1789 = vsel %vm1787, %v1774, 0
      %1791 = vmatprep.subr.bf16.mxu0 0
      %1792 = vmatpush1.bf16.msra.mxu0 0
      %1793 = vmatprep.subr.bf16.mxu0 0
      %1794 = vmatpush1.bf16.msra.mxu0 0
      %1795 = vmatprep.subr.bf16.mxu0 0
      %1796 = vmatpush1.bf16.msra.mxu0 0
      %1797 = vmatprep.subr.bf16.mxu0 0
      %1798 = vmatpush1.bf16.msra.mxu0 0
      %1799 = vmatprep.subr.bf16.mxu0 0
      %1800 = vmatpush1.bf16.msra.mxu0 0
      %1801 = vmatprep.subr.bf16.mxu0 0
      %1802 = vmatpush1.bf16.msra.mxu0 0
      %1803 = vmatprep.subr.bf16.mxu0 0
      %1804 = vmatpush1.bf16.msra.mxu0 0
      %1805 = vmatprep.subr.bf16.mxu0 0
      %1806 = vmatpush1.bf16.msra.mxu0 %v1789
      %1807 = vmatprep.subr.bf16.mxu0 0
      %1808 = vmatpush2.bf16.msra.mxu0 0
      %1809 = vmatprep.subr.bf16.mxu0 0
      %1810 = vmatpush2.bf16.msra.mxu0 0
      %1811 = vmatprep.subr.bf16.mxu0 0
      %1812 = vmatpush2.bf16.msra.mxu0 0
      %1813 = vmatprep.subr.bf16.mxu0 0
      %1814 = vmatpush2.bf16.msra.mxu0 0
      %1815 = vmatprep.subr.bf16.mxu0 0
      %1816 = vmatpush2.bf16.msra.mxu0 0
      %1817 = vmatprep.subr.bf16.mxu0 0
      %1818 = vmatpush2.bf16.msra.mxu0 0
      %1819 = vmatprep.subr.bf16.mxu0 0
      %1820 = vmatpush2.bf16.msra.mxu0 0
      %1821 = vmatprep.subr.bf16.mxu0 0
      %1822 = vmatpush2.bf16.msra.mxu0 0
      %1823 = vmatprep.mubr.bf16.mxu0 0
      %1824 = vmatmul.mubr.bf16.gmra.mxu0 %v1785
      %v1825 = vpop.f32.mrf.mxu0
      %v1826 = vadd.f32 %v1781, %v1825
      %v1827 = vpop.f32.mrf.mxu0
      %v1828 = vpop.f32.mrf.mxu0
      %v1829 = vadd.f32 %v1781, %v1828
      %v1830 = vpop.f32.mrf.mxu0
      %1831 = vdwg.mxu0
      %v1832 = vxor.u32 %v1826, 2147483648
      %v1833 = vxor.u32 %v1829, 2147483648
      %v1834 = vmul.f32 %v1832, 1.442695
      %v1835 = vpow.pop %v1834
      %v1836 = vmul.f32 %v1833, 1.442695
      %v1837 = vpow.pop %v1836
      %v1838 = vadd.f32 %v1835, 1.0
      %v1839 = vadd.f32 %v1837, 1.0
      %v1840 = vrcp.pop %v1838
      %v1841 = vmul.f32 1.0, %v1840
      %v1842 = vrcp.pop %v1839
      %v1843 = vmul.f32 1.0, %v1842
      %v1844 = vmul.f32 %v1826, %v1841
      %v1845 = vmul.f32 %v1829, %v1843
      %v1846 = vld [vmem:[%s17] sm:$0x3]
      %v1847 = vpack.c.bf16 %v1845, %v1844
      %v1848 = vld [vmem:[%s18] sm:$0x1]
      %v1850 = vlaneseq
      %v1851 = vshrl.u32 %v1850, 7
      %v1852 = vsub.s32 0, %v1851
      %v1853 = vrot.slane %v1848, %v1852
      %v1856 = vsel %vm1749, %v1847, 0
      %vm1858 = vcmask 1040384
      %vm1859 = vcmask 1041408
      %v1860 = vsel %vm1858, 4294967295, 65535
      %v1861 = vsel %vm1859, %v1860, 0
      %v1863 = vand.u32 %v1846, %v1861
      %1865 = vmatprep.subr.bf16.mxu0 0
      %1866 = vmatpush1.bf16.msra.mxu0 0
      %1867 = vmatprep.subr.bf16.mxu0 0
      %1868 = vmatpush1.bf16.msra.mxu0 0
      %1869 = vmatprep.subr.bf16.mxu0 0
      %1870 = vmatpush1.bf16.msra.mxu0 0
      %1871 = vmatprep.subr.bf16.mxu0 0
      %1872 = vmatpush1.bf16.msra.mxu0 0
      %1873 = vmatprep.subr.bf16.mxu0 0
      %1874 = vmatpush1.bf16.msra.mxu0 0
      %1875 = vmatprep.subr.bf16.mxu0 0
      %1876 = vmatpush1.bf16.msra.mxu0 0
      %1877 = vmatprep.subr.bf16.mxu0 0
      %1878 = vmatpush1.bf16.msra.mxu0 0
      %1879 = vmatprep.subr.bf16.mxu0 0
      %1880 = vmatpush1.bf16.msra.mxu0 %v1863
      %1881 = vmatprep.subr.bf16.mxu0 0
      %1882 = vmatpush2.bf16.msra.mxu0 0
      %1883 = vmatprep.subr.bf16.mxu0 0
      %1884 = vmatpush2.bf16.msra.mxu0 0
      %1885 = vmatprep.subr.bf16.mxu0 0
      %1886 = vmatpush2.bf16.msra.mxu0 0
      %1887 = vmatprep.subr.bf16.mxu0 0
      %1888 = vmatpush2.bf16.msra.mxu0 0
      %1889 = vmatprep.subr.bf16.mxu0 0
      %1890 = vmatpush2.bf16.msra.mxu0 0
      %1891 = vmatprep.subr.bf16.mxu0 0
      %1892 = vmatpush2.bf16.msra.mxu0 0
      %1893 = vmatprep.subr.bf16.mxu0 0
      %1894 = vmatpush2.bf16.msra.mxu0 0
      %1895 = vmatprep.subr.bf16.mxu0 0
      %1896 = vmatpush2.bf16.msra.mxu0 0
      %1897 = vmatprep.mubr.bf16.mxu0 0
      %1898 = vmatmul.mubr.bf16.gmra.mxu0 %v1856
      %v1899 = vpop.f32.mrf.mxu0
      %v1900 = vadd.f32 %v1853, %v1899
      %v1901 = vpop.f32.mrf.mxu0
      %v1902 = vpop.f32.mrf.mxu0
      %v1903 = vadd.f32 %v1853, %v1902
      %v1904 = vpop.f32.mrf.mxu0
      %1905 = vdwg.mxu0
      %1906 = vrot.lane.b32.xlu0 %v1728, 8
      %v1907 = vpop.permute.xlu0 %1906
      %1908 = vrot.lane.b32.xlu0 %v1734, 8
      %v1909 = vpop.permute.xlu0 %1908
      %v1912 = vsel %vm745, %v1233, %v1907
      %v1913 = vsel %vm745, %v1239, %v1909
      %v1914 = vsel %vm734, %v1912, %v1752
      %v1915 = vsel %vm734, %v1913, %v1755
      %v1916 = vld [vmem:[%s4] sm:$0xf]
      %v1917 = vld [vmem:[%s4 + $0x4] sm:$0xf]
      %v1918 = vld [vmem:[%s4 + $0x8] sm:$0x1]
      %v1919 = vpack.c.bf16 %v1915, %v1914
      %v1920 = vld [vmem:[%s5] sm:$0x1]
      %v1922 = vlaneseq
      %v1923 = vshrl.u32 %v1922, 7
      %v1924 = vsub.s32 0, %v1923
      %v1925 = vrot.slane %v1920, %v1924
      %v1930 = vunpack.c.l.b16 %v1916
      %v1931 = vunpack.c.l.b16 %v1917
      %v1932 = vunpack.c.l.b16 %v1918
      %v1933 = vpack.c.b16 %v1931, %v1930
      %v1934 = vpack.c.b16 %v1932, %v1932
      %vm1936 = vcmask 138240
      %v1938 = vsel %vm1936, %v1919, 0
      %v1940 = vsel 0, 4294967295, 65535
      %v1941 = vsel %vm1858, %v1940, 0
      %v1943 = vand.u32 %v1934, %v1941
      %1945 = vmatprep.subr.bf16.mxu0 0
      %1946 = vmatpush1.bf16.msra.mxu0 0
      %1947 = vmatprep.subr.bf16.mxu0 0
      %1948 = vmatpush1.bf16.msra.mxu0 0
      %1949 = vmatprep.subr.bf16.mxu0 0
      %1950 = vmatpush1.bf16.msra.mxu0 0
      %1951 = vmatprep.subr.bf16.mxu0 0
      %1952 = vmatpush1.bf16.msra.mxu0 0
      %1953 = vmatprep.subr.bf16.mxu0 0
      %1954 = vmatpush1.bf16.msra.mxu0 0
      %1955 = vmatprep.subr.bf16.mxu0 0
      %1956 = vmatpush1.bf16.msra.mxu0 0
      %1957 = vmatprep.subr.bf16.mxu0 0
      %1958 = vmatpush1.bf16.msra.mxu0 %v1943
      %1959 = vmatprep.subr.bf16.mxu0 0
      %1960 = vmatpush1.bf16.msra.mxu0 %v1933
      %1961 = vmatprep.subr.bf16.mxu0 0
      %1962 = vmatpush2.bf16.msra.mxu0 0
      %1963 = vmatprep.subr.bf16.mxu0 0
      %1964 = vmatpush2.bf16.msra.mxu0 0
      %1965 = vmatprep.subr.bf16.mxu0 0
      %1966 = vmatpush2.bf16.msra.mxu0 0
      %1967 = vmatprep.subr.bf16.mxu0 0
      %1968 = vmatpush2.bf16.msra.mxu0 0
      %1969 = vmatprep.subr.bf16.mxu0 0
      %1970 = vmatpush2.bf16.msra.mxu0 0
      %1971 = vmatprep.subr.bf16.mxu0 0
      %1972 = vmatpush2.bf16.msra.mxu0 0
      %1973 = vmatprep.subr.bf16.mxu0 0
      %1974 = vmatpush2.bf16.msra.mxu0 0
      %1975 = vmatprep.subr.bf16.mxu0 0
      %1976 = vmatpush2.bf16.msra.mxu0 0
      %1977 = vmatprep.mubr.bf16.mxu0 0
      %1978 = vmatmul.mubr.bf16.gmra.mxu0 %v1938
      %v1979 = vpop.f32.mrf.mxu0
      %v1980 = vadd.f32 %v1925, %v1979
      %v1981 = vpop.f32.mrf.mxu0
      %v1982 = vpop.f32.mrf.mxu0
      %v1983 = vadd.f32 %v1925, %v1982
      %v1984 = vpop.f32.mrf.mxu0
      %1985 = vdwg.mxu0
      %v1986 = vxor.u32 %v1980, 2147483648
      %v1987 = vxor.u32 %v1983, 2147483648
      %v1988 = vmul.f32 %v1986, 1.442695
      %v1989 = vpow.pop %v1988
      %v1990 = vmul.f32 %v1987, 1.442695
      %v1991 = vpow.pop %v1990
      %v1992 = vadd.f32 %v1989, 1.0
      %v1993 = vadd.f32 %v1991, 1.0
      %v1994 = vrcp.pop %v1992
      %v1995 = vmul.f32 1.0, %v1994
      %v1996 = vrcp.pop %v1993
      %v1997 = vmul.f32 1.0, %v1996
      %v1998 = vmul.f32 %v1980, %v1995
      %v1999 = vmul.f32 %v1983, %v1997
      %v2000 = vld [vmem:[%s6] sm:$0xf]
      %v2001 = vld [vmem:[%s6 + $0x4] sm:$0xf]
      %v2002 = vpack.c.bf16 %v1999, %v1998
      %v2003 = vld [vmem:[%s7] sm:$0x1]
      %v2005 = vlaneseq
      %v2006 = vshrl.u32 %v2005, 7
      %v2007 = vsub.s32 0, %v2006
      %v2008 = vrot.slane %v2003, %v2007
      %v2012 = vunpack.c.l.b16 %v2000
      %v2013 = vunpack.c.l.b16 %v2001
      %v2014 = vpack.c.b16 %v2013, %v2012
      %v2017 = vsel %vm734, %v2002, 0
      %2019 = vmatprep.subr.bf16.mxu0 0
      %2020 = vmatpush1.bf16.msra.mxu0 0
      %2021 = vmatprep.subr.bf16.mxu0 0
      %2022 = vmatpush1.bf16.msra.mxu0 0
      %2023 = vmatprep.subr.bf16.mxu0 0
      %2024 = vmatpush1.bf16.msra.mxu0 0
      %2025 = vmatprep.subr.bf16.mxu0 0
      %2026 = vmatpush1.bf16.msra.mxu0 0
      %2027 = vmatprep.subr.bf16.mxu0 0
      %2028 = vmatpush1.bf16.msra.mxu0 0
      %2029 = vmatprep.subr.bf16.mxu0 0
      %2030 = vmatpush1.bf16.msra.mxu0 0
      %2031 = vmatprep.subr.bf16.mxu0 0
      %2032 = vmatpush1.bf16.msra.mxu0 0
      %2033 = vmatprep.subr.bf16.mxu0 0
      %2034 = vmatpush1.bf16.msra.mxu0 %v2014
      %2035 = vmatprep.subr.bf16.mxu0 0
      %2036 = vmatpush2.bf16.msra.mxu0 0
      %2037 = vmatprep.subr.bf16.mxu0 0
      %2038 = vmatpush2.bf16.msra.mxu0 0
      %2039 = vmatprep.subr.bf16.mxu0 0
      %2040 = vmatpush2.bf16.msra.mxu0 0
      %2041 = vmatprep.subr.bf16.mxu0 0
      %2042 = vmatpush2.bf16.msra.mxu0 0
      %2043 = vmatprep.subr.bf16.mxu0 0
      %2044 = vmatpush2.bf16.msra.mxu0 0
      %2045 = vmatprep.subr.bf16.mxu0 0
      %2046 = vmatpush2.bf16.msra.mxu0 0
      %2047 = vmatprep.subr.bf16.mxu0 0
      %2048 = vmatpush2.bf16.msra.mxu0 0
      %2049 = vmatprep.subr.bf16.mxu0 0
      %2050 = vmatpush2.bf16.msra.mxu0 0
      %2051 = vmatprep.mubr.bf16.mxu0 0
      %2052 = vmatmul.mubr.bf16.gmra.mxu0 %v2017
      %v2053 = vpop.f32.mrf.mxu0
      %v2054 = vadd.f32 %v2008, %v2053
      %v2055 = vpop.f32.mrf.mxu0
      %v2056 = vpop.f32.mrf.mxu0
      %v2057 = vadd.f32 %v2008, %v2056
      %v2058 = vpop.f32.mrf.mxu0
      %2059 = vdwg.mxu0
      %v2060 = vxor.u32 %v2054, 2147483648
      %v2061 = vxor.u32 %v2057, 2147483648
      %v2062 = vmul.f32 %v2060, 1.442695
      %v2063 = vpow.pop %v2062
      %v2064 = vmul.f32 %v2061, 1.442695
      %v2065 = vpow.pop %v2064
      %v2066 = vadd.f32 %v2063, 1.0
      %v2067 = vadd.f32 %v2065, 1.0
      %v2068 = vrcp.pop %v2066
      %v2069 = vmul.f32 1.0, %v2068
      %v2070 = vrcp.pop %v2067
      %v2071 = vmul.f32 1.0, %v2070
      %v2072 = vmul.f32 %v2054, %v2069
      %v2073 = vmul.f32 %v2057, %v2071
      %v2074 = vld [vmem:[%s12] sm:$0xf]
      %v2075 = vld [vmem:[%s12 + $0x4] sm:$0xf]
      %v2076 = vpack.c.bf16 %v2073, %v2072
      %v2077 = vld [vmem:[%s13] sm:$0x1]
      %v2079 = vlaneseq
      %v2080 = vshrl.u32 %v2079, 7
      %v2081 = vsub.s32 0, %v2080
      %v2082 = vrot.slane %v2077, %v2081
      %v2086 = vunpack.c.l.b16 %v2074
      %v2087 = vunpack.c.l.b16 %v2075
      %v2088 = vpack.c.b16 %v2087, %v2086
      %v2091 = vsel %vm734, %v2076, 0
      %2093 = vmatprep.subr.bf16.mxu0 0
      %2094 = vmatpush1.bf16.msra.mxu0 0
      %2095 = vmatprep.subr.bf16.mxu0 0
      %2096 = vmatpush1.bf16.msra.mxu0 0
      %2097 = vmatprep.subr.bf16.mxu0 0
      %2098 = vmatpush1.bf16.msra.mxu0 0
      %2099 = vmatprep.subr.bf16.mxu0 0
      %2100 = vmatpush1.bf16.msra.mxu0 0
      %2101 = vmatprep.subr.bf16.mxu0 0
      %2102 = vmatpush1.bf16.msra.mxu0 0
      %2103 = vmatprep.subr.bf16.mxu0 0
      %2104 = vmatpush1.bf16.msra.mxu0 0
      %2105 = vmatprep.subr.bf16.mxu0 0
      %2106 = vmatpush1.bf16.msra.mxu0 0
      %2107 = vmatprep.subr.bf16.mxu0 0
      %2108 = vmatpush1.bf16.msra.mxu0 %v2088
      %2109 = vmatprep.subr.bf16.mxu0 0
      %2110 = vmatpush2.bf16.msra.mxu0 0
      %2111 = vmatprep.subr.bf16.mxu0 0
      %2112 = vmatpush2.bf16.msra.mxu0 0
      %2113 = vmatprep.subr.bf16.mxu0 0
      %2114 = vmatpush2.bf16.msra.mxu0 0
      %2115 = vmatprep.subr.bf16.mxu0 0
      %2116 = vmatpush2.bf16.msra.mxu0 0
      %2117 = vmatprep.subr.bf16.mxu0 0
      %2118 = vmatpush2.bf16.msra.mxu0 0
      %2119 = vmatprep.subr.bf16.mxu0 0
      %2120 = vmatpush2.bf16.msra.mxu0 0
      %2121 = vmatprep.subr.bf16.mxu0 0
      %2122 = vmatpush2.bf16.msra.mxu0 0
      %2123 = vmatprep.subr.bf16.mxu0 0
      %2124 = vmatpush2.bf16.msra.mxu0 0
      %2125 = vmatprep.mubr.bf16.mxu0 0
      %2126 = vmatmul.mubr.bf16.gmra.mxu0 %v2091
      %v2127 = vpop.f32.mrf.mxu0
      %v2128 = vadd.f32 %v2082, %v2127
      %v2129 = vpop.f32.mrf.mxu0
      %v2130 = vpop.f32.mrf.mxu0
      %v2131 = vadd.f32 %v2082, %v2130
      %v2132 = vpop.f32.mrf.mxu0
      %2133 = vdwg.mxu0
      %v2134 = vxor.u32 %v2128, 2147483648
      %v2135 = vxor.u32 %v2131, 2147483648
      %v2136 = vmul.f32 %v2134, 1.442695
      %v2137 = vpow.pop %v2136
      %v2138 = vmul.f32 %v2135, 1.442695
      %v2139 = vpow.pop %v2138
      %v2140 = vadd.f32 %v2137, 1.0
      %v2141 = vadd.f32 %v2139, 1.0
      %v2142 = vrcp.pop %v2140
      %v2143 = vmul.f32 1.0, %v2142
      %v2144 = vrcp.pop %v2141
      %v2145 = vmul.f32 1.0, %v2144
      %v2146 = vmul.f32 %v2128, %v2143
      %v2147 = vmul.f32 %v2131, %v2145
      %v2148 = vld [vmem:[%s14] sm:$0xf]
      %v2149 = vld [vmem:[%s14 + $0x4] sm:$0xf]
      %v2150 = vpack.c.bf16 %v2147, %v2146
      %v2153 = vunpack.c.l.b16 %v2148
      %v2154 = vunpack.c.l.b16 %v2149
      %v2155 = vpack.c.b16 %v2154, %v2153
      %v2158 = vsel %vm734, %v2150, 0
      %2160 = vmatprep.subr.bf16.mxu0 0
      %2161 = vmatpush1.bf16.msra.mxu0 0
      %2162 = vmatprep.subr.bf16.mxu0 0
      %2163 = vmatpush1.bf16.msra.mxu0 0
      %2164 = vmatprep.subr.bf16.mxu0 0
      %2165 = vmatpush1.bf16.msra.mxu0 0
      %2166 = vmatprep.subr.bf16.mxu0 0
      %2167 = vmatpush1.bf16.msra.mxu0 0
      %2168 = vmatprep.subr.bf16.mxu0 0
      %2169 = vmatpush1.bf16.msra.mxu0 0
      %2170 = vmatprep.subr.bf16.mxu0 0
      %2171 = vmatpush1.bf16.msra.mxu0 0
      %2172 = vmatprep.subr.bf16.mxu0 0
      %2173 = vmatpush1.bf16.msra.mxu0 0
      %2174 = vmatprep.subr.bf16.mxu0 0
      %2175 = vmatpush1.bf16.msra.mxu0 %v2155
      %2176 = vmatprep.subr.bf16.mxu0 0
      %2177 = vmatpush2.bf16.msra.mxu0 0
      %2178 = vmatprep.subr.bf16.mxu0 0
      %2179 = vmatpush2.bf16.msra.mxu0 0
      %2180 = vmatprep.subr.bf16.mxu0 0
      %2181 = vmatpush2.bf16.msra.mxu0 0
      %2182 = vmatprep.subr.bf16.mxu0 0
      %2183 = vmatpush2.bf16.msra.mxu0 0
      %2184 = vmatprep.subr.bf16.mxu0 0
      %2185 = vmatpush2.bf16.msra.mxu0 0
      %2186 = vmatprep.subr.bf16.mxu0 0
      %2187 = vmatpush2.bf16.msra.mxu0 0
      %2188 = vmatprep.subr.bf16.mxu0 0
      %2189 = vmatpush2.bf16.msra.mxu0 0
      %2190 = vmatprep.subr.bf16.mxu0 0
      %2191 = vmatpush2.bf16.msra.mxu0 0
      %2192 = vmatprep.mubr.bf16.mxu0 0
      %2193 = vmatmul.mubr.bf16.gmra.mxu0 %v2158
      %v2194 = vpop.f32.mrf.mxu0
      %v2195 = vadd.f32 0.0, %v2194
      %v2196 = vpop.f32.mrf.mxu0
      %v2197 = vpop.f32.mrf.mxu0
      %v2198 = vadd.f32 0.0, %v2197
      %v2199 = vpop.f32.mrf.mxu0
      %2200 = vdwg.mxu0
      %2202 = vset.pattern.permute.xlu0 0
      %2203 = vperm.xlu0 %2202, %v2195
      %v2204 = vpop.permute.xlu0 %2203
      %2207 = vset.pattern.permute.xlu0 0
      %2208 = vperm.xlu0 %2207, %v2198
      %v2209 = vpop.permute.xlu0 %2208
      %v2211 = vmul.f32 %v1737, %v2204
      %v2212 = vmul.f32 %v1738, %v2209
      %v2213 = vmax.f32 %v2211, -100.0
      %v2214 = vmax.f32 %v2212, -100.0
      %v2215 = vmin.f32 %v2213, 100.0
      %v2216 = vmin.f32 %v2214, 100.0
      %2219 = vrot.lane.b32.xlu0 %v2215, 120
      %v2220 = vpop.permute.xlu0 %2219
      %2221 = vrot.lane.b32.xlu0 %v2216, 120
      %v2222 = vpop.permute.xlu0 %2221
      %2227 = vrot.lane.b32.xlu0 %v2072, 3
      %v2228 = vpop.permute.xlu0 %2227
      %2229 = vrot.lane.b32.xlu0 %v2073, 3
      %v2230 = vpop.permute.xlu0 %2229
      %2235 = vrot.lane.b32.xlu0 %v1900, 19
      %v2236 = vpop.permute.xlu0 %2235
      %2237 = vrot.lane.b32.xlu0 %v1903, 19
      %v2238 = vpop.permute.xlu0 %2237
      %v2241 = vsel %vm1749, %v2220, %v2228
      %v2242 = vsel %vm1749, %v2222, %v2230
      %vm2243 = vcmask 154624
      %v2244 = vsel %vm2243, %v2241, %v2236
      %v2245 = vsel %vm2243, %v2242, %v2238
      %v2247 = vsel %vm734, %v733, 0
      %2249 = vmatprep.subr.mxu0 0.0
      %2250 = vmatpush1.msra.mxu0 0.0
      %2251 = vmatprep.subr.mxu0 0.0
      %2252 = vmatpush1.msra.mxu0 0.0
      %2253 = vmatprep.subr.mxu0 0.0
      %2254 = vmatpush1.msra.mxu0 0.0
      %2255 = vmatprep.subr.mxu0 0.0
      %2256 = vmatpush1.msra.mxu0 0.0
      %2257 = vmatprep.subr.mxu0 0.0
      %2258 = vmatpush1.msra.mxu0 0.0
      %2259 = vmatprep.subr.mxu0 0.0
      %2260 = vmatpush1.msra.mxu0 0.0
      %2261 = vmatprep.subr.mxu0 0.0
      %2262 = vmatpush1.msra.mxu0 0.0
      %2263 = vmatprep.subr.mxu0 0.0
      %2264 = vmatpush1.msra.mxu0 0.0
      %2265 = vmatprep.subr.mxu0 0.0
      %2266 = vmatpush1.msra.mxu0 0.0
      %2267 = vmatprep.subr.mxu0 0.0
      %2268 = vmatpush1.msra.mxu0 0.0
      %2269 = vmatprep.subr.mxu0 0.0
      %2270 = vmatpush1.msra.mxu0 0.0
      %2271 = vmatprep.subr.mxu0 0.0
      %2272 = vmatpush1.msra.mxu0 0.0
      %2273 = vmatprep.subr.mxu0 0.0
      %2274 = vmatpush1.msra.mxu0 0.0
      %2275 = vmatprep.subr.mxu0 0.0
      %2276 = vmatpush1.msra.mxu0 0.0
      %2277 = vmatprep.subr.mxu0 0.0
      %v2278 = vand.u32 %v2245, 4294901760
      %2279 = vmatpush1.msra.mxu0 %v2278
      %2280 = vmatprep.subr.mxu0 0.0
      %v2281 = vand.u32 %v2244, 4294901760
      %2282 = vmatpush1.msra.mxu0 %v2281
      %2283 = vmatprep.subr.mxu0 0.0
      %2284 = vmatpush2.msra.mxu0 0.0
      %2285 = vmatprep.subr.mxu0 0.0
      %2286 = vmatpush2.msra.mxu0 0.0
      %2287 = vmatprep.subr.mxu0 0.0
      %2288 = vmatpush2.msra.mxu0 0.0
      %2289 = vmatprep.subr.mxu0 0.0
      %2290 = vmatpush2.msra.mxu0 0.0
      %2291 = vmatprep.subr.mxu0 0.0
      %2292 = vmatpush2.msra.mxu0 0.0
      %2293 = vmatprep.subr.mxu0 0.0
      %2294 = vmatpush2.msra.mxu0 0.0
      %2295 = vmatprep.subr.mxu0 0.0
      %2296 = vmatpush2.msra.mxu0 0.0
      %2297 = vmatprep.subr.mxu0 0.0
      %2298 = vmatpush2.msra.mxu0 0.0
      %2299 = vmatprep.subr.mxu0 0.0
      %2300 = vmatpush2.msra.mxu0 0.0
      %2301 = vmatprep.subr.mxu0 0.0
      %2302 = vmatpush2.msra.mxu0 0.0
      %2303 = vmatprep.subr.mxu0 0.0
      %2304 = vmatpush2.msra.mxu0 0.0
      %2305 = vmatprep.subr.mxu0 0.0
      %2306 = vmatpush2.msra.mxu0 0.0
      %2307 = vmatprep.subr.mxu0 0.0
      %2308 = vmatpush2.msra.mxu0 0.0
      %2309 = vmatprep.subr.mxu0 0.0
      %2310 = vmatpush2.msra.mxu0 0.0
      %2311 = vmatprep.subr.mxu0 0.0
      %2312 = vmatpush2.msra.mxu0 0.0
      %2313 = vmatprep.subr.mxu0 0.0
      %2314 = vmatpush2.msra.mxu0 0.0
      %2315 = vmatprep.mubr.f32.mxu0 0.0
      %v2316 = vand.u32 %v2247, 4294901760
      %v2317 = vsub.f32 %v2247, %v2316
      %v2318 = vand.u32 %v2317, 4294901760
      %v2319 = vsub.f32 %v2317, %v2318
      %v2320 = vand.u32 %v2319, 4294901760
      %2321 = vmatmul.mubr.f32.gmra.mxu0 %v2320
      %v2322 = vpop.f32.mrf.mxu0
      %v2323 = vadd.f32 0.0, %v2322
      %v2324 = vpop.f32.mrf.mxu0
      %2325 = vdwg.mxu0
      %2326 = vmatprep.subr.mxu0 0.0
      %2327 = vmatpush1.msra.mxu0 0.0
      %2328 = vmatprep.subr.mxu0 0.0
      %2329 = vmatpush1.msra.mxu0 0.0
      %2330 = vmatprep.subr.mxu0 0.0
      %2331 = vmatpush1.msra.mxu0 0.0
      %2332 = vmatprep.subr.mxu0 0.0
      %2333 = vmatpush1.msra.mxu0 0.0
      %2334 = vmatprep.subr.mxu0 0.0
      %2335 = vmatpush1.msra.mxu0 0.0
      %2336 = vmatprep.subr.mxu0 0.0
      %2337 = vmatpush1.msra.mxu0 0.0
      %2338 = vmatprep.subr.mxu0 0.0
      %2339 = vmatpush1.msra.mxu0 0.0
      %2340 = vmatprep.subr.mxu0 0.0
      %2341 = vmatpush1.msra.mxu0 0.0
      %2342 = vmatprep.subr.mxu0 0.0
      %2343 = vmatpush1.msra.mxu0 0.0
      %2344 = vmatprep.subr.mxu0 0.0
      %2345 = vmatpush1.msra.mxu0 0.0
      %2346 = vmatprep.subr.mxu0 0.0
      %2347 = vmatpush1.msra.mxu0 0.0
      %2348 = vmatprep.subr.mxu0 0.0
      %2349 = vmatpush1.msra.mxu0 0.0
      %2350 = vmatprep.subr.mxu0 0.0
      %2351 = vmatpush1.msra.mxu0 0.0
      %2352 = vmatprep.subr.mxu0 0.0
      %2353 = vmatpush1.msra.mxu0 0.0
      %2354 = vmatprep.subr.mxu0 0.0
      %v2355 = vand.u32 %v2245, 4294901760
      %v2356 = vsub.f32 %v2245, %v2355
      %v2357 = vand.u32 %v2356, 4294901760
      %v2358 = vsub.f32 %v2356, %v2357
      %v2359 = vand.u32 %v2358, 4294901760
      %2360 = vmatpush1.msra.mxu0 %v2359
      %2361 = vmatprep.subr.mxu0 0.0
      %v2362 = vand.u32 %v2244, 4294901760
      %v2363 = vsub.f32 %v2244, %v2362
      %v2364 = vand.u32 %v2363, 4294901760
      %v2365 = vsub.f32 %v2363, %v2364
      %v2366 = vand.u32 %v2365, 4294901760
      %2367 = vmatpush1.msra.mxu0 %v2366
      %2368 = vmatprep.subr.mxu0 0.0
      %2369 = vmatpush2.msra.mxu0 0.0
      %2370 = vmatprep.subr.mxu0 0.0
      %2371 = vmatpush2.msra.mxu0 0.0
      %2372 = vmatprep.subr.mxu0 0.0
      %2373 = vmatpush2.msra.mxu0 0.0
      %2374 = vmatprep.subr.mxu0 0.0
      %2375 = vmatpush2.msra.mxu0 0.0
      %2376 = vmatprep.subr.mxu0 0.0
      %2377 = vmatpush2.msra.mxu0 0.0
      %2378 = vmatprep.subr.mxu0 0.0
      %2379 = vmatpush2.msra.mxu0 0.0
      %2380 = vmatprep.subr.mxu0 0.0
      %2381 = vmatpush2.msra.mxu0 0.0
      %2382 = vmatprep.subr.mxu0 0.0
      %2383 = vmatpush2.msra.mxu0 0.0
      %2384 = vmatprep.subr.mxu0 0.0
      %2385 = vmatpush2.msra.mxu0 0.0
      %2386 = vmatprep.subr.mxu0 0.0
      %2387 = vmatpush2.msra.mxu0 0.0
      %2388 = vmatprep.subr.mxu0 0.0
      %2389 = vmatpush2.msra.mxu0 0.0
      %2390 = vmatprep.subr.mxu0 0.0
      %2391 = vmatpush2.msra.mxu0 0.0
      %2392 = vmatprep.subr.mxu0 0.0
      %2393 = vmatpush2.msra.mxu0 0.0
      %2394 = vmatprep.subr.mxu0 0.0
      %2395 = vmatpush2.msra.mxu0 0.0
      %2396 = vmatprep.subr.mxu0 0.0
      %2397 = vmatpush2.msra.mxu0 0.0
      %2398 = vmatprep.subr.mxu0 0.0
      %2399 = vmatpush2.msra.mxu0 0.0
      %2400 = vmatprep.mubr.f32.mxu0 0.0
      %v2401 = vand.u32 %v2247, 4294901760
      %2402 = vmatmul.mubr.f32.gmra.mxu0 %v2401
      %v2403 = vpop.f32.mrf.mxu0
      %v2404 = vadd.f32 %v2323, %v2403
      %v2405 = vpop.f32.mrf.mxu0
      %2406 = vdwg.mxu0
      %2407 = vmatprep.subr.mxu0 0.0
      %2408 = vmatpush1.msra.mxu0 0.0
      %2409 = vmatprep.subr.mxu0 0.0
      %2410 = vmatpush1.msra.mxu0 0.0
      %2411 = vmatprep.subr.mxu0 0.0
      %2412 = vmatpush1.msra.mxu0 0.0
      %2413 = vmatprep.subr.mxu0 0.0
      %2414 = vmatpush1.msra.mxu0 0.0
      %2415 = vmatprep.subr.mxu0 0.0
      %2416 = vmatpush1.msra.mxu0 0.0
      %2417 = vmatprep.subr.mxu0 0.0
      %2418 = vmatpush1.msra.mxu0 0.0
      %2419 = vmatprep.subr.mxu0 0.0
      %2420 = vmatpush1.msra.mxu0 0.0
      %2421 = vmatprep.subr.mxu0 0.0
      %2422 = vmatpush1.msra.mxu0 0.0
      %2423 = vmatprep.subr.mxu0 0.0
      %2424 = vmatpush1.msra.mxu0 0.0
      %2425 = vmatprep.subr.mxu0 0.0
      %2426 = vmatpush1.msra.mxu0 0.0
      %2427 = vmatprep.subr.mxu0 0.0
      %2428 = vmatpush1.msra.mxu0 0.0
      %2429 = vmatprep.subr.mxu0 0.0
      %2430 = vmatpush1.msra.mxu0 0.0
      %2431 = vmatprep.subr.mxu0 0.0
      %2432 = vmatpush1.msra.mxu0 0.0
      %2433 = vmatprep.subr.mxu0 0.0
      %2434 = vmatpush1.msra.mxu0 0.0
      %2435 = vmatprep.subr.mxu0 0.0
      %v2436 = vand.u32 %v2245, 4294901760
      %v2437 = vsub.f32 %v2245, %v2436
      %2438 = vmatpush1.msra.mxu0 %v2437
      %2439 = vmatprep.subr.mxu0 0.0
      %v2440 = vand.u32 %v2244, 4294901760
      %v2441 = vsub.f32 %v2244, %v2440
      %2442 = vmatpush1.msra.mxu0 %v2441
      %2443 = vmatprep.subr.mxu0 0.0
      %2444 = vmatpush2.msra.mxu0 0.0
      %2445 = vmatprep.subr.mxu0 0.0
      %2446 = vmatpush2.msra.mxu0 0.0
      %2447 = vmatprep.subr.mxu0 0.0
      %2448 = vmatpush2.msra.mxu0 0.0
      %2449 = vmatprep.subr.mxu0 0.0
      %2450 = vmatpush2.msra.mxu0 0.0
      %2451 = vmatprep.subr.mxu0 0.0
      %2452 = vmatpush2.msra.mxu0 0.0
      %2453 = vmatprep.subr.mxu0 0.0
      %2454 = vmatpush2.msra.mxu0 0.0
      %2455 = vmatprep.subr.mxu0 0.0
      %2456 = vmatpush2.msra.mxu0 0.0
      %2457 = vmatprep.subr.mxu0 0.0
      %2458 = vmatpush2.msra.mxu0 0.0
      %2459 = vmatprep.subr.mxu0 0.0
      %2460 = vmatpush2.msra.mxu0 0.0
      %2461 = vmatprep.subr.mxu0 0.0
      %2462 = vmatpush2.msra.mxu0 0.0
      %2463 = vmatprep.subr.mxu0 0.0
      %2464 = vmatpush2.msra.mxu0 0.0
      %2465 = vmatprep.subr.mxu0 0.0
      %2466 = vmatpush2.msra.mxu0 0.0
      %2467 = vmatprep.subr.mxu0 0.0
      %2468 = vmatpush2.msra.mxu0 0.0
      %2469 = vmatprep.subr.mxu0 0.0
      %2470 = vmatpush2.msra.mxu0 0.0
      %2471 = vmatprep.subr.mxu0 0.0
      %2472 = vmatpush2.msra.mxu0 0.0
      %2473 = vmatprep.subr.mxu0 0.0
      %2474 = vmatpush2.msra.mxu0 0.0
      %2475 = vmatprep.mubr.f32.mxu0 0.0
      %v2476 = vand.u32 %v2247, 4294901760
      %v2477 = vsub.f32 %v2247, %v2476
      %2478 = vmatmul.mubr.f32.gmra.mxu0 %v2477
      %v2479 = vpop.f32.mrf.mxu0
      %v2480 = vadd.f32 %v2404, %v2479
      %v2481 = vpop.f32.mrf.mxu0
      %2482 = vdwg.mxu0
      %2483 = vmatprep.subr.mxu0 0.0
      %2484 = vmatpush1.msra.mxu0 0.0
      %2485 = vmatprep.subr.mxu0 0.0
      %2486 = vmatpush1.msra.mxu0 0.0
      %2487 = vmatprep.subr.mxu0 0.0
      %2488 = vmatpush1.msra.mxu0 0.0
      %2489 = vmatprep.subr.mxu0 0.0
      %2490 = vmatpush1.msra.mxu0 0.0
      %2491 = vmatprep.subr.mxu0 0.0
      %2492 = vmatpush1.msra.mxu0 0.0
      %2493 = vmatprep.subr.mxu0 0.0
      %2494 = vmatpush1.msra.mxu0 0.0
      %2495 = vmatprep.subr.mxu0 0.0
      %2496 = vmatpush1.msra.mxu0 0.0
      %2497 = vmatprep.subr.mxu0 0.0
      %2498 = vmatpush1.msra.mxu0 0.0
      %2499 = vmatprep.subr.mxu0 0.0
      %2500 = vmatpush1.msra.mxu0 0.0
      %2501 = vmatprep.subr.mxu0 0.0
      %2502 = vmatpush1.msra.mxu0 0.0
      %2503 = vmatprep.subr.mxu0 0.0
      %2504 = vmatpush1.msra.mxu0 0.0
      %2505 = vmatprep.subr.mxu0 0.0
      %2506 = vmatpush1.msra.mxu0 0.0
      %2507 = vmatprep.subr.mxu0 0.0
      %2508 = vmatpush1.msra.mxu0 0.0
      %2509 = vmatprep.subr.mxu0 0.0
      %2510 = vmatpush1.msra.mxu0 0.0
      %2511 = vmatprep.subr.mxu0 0.0
      %v2512 = vand.u32 %v2245, 4294901760
      %2513 = vmatpush1.msra.mxu0 %v2512
      %2514 = vmatprep.subr.mxu0 0.0
      %v2515 = vand.u32 %v2244, 4294901760
      %2516 = vmatpush1.msra.mxu0 %v2515
      %2517 = vmatprep.subr.mxu0 0.0
      %2518 = vmatpush2.msra.mxu0 0.0
      %2519 = vmatprep.subr.mxu0 0.0
      %2520 = vmatpush2.msra.mxu0 0.0
      %2521 = vmatprep.subr.mxu0 0.0
      %2522 = vmatpush2.msra.mxu0 0.0
      %2523 = vmatprep.subr.mxu0 0.0
      %2524 = vmatpush2.msra.mxu0 0.0
      %2525 = vmatprep.subr.mxu0 0.0
      %2526 = vmatpush2.msra.mxu0 0.0
      %2527 = vmatprep.subr.mxu0 0.0
      %2528 = vmatpush2.msra.mxu0 0.0
      %2529 = vmatprep.subr.mxu0 0.0
      %2530 = vmatpush2.msra.mxu0 0.0
      %2531 = vmatprep.subr.mxu0 0.0
      %2532 = vmatpush2.msra.mxu0 0.0
      %2533 = vmatprep.subr.mxu0 0.0
      %2534 = vmatpush2.msra.mxu0 0.0
      %2535 = vmatprep.subr.mxu0 0.0
      %2536 = vmatpush2.msra.mxu0 0.0
      %2537 = vmatprep.subr.mxu0 0.0
      %2538 = vmatpush2.msra.mxu0 0.0
      %2539 = vmatprep.subr.mxu0 0.0
      %2540 = vmatpush2.msra.mxu0 0.0
      %2541 = vmatprep.subr.mxu0 0.0
      %2542 = vmatpush2.msra.mxu0 0.0
      %2543 = vmatprep.subr.mxu0 0.0
      %2544 = vmatpush2.msra.mxu0 0.0
      %2545 = vmatprep.subr.mxu0 0.0
      %2546 = vmatpush2.msra.mxu0 0.0
      %2547 = vmatprep.subr.mxu0 0.0
      %2548 = vmatpush2.msra.mxu0 0.0
      %2549 = vmatprep.mubr.f32.mxu0 0.0
      %v2550 = vand.u32 %v2247, 4294901760
      %v2551 = vsub.f32 %v2247, %v2550
      %v2552 = vand.u32 %v2551, 4294901760
      %2553 = vmatmul.mubr.f32.gmra.mxu0 %v2552
      %v2554 = vpop.f32.mrf.mxu0
      %v2555 = vadd.f32 %v2480, %v2554
      %v2556 = vpop.f32.mrf.mxu0
      %2557 = vdwg.mxu0
      %2558 = vmatprep.subr.mxu0 0.0
      %2559 = vmatpush1.msra.mxu0 0.0
      %2560 = vmatprep.subr.mxu0 0.0
      %2561 = vmatpush1.msra.mxu0 0.0
      %2562 = vmatprep.subr.mxu0 0.0
      %2563 = vmatpush1.msra.mxu0 0.0
      %2564 = vmatprep.subr.mxu0 0.0
      %2565 = vmatpush1.msra.mxu0 0.0
      %2566 = vmatprep.subr.mxu0 0.0
      %2567 = vmatpush1.msra.mxu0 0.0
      %2568 = vmatprep.subr.mxu0 0.0
      %2569 = vmatpush1.msra.mxu0 0.0
      %2570 = vmatprep.subr.mxu0 0.0
      %2571 = vmatpush1.msra.mxu0 0.0
      %2572 = vmatprep.subr.mxu0 0.0
      %2573 = vmatpush1.msra.mxu0 0.0
      %2574 = vmatprep.subr.mxu0 0.0
      %2575 = vmatpush1.msra.mxu0 0.0
      %2576 = vmatprep.subr.mxu0 0.0
      %2577 = vmatpush1.msra.mxu0 0.0
      %2578 = vmatprep.subr.mxu0 0.0
      %2579 = vmatpush1.msra.mxu0 0.0
      %2580 = vmatprep.subr.mxu0 0.0
      %2581 = vmatpush1.msra.mxu0 0.0
      %2582 = vmatprep.subr.mxu0 0.0
      %2583 = vmatpush1.msra.mxu0 0.0
      %2584 = vmatprep.subr.mxu0 0.0
      %2585 = vmatpush1.msra.mxu0 0.0
      %2586 = vmatprep.subr.mxu0 0.0
      %v2587 = vand.u32 %v2245, 4294901760
      %v2588 = vsub.f32 %v2245, %v2587
      %v2589 = vand.u32 %v2588, 4294901760
      %2590 = vmatpush1.msra.mxu0 %v2589
      %2591 = vmatprep.subr.mxu0 0.0
      %v2592 = vand.u32 %v2244, 4294901760
      %v2593 = vsub.f32 %v2244, %v2592
      %v2594 = vand.u32 %v2593, 4294901760
      %2595 = vmatpush1.msra.mxu0 %v2594
      %2596 = vmatprep.subr.mxu0 0.0
      %2597 = vmatpush2.msra.mxu0 0.0
      %2598 = vmatprep.subr.mxu0 0.0
      %2599 = vmatpush2.msra.mxu0 0.0
      %2600 = vmatprep.subr.mxu0 0.0
      %2601 = vmatpush2.msra.mxu0 0.0
      %2602 = vmatprep.subr.mxu0 0.0
      %2603 = vmatpush2.msra.mxu0 0.0
      %2604 = vmatprep.subr.mxu0 0.0
      %2605 = vmatpush2.msra.mxu0 0.0
      %2606 = vmatprep.subr.mxu0 0.0
      %2607 = vmatpush2.msra.mxu0 0.0
      %2608 = vmatprep.subr.mxu0 0.0
      %2609 = vmatpush2.msra.mxu0 0.0
      %2610 = vmatprep.subr.mxu0 0.0
      %2611 = vmatpush2.msra.mxu0 0.0
      %2612 = vmatprep.subr.mxu0 0.0
      %2613 = vmatpush2.msra.mxu0 0.0
      %2614 = vmatprep.subr.mxu0 0.0
      %2615 = vmatpush2.msra.mxu0 0.0
      %2616 = vmatprep.subr.mxu0 0.0
      %2617 = vmatpush2.msra.mxu0 0.0
      %2618 = vmatprep.subr.mxu0 0.0
      %2619 = vmatpush2.msra.mxu0 0.0
      %2620 = vmatprep.subr.mxu0 0.0
      %2621 = vmatpush2.msra.mxu0 0.0
      %2622 = vmatprep.subr.mxu0 0.0
      %2623 = vmatpush2.msra.mxu0 0.0
      %2624 = vmatprep.subr.mxu0 0.0
      %2625 = vmatpush2.msra.mxu0 0.0
      %2626 = vmatprep.subr.mxu0 0.0
      %2627 = vmatpush2.msra.mxu0 0.0
      %2628 = vmatprep.mubr.f32.mxu0 0.0
      %v2629 = vand.u32 %v2247, 4294901760
      %2630 = vmatmul.mubr.f32.gmra.mxu0 %v2629
      %v2631 = vpop.f32.mrf.mxu0
      %v2632 = vadd.f32 %v2555, %v2631
      %v2633 = vpop.f32.mrf.mxu0
      %2634 = vdwg.mxu0
      %2635 = vmatprep.subr.mxu0 0.0
      %2636 = vmatpush1.msra.mxu0 0.0
      %2637 = vmatprep.subr.mxu0 0.0
      %2638 = vmatpush1.msra.mxu0 0.0
      %2639 = vmatprep.subr.mxu0 0.0
      %2640 = vmatpush1.msra.mxu0 0.0
      %2641 = vmatprep.subr.mxu0 0.0
      %2642 = vmatpush1.msra.mxu0 0.0
      %2643 = vmatprep.subr.mxu0 0.0
      %2644 = vmatpush1.msra.mxu0 0.0
      %2645 = vmatprep.subr.mxu0 0.0
      %2646 = vmatpush1.msra.mxu0 0.0
      %2647 = vmatprep.subr.mxu0 0.0
      %2648 = vmatpush1.msra.mxu0 0.0
      %2649 = vmatprep.subr.mxu0 0.0
      %2650 = vmatpush1.msra.mxu0 0.0
      %2651 = vmatprep.subr.mxu0 0.0
      %2652 = vmatpush1.msra.mxu0 0.0
      %2653 = vmatprep.subr.mxu0 0.0
      %2654 = vmatpush1.msra.mxu0 0.0
      %2655 = vmatprep.subr.mxu0 0.0
      %2656 = vmatpush1.msra.mxu0 0.0
      %2657 = vmatprep.subr.mxu0 0.0
      %2658 = vmatpush1.msra.mxu0 0.0
      %2659 = vmatprep.subr.mxu0 0.0
      %2660 = vmatpush1.msra.mxu0 0.0
      %2661 = vmatprep.subr.mxu0 0.0
      %2662 = vmatpush1.msra.mxu0 0.0
      %2663 = vmatprep.subr.mxu0 0.0
      %v2664 = vand.u32 %v2245, 4294901760
      %2665 = vmatpush1.msra.mxu0 %v2664
      %2666 = vmatprep.subr.mxu0 0.0
      %v2667 = vand.u32 %v2244, 4294901760
      %2668 = vmatpush1.msra.mxu0 %v2667
      %2669 = vmatprep.subr.mxu0 0.0
      %2670 = vmatpush2.msra.mxu0 0.0
      %2671 = vmatprep.subr.mxu0 0.0
      %2672 = vmatpush2.msra.mxu0 0.0
      %2673 = vmatprep.subr.mxu0 0.0
      %2674 = vmatpush2.msra.mxu0 0.0
      %2675 = vmatprep.subr.mxu0 0.0
      %2676 = vmatpush2.msra.mxu0 0.0
      %2677 = vmatprep.subr.mxu0 0.0
      %2678 = vmatpush2.msra.mxu0 0.0
      %2679 = vmatprep.subr.mxu0 0.0
      %2680 = vmatpush2.msra.mxu0 0.0
      %2681 = vmatprep.subr.mxu0 0.0
      %2682 = vmatpush2.msra.mxu0 0.0
      %2683 = vmatprep.subr.mxu0 0.0
      %2684 = vmatpush2.msra.mxu0 0.0
      %2685 = vmatprep.subr.mxu0 0.0
      %2686 = vmatpush2.msra.mxu0 0.0
      %2687 = vmatprep.subr.mxu0 0.0
      %2688 = vmatpush2.msra.mxu0 0.0
      %2689 = vmatprep.subr.mxu0 0.0
      %2690 = vmatpush2.msra.mxu0 0.0
      %2691 = vmatprep.subr.mxu0 0.0
      %2692 = vmatpush2.msra.mxu0 0.0
      %2693 = vmatprep.subr.mxu0 0.0
      %2694 = vmatpush2.msra.mxu0 0.0
      %2695 = vmatprep.subr.mxu0 0.0
      %2696 = vmatpush2.msra.mxu0 0.0
      %2697 = vmatprep.subr.mxu0 0.0
      %2698 = vmatpush2.msra.mxu0 0.0
      %2699 = vmatprep.subr.mxu0 0.0
      %2700 = vmatpush2.msra.mxu0 0.0
      %2701 = vmatprep.mubr.f32.mxu0 0.0
      %v2702 = vand.u32 %v2247, 4294901760
      %2703 = vmatmul.mubr.f32.gmra.mxu0 %v2702
      %v2704 = vpop.f32.mrf.mxu0
      %v2705 = vadd.f32 %v2632, %v2704
      %v2706 = vpop.f32.mrf.mxu0
      %2707 = vdwg.mxu0
      %v2708 = vrcp.pop %v738
      %v2709 = vmul.f32 %v2705, %v2708
      %v2710 = vadd.f32 %v740, %v2709
      %2711 = vst.msk [vmem:[%s685] sm:$0xff] %vm1749, %v2710
      %v2712 = vmax.f32 %v2705, 0.0
      %v2713 = vmin.f32 %v2712, 6.0
      %v2714 = vsub.f32 %v2713, 3.0
      %2716 = vrot.lane.b32.xlu0 %v2714, 109
      %v2717 = vpop.permute.xlu0 %2716
      %2719 = vst.msk [vmem:[%s689] sm:$0xff] %vm1749, %v2717
      %2721 = vrot.lane.b32.xlu0 %v2705, 5
      %v2722 = vpop.permute.xlu0 %2721
      %v2724 = vsel %vm745, %v739, %v2722
      %v2725 = vld [vmem:[%s8] sm:$0xf]
      %v2726 = vld [vmem:[%s8 + $0x4] sm:$0xf]
      %v2727 = vld [vmem:[%s8 + $0x8] sm:$0xf]
      %v2728 = vpack.c.bf16 %v2724, %v2724
      %v2729 = vld [vmem:[%s9] sm:$0x1]
      %v2731 = vlaneseq
      %v2732 = vshrl.u32 %v2731, 7
      %v2733 = vsub.s32 0, %v2732
      %v2734 = vrot.slane %v2729, %v2733
      %v2739 = vunpack.c.l.b16 %v2725
      %v2740 = vunpack.c.l.b16 %v2726
      %v2741 = vunpack.c.l.b16 %v2727
      %v2742 = vpack.c.b16 %v2740, %v2739
      %v2743 = vpack.c.b16 %v2741, %v2741
      %vm2745 = vcmask 195584
      %v2747 = vsel %vm2745, %v2728, 0
      %vm2749 = vcmask 1043456
      %v2751 = vsel %vm2749, %v2743, 0
      %2753 = vmatprep.subr.bf16.mxu0 0
      %2754 = vmatpush1.bf16.msra.mxu0 0
      %2755 = vmatprep.subr.bf16.mxu0 0
      %2756 = vmatpush1.bf16.msra.mxu0 0
      %2757 = vmatprep.subr.bf16.mxu0 0
      %2758 = vmatpush1.bf16.msra.mxu0 0
      %2759 = vmatprep.subr.bf16.mxu0 0
      %2760 = vmatpush1.bf16.msra.mxu0 0
      %2761 = vmatprep.subr.bf16.mxu0 0
      %2762 = vmatpush1.bf16.msra.mxu0 0
      %2763 = vmatprep.subr.bf16.mxu0 0
      %2764 = vmatpush1.bf16.msra.mxu0 0
      %2765 = vmatprep.subr.bf16.mxu0 0
      %2766 = vmatpush1.bf16.msra.mxu0 %v2751
      %2767 = vmatprep.subr.bf16.mxu0 0
      %2768 = vmatpush1.bf16.msra.mxu0 %v2742
      %2769 = vmatprep.subr.bf16.mxu0 0
      %2770 = vmatpush2.bf16.msra.mxu0 0
      %2771 = vmatprep.subr.bf16.mxu0 0
      %2772 = vmatpush2.bf16.msra.mxu0 0
      %2773 = vmatprep.subr.bf16.mxu0 0
      %2774 = vmatpush2.bf16.msra.mxu0 0
      %2775 = vmatprep.subr.bf16.mxu0 0
      %2776 = vmatpush2.bf16.msra.mxu0 0
      %2777 = vmatprep.subr.bf16.mxu0 0
      %2778 = vmatpush2.bf16.msra.mxu0 0
      %2779 = vmatprep.subr.bf16.mxu0 0
      %2780 = vmatpush2.bf16.msra.mxu0 0
      %2781 = vmatprep.subr.bf16.mxu0 0
      %2782 = vmatpush2.bf16.msra.mxu0 0
      %2783 = vmatprep.subr.bf16.mxu0 0
      %2784 = vmatpush2.bf16.msra.mxu0 0
      %2785 = vmatprep.mubr.bf16.mxu0 0
      %2786 = vmatmul.mubr.bf16.gmra.mxu0 %v2747
      %v2787 = vpop.f32.mrf.mxu0
      %v2788 = vadd.f32 %v2734, %v2787
      %v2789 = vpop.f32.mrf.mxu0
      %v2790 = vpop.f32.mrf.mxu0
      %v2791 = vpop.f32.mrf.mxu0
      %2792 = vdwg.mxu0
      %v2793 = vxor.u32 %v2788, 2147483648
      %v2794 = vmul.f32 %v2793, 1.442695
      %v2795 = vpow.pop %v2794
      %v2796 = vadd.f32 %v2795, 1.0
      %v2797 = vrcp.pop %v2796
      %v2798 = vmul.f32 1.0, %v2797
      %v2799 = vmul.f32 %v2788, %v2798
      %v2800 = vld [vmem:[%s10] sm:$0xf]
      %v2801 = vld [vmem:[%s10 + $0x4] sm:$0xf]
      %v2802 = vpack.c.bf16 %v2799, %v2799
      %v2803 = vld [vmem:[%s11] sm:$0x1]
      %v2805 = vlaneseq
      %v2806 = vshrl.u32 %v2805, 7
      %v2807 = vsub.s32 0, %v2806
      %v2808 = vrot.slane %v2803, %v2807
      %v2812 = vunpack.c.l.b16 %v2800
      %v2813 = vunpack.c.l.b16 %v2801
      %v2814 = vpack.c.b16 %v2813, %v2812
      %v2817 = vsel %vm734, %v2802, 0
      %2819 = vmatprep.subr.bf16.mxu0 0
      %2820 = vmatpush1.bf16.msra.mxu0 0
      %2821 = vmatprep.subr.bf16.mxu0 0
      %2822 = vmatpush1.bf16.msra.mxu0 0
      %2823 = vmatprep.subr.bf16.mxu0 0
      %2824 = vmatpush1.bf16.msra.mxu0 0
      %2825 = vmatprep.subr.bf16.mxu0 0
      %2826 = vmatpush1.bf16.msra.mxu0 0
      %2827 = vmatprep.subr.bf16.mxu0 0
      %2828 = vmatpush1.bf16.msra.mxu0 0
      %2829 = vmatprep.subr.bf16.mxu0 0
      %2830 = vmatpush1.bf16.msra.mxu0 0
      %2831 = vmatprep.subr.bf16.mxu0 0
      %2832 = vmatpush1.bf16.msra.mxu0 0
      %2833 = vmatprep.subr.bf16.mxu0 0
      %2834 = vmatpush1.bf16.msra.mxu0 %v2814
      %2835 = vmatprep.subr.bf16.mxu0 0
      %2836 = vmatpush2.bf16.msra.mxu0 0
      %2837 = vmatprep.subr.bf16.mxu0 0
      %2838 = vmatpush2.bf16.msra.mxu0 0
      %2839 = vmatprep.subr.bf16.mxu0 0
      %2840 = vmatpush2.bf16.msra.mxu0 0
      %2841 = vmatprep.subr.bf16.mxu0 0
      %2842 = vmatpush2.bf16.msra.mxu0 0
      %2843 = vmatprep.subr.bf16.mxu0 0
      %2844 = vmatpush2.bf16.msra.mxu0 0
      %2845 = vmatprep.subr.bf16.mxu0 0
      %2846 = vmatpush2.bf16.msra.mxu0 0
      %2847 = vmatprep.subr.bf16.mxu0 0
      %2848 = vmatpush2.bf16.msra.mxu0 0
      %2849 = vmatprep.subr.bf16.mxu0 0
      %2850 = vmatpush2.bf16.msra.mxu0 0
      %2851 = vmatprep.mubr.bf16.mxu0 0
      %2852 = vmatmul.mubr.bf16.gmra.mxu0 %v2817
      %v2853 = vpop.f32.mrf.mxu0
      %v2854 = vadd.f32 %v2808, %v2853
      %v2855 = vpop.f32.mrf.mxu0
      %v2856 = vpop.f32.mrf.mxu0
      %v2857 = vpop.f32.mrf.mxu0
      %2858 = vdwg.mxu0
      %v2859 = vadd.f32 %v739, %v2854
      %2860 = vst.msk [vmem:[%s681] sm:$0xff] %vm745, %v2859
      %p2861 = scmp.lt.s32.totalorder %s33, 3
      %s2862 = scalar_select %p2861, %s33, 3
      %s2863 = smul.addr %s2862, 8
      %s2864 = scalar_lea.vmem %s19, %s2863
      %p2865 = scmp.lt.s32.totalorder %s33, 3
      %s2866 = scalar_select %p2865, %s33, 3
      %s2867 = smul.addr %s2866, 8
      %s2868 = scalar_lea.vmem %s20, %s2867
      %p2869 = scmp.lt.s32.totalorder %s33, 3
      %s2870 = scalar_select %p2869, %s33, 3
      %s2871 = smul.addr %s2870, 8
      %s2872 = scalar_lea.vmem %s21, %s2871
      // Predicated region
      $region97: #{gcl4e_forward.1} parent=95 // pred_check
        %p2873 = pneg %p460
      $region98: #{gcl4e_forward.1} parent=95 // pred_check_branch
        %2875 = sbr.rel (%p2873) target = $region100
      $region99: #{gcl4e_forward.1} parent=95 // pred_region
        _
      $region100: #{gcl4e_forward.1} parent=95 // pred_fallthru
        _
      // Predicated region
      $region101: #{gcl4e_forward.1} parent=95 // pred_check
        %p2876 = pneg %p486
      $region102: #{gcl4e_forward.1} parent=95 // pred_check_branch
        %2878 = sbr.rel (%p2876) target = $region104
      $region103: #{gcl4e_forward.1} parent=95 // pred_region
        _
      $region104: #{gcl4e_forward.1} parent=95 // pred_fallthru
        _
      // Predicated region
      $region105: #{gcl4e_forward.1} parent=95 // pred_check
        %p2879 = pneg %p512
      $region106: #{gcl4e_forward.1} parent=95 // pred_check_branch
        %2881 = sbr.rel (%p2879) target = $region108
      $region107: #{gcl4e_forward.1} parent=95 // pred_region
        _
      $region108: #{gcl4e_forward.1} parent=95 // pred_fallthru
        _
    $region96: #{gcl4e_forward.1} parent=5 // pred_fallthru
      _
    %p2882 = scmp.le.s32.totalorder 2, %s28
    // Predicated region
    $region109: #{gcl4e_forward.1} parent=5 // pred_check
      %p2883 = pneg %p2882
    $region110: #{gcl4e_forward.1} parent=5 // pred_check_branch
      %2885 = sbr.rel (%p2883) target = $region112
    $region111: #{gcl4e_forward.1} parent=5 // pred_region
      %s2886 = ssub.s32 %s28, 2
      // Predicated region
      $region113: #{gcl4e_forward.1} parent=111 // pred_check
        %p2887 = pneg %p466
      $region114: #{gcl4e_forward.1} parent=111 // pred_check_branch
        %2889 = sbr.rel (%p2887) target = $region116
      $region115: #{gcl4e_forward.1} parent=111 // pred_region
        %p2890 = scmp.lt.s32.totalorder %s34, 3
        %s2891 = scalar_select %p2890, %s34, 3
        %s2892 = smul.addr %s2891, 8
        %s2893 = scalar_lea.vmem %s19, %s2892
      $region116: #{gcl4e_forward.1} parent=111 // pred_fallthru
        _
      // Predicated region
      $region117: #{gcl4e_forward.1} parent=111 // pred_check
        %p2894 = pneg %p492
      $region118: #{gcl4e_forward.1} parent=111 // pred_check_branch
        %2896 = sbr.rel (%p2894) target = $region120
      $region119: #{gcl4e_forward.1} parent=111 // pred_region
        %p2897 = scmp.lt.s32.totalorder %s34, 3
        %s2898 = scalar_select %p2897, %s34, 3
        %s2899 = smul.addr %s2898, 8
        %s2900 = scalar_lea.vmem %s20, %s2899
      $region120: #{gcl4e_forward.1} parent=111 // pred_fallthru
        _
      // Predicated region
      $region121: #{gcl4e_forward.1} parent=111 // pred_check
        %p2901 = pneg %p518
      $region122: #{gcl4e_forward.1} parent=111 // pred_check_branch
        %2903 = sbr.rel (%p2901) target = $region124
      $region123: #{gcl4e_forward.1} parent=111 // pred_region
        %p2904 = scmp.lt.s32.totalorder %s34, 3
        %s2905 = scalar_select %p2904, %s34, 3
        %s2906 = smul.addr %s2905, 8
        %s2907 = scalar_lea.vmem %s21, %s2906
      $region124: #{gcl4e_forward.1} parent=111 // pred_fallthru
        _
    $region112: #{gcl4e_forward.1} parent=5 // pred_fallthru
      _
  $region6: #{gcl4e_forward.1} parent=0 // loop_footer
    %s32 = sadd.s32 1, %s28
  $region7: #{gcl4e_forward.1} parent=0 // loop_footer_branch
    %27 = sbr.rel target = $region3
  $region8: #{gcl4e_forward.1} parent=0 // loop_exit
    _

</llo_original>
